<compile_context>
chip_gen: v7x
topology: tpu7x:2x2x1
jax: 0.10.0
libtpu: 0.0.40
codegen_flags: <defaults>
</compile_context>

<pallas_src>
import functools

import jax
import jax.numpy as jnp
from jax import lax
from jax.experimental import pallas as pl
from jax.experimental.pallas import tpu as pltpu

_LANE = 128


def _pick_tile(total, cap, multiple=1):
    """Largest divisor of `total` that is <= `cap` and a multiple of
    `multiple`; falls back to `total` itself when no such divisor exists."""
    if total <= cap:
        return total
    for cand in range(cap, 0, -1):
        if total % cand == 0 and cand % multiple == 0:
            return cand
    return total


# ----------------------------------------------------------------------------
# Kernel 1: conv (per-tap accumulating MXU matmuls) + per-image channel stats.
# ----------------------------------------------------------------------------
def _conv_stats_kernel(x_ref, xt_ref, xb_ref, w_ref, y_ref, sum_ref, sq_ref,
                       win_ref, *, TH, W, Cin, Cp, KH, KW, pad):
    h = pl.program_id(1)
    last = pl.num_programs(1) - 1

    # ---- assemble the (TH + 2p, W + 2p, Cin) zero-padded halo window -------
    # The h == 0 memset zeroes the left/right padding columns (never written
    # again for this image) and the top halo of the first tile.
    @pl.when(h == 0)
    def _():
        win_ref[...] = jnp.zeros_like(win_ref)

    win_ref[pad:pad + TH, pad:pad + W, :] = x_ref[0]

    @pl.when(h > 0)                       # top halo: last rows of tile h - 1
    def _():
        win_ref[0:pad, pad:pad + W, :] = xt_ref[0]

    @pl.when(h < last)                    # bottom halo: first rows of tile h + 1
    def _():
        win_ref[pad + TH:pad + TH + pad, pad:pad + W, :] = xb_ref[0]

    @pl.when(jnp.logical_and(h == last, h > 0))   # image bottom edge -> zeros
    def _():
        win_ref[pad + TH:pad + TH + pad, pad:pad + W, :] = jnp.zeros(
            (pad, W, Cin), dtype=win_ref.dtype)

    # ---- convolution: one accumulating MXU matmul per filter tap -----------
    acc = jnp.zeros((TH * W, Cp), jnp.float32)
    for kh in range(KH):
        for kw in range(KW):
            tap = win_ref[kh:kh + TH, kw:kw + W, :]          # (TH, W, Cin)
            acc = acc + jnp.dot(tap.reshape(TH * W, Cin),
                                w_ref[kh * KW + kw],
                                preferred_element_type=jnp.float32)

    y_ref[...] = acc.reshape(1, TH, W, Cp).astype(y_ref.dtype)

    # ---- per-image channel statistics (f32, from the unrounded accumulator)
    tile_sum = jnp.sum(acc, axis=0).reshape(1, 1, Cp)
    tile_sq = jnp.sum(acc * acc, axis=0).reshape(1, 1, Cp)

    @pl.when(h == 0)
    def _():
        sum_ref[...] = tile_sum
        sq_ref[...] = tile_sq

    @pl.when(h > 0)
    def _():
        sum_ref[...] = sum_ref[...] + tile_sum
        sq_ref[...] = sq_ref[...] + tile_sq


# ----------------------------------------------------------------------------
# Kernel 2: BatchNorm affine + ReLU over the flattened (N*H*W, Cp) intermediate.
# ----------------------------------------------------------------------------
def _bn_relu_kernel(y_ref, scale_ref, shift_ref, o_ref, *, activation):
    out = y_ref[...].astype(jnp.float32) * scale_ref[...] + shift_ref[...]
    if activation:
        out = jnp.maximum(out, 0.0)
    o_ref[...] = out.astype(o_ref.dtype)


# ----------------------------------------------------------------------------
# Wrapper: PyTorch-convention inputs (NCHW x, OIHW weight) -> Pallas kernels.
# ----------------------------------------------------------------------------
def conv_bn_relu(x_nchw, w_oihw, gamma, beta, *, padding=1, eps=1e-5,
                 activation=True, compute_dtype=jnp.bfloat16,
                 inter_dtype=jnp.bfloat16, row_tile=16, bn_rows=2048):
    N, Cin, H, W = x_nchw.shape
    Cout, w_cin, KH, KW = w_oihw.shape
    assert w_cin == Cin
    # Stride-1 'same' conv (the StemBlock conv_bn_relu(kernel_size=3, stride=1,
    # padding=1) configuration).
    # TODO(synk): stride != 1 and padding == 0 (1x1) variants are not implemented.
    assert KH == 2 * padding + 1 and KW == 2 * padding + 1 and padding >= 1
    pad = padding
    assert H % pad == 0

    TH = _pick_tile(H, row_tile, multiple=pad)       # output row tile
    HT = H // TH

    # Lane-dense channel padding only when Cout already spans >= one lane.
    Cp = (-(-Cout // _LANE) * _LANE) if Cout >= _LANE else Cout
    # TODO(synk): for Cout >= 256 on v6e/v7x, add a 256-wide output-channel tile
    # grid axis to fill the 2x256x256 MXU.

    # Layout glue: NCHW -> NHWC bf16 input; OIHW -> (KH*KW, Cin, Cp) bf16 weight.
    x = jnp.transpose(x_nchw, (0, 2, 3, 1)).astype(compute_dtype)
    w = jnp.transpose(w_oihw, (2, 3, 1, 0)).reshape(KH * KW, Cin, Cout)
    if Cp != Cout:
        w = jnp.pad(w, ((0, 0), (0, 0), (0, Cp - Cout)))
    w = w.astype(compute_dtype)

    conv = pl.pallas_call(
        functools.partial(_conv_stats_kernel, TH=TH, W=W, Cin=Cin, Cp=Cp,
                          KH=KH, KW=KW, pad=pad),
        out_shape=(
            jax.ShapeDtypeStruct((N, H, W, Cp), inter_dtype),   # conv output
            jax.ShapeDtypeStruct((N, 1, Cp), jnp.float32),      # per-n sum
            jax.ShapeDtypeStruct((N, 1, Cp), jnp.float32),      # per-n sumsq
        ),
        grid_spec=pltpu.PrefetchScalarGridSpec(
            num_scalar_prefetch=0,
            grid=(N, HT),
            in_specs=[
                # main TH-row window of the current tile
                pl.BlockSpec((1, TH, W, Cin), lambda n, h: (n, h, 0, 0)),
                # top halo: `pad` rows just above the tile (clamped at h == 0)
                pl.BlockSpec(
                    (1, pad, W, Cin),
                    lambda n, h: (n, jnp.maximum(h * (TH // pad) - 1, 0), 0, 0)),
                # bottom halo: `pad` rows just below the tile (clamped at last)
                pl.BlockSpec(
                    (1, pad, W, Cin),
                    lambda n, h: (n, jnp.minimum((h + 1) * (TH // pad),
                                                 H // pad - 1), 0, 0)),
                # weights, resident across the whole grid
                pl.BlockSpec((KH * KW, Cin, Cp), lambda n, h: (0, 0, 0)),
            ],
            out_specs=[
                pl.BlockSpec((1, TH, W, Cp), lambda n, h: (n, h, 0, 0)),
                pl.BlockSpec((1, 1, Cp), lambda n, h: (n, 0, 0)),
                pl.BlockSpec((1, 1, Cp), lambda n, h: (n, 0, 0)),
            ],
            scratch_shapes=[
                pltpu.VMEM((TH + 2 * pad, W + 2 * pad, Cin), compute_dtype),
            ],
        ),
        compiler_params=pltpu.CompilerParams(
            # Per-n stats accumulators -> batch axis can shard across
            # TensorCores (v7x megacore); only the row axis is sequential.
            dimension_semantics=("parallel", "arbitrary"),
            vmem_limit_bytes=32 * 1024 * 1024),
    )
    y, n_sum, n_sq = conv(x, x, x, w)

    # ---- BatchNorm training-mode batch stats -> per-channel affine ---------
    # Tiny (N, Cp) -> (1, Cp) math in the wrapper so kernel 2 is a pure
    # affine+ReLU stream.  NOTE: single-pass E[x^2] - E[x]^2 in f32, clamped.
    # TODO(synk): switch to a shifted/Welford merge if |mean| >> std ever bites.
    cnt = float(N * H * W)
    mean = jnp.sum(n_sum, axis=0) / cnt                     # (1, Cp) f32
    var = jnp.maximum(jnp.sum(n_sq, axis=0) / cnt - mean * mean, 0.0)
    gamma_f = gamma.astype(jnp.float32).reshape(1, Cout)
    beta_f = beta.astype(jnp.float32).reshape(1, Cout)
    if Cp != Cout:
        gamma_f = jnp.pad(gamma_f, ((0, 0), (0, Cp - Cout)))
        beta_f = jnp.pad(beta_f, ((0, 0), (0, Cp - Cout)))
    scale = gamma_f * lax.rsqrt(var + eps)                  # (1, Cp) f32
    shift = beta_f - mean * scale

    # ---- Kernel 2: memory-bound affine + ReLU with large row blocks --------
    R = N * H * W
    TR = _pick_tile(R, bn_rows, multiple=16)
    y2 = y.reshape(R, Cp)                                   # contiguous collapse

    apply_bn = pl.pallas_call(
        functools.partial(_bn_relu_kernel, activation=activation),
        out_shape=jax.ShapeDtypeStruct((R, Cp), jnp.float32),
        grid_spec=pltpu.PrefetchScalarGridSpec(
            num_scalar_prefetch=0,
            grid=(R // TR,),
            in_specs=[
                pl.BlockSpec((TR, Cp), lambda i: (i, 0)),
                pl.BlockSpec((1, Cp), lambda i: (0, 0)),
                pl.BlockSpec((1, Cp), lambda i: (0, 0)),
            ],
            out_specs=pl.BlockSpec((TR, Cp), lambda i: (i, 0)),
        ),
        compiler_params=pltpu.CompilerParams(
            dimension_semantics=("parallel",),
            vmem_limit_bytes=32 * 1024 * 1024),
    )
    out = apply_bn(y2, scale, shift).reshape(N, H, W, Cp)

    # Drop channel padding (no-op when Cp == Cout), back to PyTorch NCHW.
    # TODO(synk): keep NHWC (skip this transpose) when chaining conv_bn_relu blocks.
    return jnp.transpose(out[..., :Cout], (0, 3, 1, 2))


# ----------------------------------------------------------------------------
# Pure-JAX reference mirroring the kernel's precision choices: conv inputs are
# rounded through bf16, stats come from the f32 conv output, and the normalized
# values use the inter_dtype-rounded intermediate (as the kernels do).
# ----------------------------------------------------------------------------
def _reference(x_nchw, w_oihw, gamma, beta, *, padding=1, eps=1e-5,
               activation=True, compute_dtype=jnp.bfloat16,
               inter_dtype=jnp.bfloat16):
    x = x_nchw.astype(compute_dtype).astype(jnp.float32)
    w = w_oihw.astype(compute_dtype).astype(jnp.float32)
    y = lax.conv_general_dilated(
        x, w, window_strides=(1, 1),
        padding=[(padding, padding), (padding, padding)],
        dimension_numbers=("NCHW", "OIHW", "NCHW"))
    mean = jnp.mean(y, axis=(0, 2, 3), keepdims=True)
    var = jnp.maximum(jnp.mean(y * y, axis=(0, 2, 3), keepdims=True)
                      - mean * mean, 0.0)
    scale = gamma.reshape(1, -1, 1, 1) * lax.rsqrt(var + eps)
    shift = beta.reshape(1, -1, 1, 1) - mean * scale
    yq = y.astype(inter_dtype).astype(jnp.float32)
    out = yq * scale + shift
    if activation:
        out = jnp.maximum(out, 0.0)
    return out


if __name__ == "__main__":
    # conv_bn_relu(in_channels=4, out_channels=8, kernel_size=3, stride=1, padding=1)
    N, Cin, H, W = 2, 4, 16, 16
    Cout, KH, KW = 8, 3, 3

    key = jax.random.PRNGKey(0)
    k_x, k_w, k_g, k_b = jax.random.split(key, 4)
    x = jax.random.normal(k_x, (N, Cin, H, W), dtype=jnp.float32)
    w = jax.random.normal(k_w, (Cout, Cin, KH, KW), dtype=jnp.float32) * 0.1
    gamma = 1.0 + 0.1 * jax.random.normal(k_g, (Cout,), dtype=jnp.float32)
    beta = 0.1 * jax.random.normal(k_b, (Cout,), dtype=jnp.float32)

    # 1) f32 intermediate with 8-row tiles (exercises the halo path); tight check.
    out32 = conv_bn_relu(x, w, gamma, beta, padding=1, activation=True,
                         inter_dtype=jnp.float32, row_tile=8)
    out32 = jax.block_until_ready(out32)
    ref32 = _reference(x, w, gamma, beta, padding=1, activation=True,
                       inter_dtype=jnp.float32)
    assert out32.shape == (N, Cout, H, W)
    err32 = float(jnp.max(jnp.abs(out32 - ref32)))
    assert jnp.allclose(out32, ref32, rtol=1e-3, atol=1e-3), (
        f"f32 intermediate: max abs diff = {err32}")

    # 2) bf16 intermediate (default fast path, whole-image row tile); tolerance
    #    sized for bf16 rounding of the intermediate (eps ~ 7.8e-3).
    out16 = conv_bn_relu(x, w, gamma, beta, padding=1, activation=True)
    out16 = jax.block_until_ready(out16)
    ref16 = _reference(x, w, gamma, beta, padding=1, activation=True,
                       inter_dtype=jnp.bfloat16)
    assert out16.shape == (N, Cout, H, W)
    err16 = float(jnp.max(jnp.abs(out16 - ref16)))
    assert jnp.allclose(out16, ref16, rtol=2e-2, atol=2e-2), (
        f"bf16 intermediate: max abs diff = {err16}")

    print("KERNEL_OK")
</pallas_src>

<mosaic_0001>
module attributes {stable_mosaic.version = 11 : i64} {
  func.func @_conv_stats_kernel(%arg0: i32, %arg1: i32, %arg2: memref<1x8x16x4xbf16, #tpu.memory_space<vmem>>, %arg3: memref<1x1x16x4xbf16, #tpu.memory_space<vmem>>, %arg4: memref<1x1x16x4xbf16, #tpu.memory_space<vmem>>, %arg5: memref<9x4x8xbf16, #tpu.memory_space<vmem>>, %arg6: memref<1x8x16x8xf32, #tpu.memory_space<vmem>>, %arg7: memref<1x1x8xf32, #tpu.memory_space<vmem>>, %arg8: memref<1x1x8xf32, #tpu.memory_space<vmem>>, %arg9: memref<10x18x4xbf16, #tpu.memory_space<vmem>>) attributes {dimension_semantics = [#tpu.dimension_semantics<parallel>, #tpu.dimension_semantics<arbitrary>], iteration_bounds = array<i64: 2, 2>, scalar_prefetch = 0 : i64, scratch_operands = 1 : i64, tpu.core_type = #tpu.core_type<tc>, window_params = [{transform_indices = @transform_0, window_bounds = array<i64: 1, 8, 16, 4>}, {transform_indices = @transform_1, window_bounds = array<i64: 1, 1, 16, 4>}, {transform_indices = @transform_2, window_bounds = array<i64: 1, 1, 16, 4>}, {pipeline_mode = #tpu.pipeline_mode<synchronous>, transform_indices = @transform_3, window_bounds = array<i64: 9, 4, 8>}, {transform_indices = @transform_4, window_bounds = array<i64: 1, 8, 16, 8>}, {transform_indices = @transform_5, window_bounds = array<i64: 1, 1, 8>}, {transform_indices = @transform_6, window_bounds = array<i64: 1, 1, 8>}]} {
    %c0_i32 = arith.constant 0 : i32
    %0 = arith.cmpi eq, %arg1, %c0_i32 : i32
    %1 = arith.extui %0 : i1 to i32
    %c0_i32_0 = arith.constant 0 : i32
    %2 = arith.cmpi ne, %1, %c0_i32_0 : i32
    scf.if %2 {
      %cst_78 = arith.constant 0.000000e+00 : bf16
      %85 = vector.broadcast %cst_78 : bf16 to vector<10x18x4xbf16>
      %c0_79 = arith.constant 0 : index
      %c0_80 = arith.constant 0 : index
      %c0_81 = arith.constant 0 : index
      %86 = vector.load %arg9[%c0_79, %c0_80, %c0_81] : memref<10x18x4xbf16, #tpu.memory_space<vmem>>, vector<10x18x4xbf16>
      tpu.vector_store %arg9[%c0_79, %c0_80, %c0_81], %85 {strides = array<i32>} : memref<10x18x4xbf16, #tpu.memory_space<vmem>>, vector<10x18x4xbf16>,
    } else {
    }
    %c0 = arith.constant 0 : index
    %c0_1 = arith.constant 0 : index
    %c0_2 = arith.constant 0 : index
    %c0_3 = arith.constant 0 : index
    %3 = vector.load %arg2[%c0, %c0_1, %c0_2, %c0_3] : memref<1x8x16x4xbf16, #tpu.memory_space<vmem>>, vector<1x8x16x4xbf16>
    %4 = vector.shape_cast %3 : vector<1x8x16x4xbf16> to vector<8x16x4xbf16>
    %c1 = arith.constant 1 : index
    %c1_4 = arith.constant 1 : index
    %c0_5 = arith.constant 0 : index
    %5 = vector.load %arg9[%c1, %c1_4, %c0_5] : memref<10x18x4xbf16, #tpu.memory_space<vmem>>, vector<8x16x4xbf16>
    tpu.vector_store %arg9[%c1, %c1_4, %c0_5], %4 {strides = array<i32>} : memref<10x18x4xbf16, #tpu.memory_space<vmem>>, vector<8x16x4xbf16>,
    %c0_i32_6 = arith.constant 0 : i32
    %6 = arith.cmpi sgt, %arg1, %c0_i32_6 : i32
    %7 = arith.extui %6 : i1 to i32
    %c0_i32_7 = arith.constant 0 : i32
    %8 = arith.cmpi ne, %7, %c0_i32_7 : i32
    scf.if %8 {
      %c0_78 = arith.constant 0 : index
      %c0_79 = arith.constant 0 : index
      %c0_80 = arith.constant 0 : index
      %c0_81 = arith.constant 0 : index
      %85 = vector.load %arg3[%c0_78, %c0_79, %c0_80, %c0_81] : memref<1x1x16x4xbf16, #tpu.memory_space<vmem>>, vector<1x1x16x4xbf16>
      %86 = vector.shape_cast %85 : vector<1x1x16x4xbf16> to vector<1x16x4xbf16>
      %c0_82 = arith.constant 0 : index
      %c1_83 = arith.constant 1 : index
      %c0_84 = arith.constant 0 : index
      %87 = vector.load %arg9[%c0_82, %c1_83, %c0_84] : memref<10x18x4xbf16, #tpu.memory_space<vmem>>, vector<1x16x4xbf16>
      tpu.vector_store %arg9[%c0_82, %c1_83, %c0_84], %86 {strides = array<i32>} : memref<10x18x4xbf16, #tpu.memory_space<vmem>>, vector<1x16x4xbf16>,
    } else {
    }
    %c1_i32 = arith.constant 1 : i32
    %9 = arith.cmpi slt, %arg1, %c1_i32 : i32
    %10 = arith.extui %9 : i1 to i32
    %c0_i32_8 = arith.constant 0 : i32
    %11 = arith.cmpi ne, %10, %c0_i32_8 : i32
    scf.if %11 {
      %c0_78 = arith.constant 0 : index
      %c0_79 = arith.constant 0 : index
      %c0_80 = arith.constant 0 : index
      %c0_81 = arith.constant 0 : index
      %85 = vector.load %arg4[%c0_78, %c0_79, %c0_80, %c0_81] : memref<1x1x16x4xbf16, #tpu.memory_space<vmem>>, vector<1x1x16x4xbf16>
      %86 = vector.shape_cast %85 : vector<1x1x16x4xbf16> to vector<1x16x4xbf16>
      %c9 = arith.constant 9 : index
      %c1_82 = arith.constant 1 : index
      %c0_83 = arith.constant 0 : index
      %87 = vector.load %arg9[%c9, %c1_82, %c0_83] : memref<10x18x4xbf16, #tpu.memory_space<vmem>>, vector<1x16x4xbf16>
      tpu.vector_store %arg9[%c9, %c1_82, %c0_83], %86 {strides = array<i32>} : memref<10x18x4xbf16, #tpu.memory_space<vmem>>, vector<1x16x4xbf16>,
    } else {
    }
    %c1_i32_9 = arith.constant 1 : i32
    %12 = arith.cmpi eq, %arg1, %c1_i32_9 : i32
    %c0_i32_10 = arith.constant 0 : i32
    %13 = arith.cmpi sgt, %arg1, %c0_i32_10 : i32
    %14 = arith.andi %12, %13 : i1
    %15 = arith.extui %14 : i1 to i32
    %c0_i32_11 = arith.constant 0 : i32
    %16 = arith.cmpi ne, %15, %c0_i32_11 : i32
    scf.if %16 {
      %cst_78 = arith.constant 0.000000e+00 : bf16
      %85 = vector.broadcast %cst_78 : bf16 to vector<1x16x4xbf16>
      %c9 = arith.constant 9 : index
      %c1_79 = arith.constant 1 : index
      %c0_80 = arith.constant 0 : index
      %86 = vector.load %arg9[%c9, %c1_79, %c0_80] : memref<10x18x4xbf16, #tpu.memory_space<vmem>>, vector<1x16x4xbf16>
      tpu.vector_store %arg9[%c9, %c1_79, %c0_80], %85 {strides = array<i32>} : memref<10x18x4xbf16, #tpu.memory_space<vmem>>, vector<1x16x4xbf16>,
    } else {
    }
    %cst = arith.constant 0.000000e+00 : f32
    %17 = vector.broadcast %cst : f32 to vector<128x8xf32>
    %c0_12 = arith.constant 0 : index
    %c0_13 = arith.constant 0 : index
    %c0_14 = arith.constant 0 : index
    %18 = vector.load %arg9[%c0_12, %c0_13, %c0_14] : memref<10x18x4xbf16, #tpu.memory_space<vmem>>, vector<8x16x4xbf16>
    %19 = vector.shape_cast %18 : vector<8x16x4xbf16> to vector<128x4xbf16>
    %c0_15 = arith.constant 0 : index
    %c0_16 = arith.constant 0 : index
    %c0_17 = arith.constant 0 : index
    %20 = vector.load %arg5[%c0_15, %c0_16, %c0_17] : memref<9x4x8xbf16, #tpu.memory_space<vmem>>, vector<1x4x8xbf16>
    %21 = vector.shape_cast %20 : vector<1x4x8xbf16> to vector<4x8xbf16>
    %cst_18 = arith.constant dense<0.000000e+00> : vector<128x8xf32>
    %22 = tpu.matmul %19, %21, %cst_18 {dimension_numbers = #tpu.dot_dimension_numbers<[1], [0], [0], [1], [0, 0, 1, 1], [], []>} : vector<128x4xbf16>, vector<4x8xbf16>, vector<128x8xf32> -> vector<128x8xf32>
    %23 = arith.addf %17, %22 : vector<128x8xf32>
    %c0_19 = arith.constant 0 : index
    %c1_20 = arith.constant 1 : index
    %c0_21 = arith.constant 0 : index
    %24 = vector.load %arg9[%c0_19, %c1_20, %c0_21] : memref<10x18x4xbf16, #tpu.memory_space<vmem>>, vector<8x16x4xbf16>
    %25 = vector.shape_cast %24 : vector<8x16x4xbf16> to vector<128x4xbf16>
    %c1_22 = arith.constant 1 : index
    %c0_23 = arith.constant 0 : index
    %c0_24 = arith.constant 0 : index
    %26 = vector.load %arg5[%c1_22, %c0_23, %c0_24] : memref<9x4x8xbf16, #tpu.memory_space<vmem>>, vector<1x4x8xbf16>
    %27 = vector.shape_cast %26 : vector<1x4x8xbf16> to vector<4x8xbf16>
    %cst_25 = arith.constant dense<0.000000e+00> : vector<128x8xf32>
    %28 = tpu.matmul %25, %27, %cst_25 {dimension_numbers = #tpu.dot_dimension_numbers<[1], [0], [0], [1], [0, 0, 1, 1], [], []>} : vector<128x4xbf16>, vector<4x8xbf16>, vector<128x8xf32> -> vector<128x8xf32>
    %29 = arith.addf %23, %28 : vector<128x8xf32>
    %c0_26 = arith.constant 0 : index
    %c2 = arith.constant 2 : index
    %c0_27 = arith.constant 0 : index
    %30 = vector.load %arg9[%c0_26, %c2, %c0_27] : memref<10x18x4xbf16, #tpu.memory_space<vmem>>, vector<8x16x4xbf16>
    %31 = vector.shape_cast %30 : vector<8x16x4xbf16> to vector<128x4xbf16>
    %c2_28 = arith.constant 2 : index
    %c0_29 = arith.constant 0 : index
    %c0_30 = arith.constant 0 : index
    %32 = vector.load %arg5[%c2_28, %c0_29, %c0_30] : memref<9x4x8xbf16, #tpu.memory_space<vmem>>, vector<1x4x8xbf16>
    %33 = vector.shape_cast %32 : vector<1x4x8xbf16> to vector<4x8xbf16>
    %cst_31 = arith.constant dense<0.000000e+00> : vector<128x8xf32>
    %34 = tpu.matmul %31, %33, %cst_31 {dimension_numbers = #tpu.dot_dimension_numbers<[1], [0], [0], [1], [0, 0, 1, 1], [], []>} : vector<128x4xbf16>, vector<4x8xbf16>, vector<128x8xf32> -> vector<128x8xf32>
    %35 = arith.addf %29, %34 : vector<128x8xf32>
    %c1_32 = arith.constant 1 : index
    %c0_33 = arith.constant 0 : index
    %c0_34 = arith.constant 0 : index
    %36 = vector.load %arg9[%c1_32, %c0_33, %c0_34] : memref<10x18x4xbf16, #tpu.memory_space<vmem>>, vector<8x16x4xbf16>
    %37 = vector.shape_cast %36 : vector<8x16x4xbf16> to vector<128x4xbf16>
    %c3 = arith.constant 3 : index
    %c0_35 = arith.constant 0 : index
    %c0_36 = arith.constant 0 : index
    %38 = vector.load %arg5[%c3, %c0_35, %c0_36] : memref<9x4x8xbf16, #tpu.memory_space<vmem>>, vector<1x4x8xbf16>
    %39 = vector.shape_cast %38 : vector<1x4x8xbf16> to vector<4x8xbf16>
    %cst_37 = arith.constant dense<0.000000e+00> : vector<128x8xf32>
    %40 = tpu.matmul %37, %39, %cst_37 {dimension_numbers = #tpu.dot_dimension_numbers<[1], [0], [0], [1], [0, 0, 1, 1], [], []>} : vector<128x4xbf16>, vector<4x8xbf16>, vector<128x8xf32> -> vector<128x8xf32>
    %41 = arith.addf %35, %40 : vector<128x8xf32>
    %c1_38 = arith.constant 1 : index
    %c1_39 = arith.constant 1 : index
    %c0_40 = arith.constant 0 : index
    %42 = vector.load %arg9[%c1_38, %c1_39, %c0_40] : memref<10x18x4xbf16, #tpu.memory_space<vmem>>, vector<8x16x4xbf16>
    %43 = vector.shape_cast %42 : vector<8x16x4xbf16> to vector<128x4xbf16>
    %c4 = arith.constant 4 : index
    %c0_41 = arith.constant 0 : index
    %c0_42 = arith.constant 0 : index
    %44 = vector.load %arg5[%c4, %c0_41, %c0_42] : memref<9x4x8xbf16, #tpu.memory_space<vmem>>, vector<1x4x8xbf16>
    %45 = vector.shape_cast %44 : vector<1x4x8xbf16> to vector<4x8xbf16>
    %cst_43 = arith.constant dense<0.000000e+00> : vector<128x8xf32>
    %46 = tpu.matmul %43, %45, %cst_43 {dimension_numbers = #tpu.dot_dimension_numbers<[1], [0], [0], [1], [0, 0, 1, 1], [], []>} : vector<128x4xbf16>, vector<4x8xbf16>, vector<128x8xf32> -> vector<128x8xf32>
    %47 = arith.addf %41, %46 : vector<128x8xf32>
    %c1_44 = arith.constant 1 : index
    %c2_45 = arith.constant 2 : index
    %c0_46 = arith.constant 0 : index
    %48 = vector.load %arg9[%c1_44, %c2_45, %c0_46] : memref<10x18x4xbf16, #tpu.memory_space<vmem>>, vector<8x16x4xbf16>
    %49 = vector.shape_cast %48 : vector<8x16x4xbf16> to vector<128x4xbf16>
    %c5 = arith.constant 5 : index
    %c0_47 = arith.constant 0 : index
    %c0_48 = arith.constant 0 : index
    %50 = vector.load %arg5[%c5, %c0_47, %c0_48] : memref<9x4x8xbf16, #tpu.memory_space<vmem>>, vector<1x4x8xbf16>
    %51 = vector.shape_cast %50 : vector<1x4x8xbf16> to vector<4x8xbf16>
    %cst_49 = arith.constant dense<0.000000e+00> : vector<128x8xf32>
    %52 = tpu.matmul %49, %51, %cst_49 {dimension_numbers = #tpu.dot_dimension_numbers<[1], [0], [0], [1], [0, 0, 1, 1], [], []>} : vector<128x4xbf16>, vector<4x8xbf16>, vector<128x8xf32> -> vector<128x8xf32>
    %53 = arith.addf %47, %52 : vector<128x8xf32>
    %c2_50 = arith.constant 2 : index
    %c0_51 = arith.constant 0 : index
    %c0_52 = arith.constant 0 : index
    %54 = vector.load %arg9[%c2_50, %c0_51, %c0_52] : memref<10x18x4xbf16, #tpu.memory_space<vmem>>, vector<8x16x4xbf16>
    %55 = vector.shape_cast %54 : vector<8x16x4xbf16> to vector<128x4xbf16>
    %c6 = arith.constant 6 : index
    %c0_53 = arith.constant 0 : index
    %c0_54 = arith.constant 0 : index
    %56 = vector.load %arg5[%c6, %c0_53, %c0_54] : memref<9x4x8xbf16, #tpu.memory_space<vmem>>, vector<1x4x8xbf16>
    %57 = vector.shape_cast %56 : vector<1x4x8xbf16> to vector<4x8xbf16>
    %cst_55 = arith.constant dense<0.000000e+00> : vector<128x8xf32>
    %58 = tpu.matmul %55, %57, %cst_55 {dimension_numbers = #tpu.dot_dimension_numbers<[1], [0], [0], [1], [0, 0, 1, 1], [], []>} : vector<128x4xbf16>, vector<4x8xbf16>, vector<128x8xf32> -> vector<128x8xf32>
    %59 = arith.addf %53, %58 : vector<128x8xf32>
    %c2_56 = arith.constant 2 : index
    %c1_57 = arith.constant 1 : index
    %c0_58 = arith.constant 0 : index
    %60 = vector.load %arg9[%c2_56, %c1_57, %c0_58] : memref<10x18x4xbf16, #tpu.memory_space<vmem>>, vector<8x16x4xbf16>
    %61 = vector.shape_cast %60 : vector<8x16x4xbf16> to vector<128x4xbf16>
    %c7 = arith.constant 7 : index
    %c0_59 = arith.constant 0 : index
    %c0_60 = arith.constant 0 : index
    %62 = vector.load %arg5[%c7, %c0_59, %c0_60] : memref<9x4x8xbf16, #tpu.memory_space<vmem>>, vector<1x4x8xbf16>
    %63 = vector.shape_cast %62 : vector<1x4x8xbf16> to vector<4x8xbf16>
    %cst_61 = arith.constant dense<0.000000e+00> : vector<128x8xf32>
    %64 = tpu.matmul %61, %63, %cst_61 {dimension_numbers = #tpu.dot_dimension_numbers<[1], [0], [0], [1], [0, 0, 1, 1], [], []>} : vector<128x4xbf16>, vector<4x8xbf16>, vector<128x8xf32> -> vector<128x8xf32>
    %65 = arith.addf %59, %64 : vector<128x8xf32>
    %c2_62 = arith.constant 2 : index
    %c2_63 = arith.constant 2 : index
    %c0_64 = arith.constant 0 : index
    %66 = vector.load %arg9[%c2_62, %c2_63, %c0_64] : memref<10x18x4xbf16, #tpu.memory_space<vmem>>, vector<8x16x4xbf16>
    %67 = vector.shape_cast %66 : vector<8x16x4xbf16> to vector<128x4xbf16>
    %c8 = arith.constant 8 : index
    %c0_65 = arith.constant 0 : index
    %c0_66 = arith.constant 0 : index
    %68 = vector.load %arg5[%c8, %c0_65, %c0_66] : memref<9x4x8xbf16, #tpu.memory_space<vmem>>, vector<1x4x8xbf16>
    %69 = vector.shape_cast %68 : vector<1x4x8xbf16> to vector<4x8xbf16>
    %cst_67 = arith.constant dense<0.000000e+00> : vector<128x8xf32>
    %70 = tpu.matmul %67, %69, %cst_67 {dimension_numbers = #tpu.dot_dimension_numbers<[1], [0], [0], [1], [0, 0, 1, 1], [], []>} : vector<128x4xbf16>, vector<4x8xbf16>, vector<128x8xf32> -> vector<128x8xf32>
    %71 = arith.addf %65, %70 : vector<128x8xf32>
    %72 = vector.shape_cast %71 : vector<128x8xf32> to vector<1x8x16x8xf32>
    %c0_68 = arith.constant 0 : index
    %c0_69 = arith.constant 0 : index
    %c0_70 = arith.constant 0 : index
    %c0_71 = arith.constant 0 : index
    %73 = vector.load %arg6[%c0_68, %c0_69, %c0_70, %c0_71] : memref<1x8x16x8xf32, #tpu.memory_space<vmem>>, vector<1x8x16x8xf32>
    tpu.vector_store %arg6[%c0_68, %c0_69, %c0_70, %c0_71], %72 {strides = array<i32>} : memref<1x8x16x8xf32, #tpu.memory_space<vmem>>, vector<1x8x16x8xf32>,
    %cst_72 = arith.constant dense<0.000000e+00> : vector<8xf32>
    %74 = vector.multi_reduction <add>, %71, %cst_72 [0] : vector<128x8xf32> to vector<8xf32>
    %75 = vector.shape_cast %74 : vector<8xf32> to vector<1x1x8xf32>
    %76 = arith.mulf %71, %71 : vector<128x8xf32>
    %cst_73 = arith.constant dense<0.000000e+00> : vector<8xf32>
    %77 = vector.multi_reduction <add>, %76, %cst_73 [0] : vector<128x8xf32> to vector<8xf32>
    %78 = vector.shape_cast %77 : vector<8xf32> to vector<1x1x8xf32>
    %c0_i32_74 = arith.constant 0 : i32
    %79 = arith.cmpi eq, %arg1, %c0_i32_74 : i32
    %80 = arith.extui %79 : i1 to i32
    %c0_i32_75 = arith.constant 0 : i32
    %81 = arith.cmpi ne, %80, %c0_i32_75 : i32
    scf.if %81 {
      %c0_78 = arith.constant 0 : index
      %c0_79 = arith.constant 0 : index
      %c0_80 = arith.constant 0 : index
      %85 = vector.load %arg7[%c0_78, %c0_79, %c0_80] : memref<1x1x8xf32, #tpu.memory_space<vmem>>, vector<1x1x8xf32>
      tpu.vector_store %arg7[%c0_78, %c0_79, %c0_80], %75 {strides = array<i32>} : memref<1x1x8xf32, #tpu.memory_space<vmem>>, vector<1x1x8xf32>,
      %c0_81 = arith.constant 0 : index
      %c0_82 = arith.constant 0 : index
      %c0_83 = arith.constant 0 : index
      %86 = vector.load %arg8[%c0_81, %c0_82, %c0_83] : memref<1x1x8xf32, #tpu.memory_space<vmem>>, vector<1x1x8xf32>
      tpu.vector_store %arg8[%c0_81, %c0_82, %c0_83], %78 {strides = array<i32>} : memref<1x1x8xf32, #tpu.memory_space<vmem>>, vector<1x1x8xf32>,
    } else {
    }
    %c0_i32_76 = arith.constant 0 : i32
    %82 = arith.cmpi sgt, %arg1, %c0_i32_76 : i32
    %83 = arith.extui %82 : i1 to i32
    %c0_i32_77 = arith.constant 0 : i32
    %84 = arith.cmpi ne, %83, %c0_i32_77 : i32
    scf.if %84 {
      %c0_78 = arith.constant 0 : index
      %c0_79 = arith.constant 0 : index
      %c0_80 = arith.constant 0 : index
      %85 = vector.load %arg7[%c0_78, %c0_79, %c0_80] : memref<1x1x8xf32, #tpu.memory_space<vmem>>, vector<1x1x8xf32>
      %86 = arith.addf %85, %75 : vector<1x1x8xf32>
      %c0_81 = arith.constant 0 : index
      %c0_82 = arith.constant 0 : index
      %c0_83 = arith.constant 0 : index
      %87 = vector.load %arg7[%c0_81, %c0_82, %c0_83] : memref<1x1x8xf32, #tpu.memory_space<vmem>>, vector<1x1x8xf32>
      tpu.vector_store %arg7[%c0_81, %c0_82, %c0_83], %86 {strides = array<i32>} : memref<1x1x8xf32, #tpu.memory_space<vmem>>, vector<1x1x8xf32>,
      %c0_84 = arith.constant 0 : index
      %c0_85 = arith.constant 0 : index
      %c0_86 = arith.constant 0 : index
      %88 = vector.load %arg8[%c0_84, %c0_85, %c0_86] : memref<1x1x8xf32, #tpu.memory_space<vmem>>, vector<1x1x8xf32>
      %89 = arith.addf %88, %78 : vector<1x1x8xf32>
      %c0_87 = arith.constant 0 : index
      %c0_88 = arith.constant 0 : index
      %c0_89 = arith.constant 0 : index
      %90 = vector.load %arg8[%c0_87, %c0_88, %c0_89] : memref<1x1x8xf32, #tpu.memory_space<vmem>>, vector<1x1x8xf32>
      tpu.vector_store %arg8[%c0_87, %c0_88, %c0_89], %89 {strides = array<i32>} : memref<1x1x8xf32, #tpu.memory_space<vmem>>, vector<1x1x8xf32>,
    } else {
    }
    return
  }
  func.func @transform_0(%arg0: i32, %arg1: i32) -> (i32, i32, i32, i32) {
    %c0_i32 = arith.constant 0 : i32
    %c0_i32_0 = arith.constant 0 : i32
    %c0_i32_1 = arith.constant 0 : i32
    return %arg0, %arg1, %c0_i32, %c0_i32_0 : i32, i32, i32, i32
  }
  func.func @transform_1(%arg0: i32, %arg1: i32) -> (i32, i32, i32, i32) {
    %c8_i32 = arith.constant 8 : i32
    %0 = arith.muli %arg1, %c8_i32 : i32
    %c1_i32 = arith.constant 1 : i32
    %1 = arith.subi %0, %c1_i32 : i32
    %c0_i32 = arith.constant 0 : i32
    %2 = arith.maxsi %1, %c0_i32 : i32
    %c0_i32_0 = arith.constant 0 : i32
    %c0_i32_1 = arith.constant 0 : i32
    %c0_i32_2 = arith.constant 0 : i32
    return %arg0, %2, %c0_i32_0, %c0_i32_1 : i32, i32, i32, i32
  }
  func.func @transform_2(%arg0: i32, %arg1: i32) -> (i32, i32, i32, i32) {
    %c1_i32 = arith.constant 1 : i32
    %0 = arith.addi %arg1, %c1_i32 : i32
    %c8_i32 = arith.constant 8 : i32
    %1 = arith.muli %0, %c8_i32 : i32
    %c15_i32 = arith.constant 15 : i32
    %2 = arith.minsi %1, %c15_i32 : i32
    %c0_i32 = arith.constant 0 : i32
    %c0_i32_0 = arith.constant 0 : i32
    %c0_i32_1 = arith.constant 0 : i32
    return %arg0, %2, %c0_i32, %c0_i32_0 : i32, i32, i32, i32
  }
  func.func @transform_3(%arg0: i32, %arg1: i32) -> (i32, i32, i32) {
    %c0_i32 = arith.constant 0 : i32
    %c0_i32_0 = arith.constant 0 : i32
    %c0_i32_1 = arith.constant 0 : i32
    %c0_i32_2 = arith.constant 0 : i32
    return %c0_i32, %c0_i32_0, %c0_i32_1 : i32, i32, i32
  }
  func.func @transform_4(%arg0: i32, %arg1: i32) -> (i32, i32, i32, i32) {
    %c0_i32 = arith.constant 0 : i32
    %c0_i32_0 = arith.constant 0 : i32
    %c0_i32_1 = arith.constant 0 : i32
    return %arg0, %arg1, %c0_i32, %c0_i32_0 : i32, i32, i32, i32
  }
  func.func @transform_5(%arg0: i32, %arg1: i32) -> (i32, i32, i32) {
    %c0_i32 = arith.constant 0 : i32
    %c0_i32_0 = arith.constant 0 : i32
    %c0_i32_1 = arith.constant 0 : i32
    return %arg0, %c0_i32, %c0_i32_0 : i32, i32, i32
  }
  func.func @transform_6(%arg0: i32, %arg1: i32) -> (i32, i32, i32) {
    %c0_i32 = arith.constant 0 : i32
    %c0_i32_0 = arith.constant 0 : i32
    %c0_i32_1 = arith.constant 0 : i32
    return %arg0, %c0_i32, %c0_i32_0 : i32, i32, i32
  }
}

</mosaic_0001>

<llo_original>
// kernel: tpu_custom_call.1
$region0: #{tpu_custom_call.1}
  #allocation0 [shape = 'u32[]', space=smem, size = 0x4, offset = 0x4, fixed_abs, tag = 'smem constant byte address 0x4 - core index']
  #allocation1 [shape = 'u32[144,128]{1,0:T(1,128)}', space=vmem, size = 0x12000, scoped, tag = 'internal scratch']
  #allocation2 [shape = 'bf16[10,18,4]{2,1,0:T(8,128)(2,1)}', space=vmem, size = 0xf000, scoped, tag = 'scratch operand']
  %s0 = inlined_call_operand.vmem [shape: bf16[2,16,16,4], index: 0, kind: input, shape index: {}]
  %s1 = inlined_call_operand.vmem [shape: bf16[2,16,16,4], index: 1, kind: input, shape index: {}]
  %s2 = inlined_call_operand.vmem [shape: bf16[2,16,16,4], index: 2, kind: input, shape index: {}]
  %s3 = inlined_call_operand.vmem [shape: bf16[9,4,8], index: 3, kind: input, shape index: {}]
  %s4 = inlined_call_operand.vmem [shape: f32[2,16,16,8], index: 4, kind: output, shape index: {0}]
  %s5 = inlined_call_operand.hbm [shape: f32[2,1,8], index: 5, kind: output, shape index: {1}]
  %s6 = inlined_call_operand.hbm [shape: f32[2,1,8], index: 6, kind: output, shape index: {2}]
  %7 = xla_tuple %s4, %s5, %s6
  %s8 = sld [smem:[#allocation0]]
  $region89: #{tpu_custom_call.1} parent=0
    _
  %s10 = ssub.s32 1, %s8
  %s11 = scalar_select 0, %s10, %s8
  $region1: #{tpu_custom_call.1} parent=0
    #allocation3 [shape = 'u8[1024]{0}', space=vmem, size = 0x400, scoped, tag = 'output window, operand 1']
    #allocation4 [shape = 's32[2]{0}', space=sflag, size = 0x8, scoped, tag = 'scoped memory for tpu_custom_call.1']
    #allocation5 [shape = 'u8[1024]{0}', space=vmem, size = 0x400, scoped, tag = 'output window, operand 2']
    #allocation6 [shape = 's32[2]{0}', space=sflag, size = 0x8, scoped, tag = 'scoped memory for tpu_custom_call.1']
    %12 = vsyncpa [#allocation4], 0
    %s13 = scalar_lea.sflag [#allocation4], 1
    %14 = vsyncpa %s13, 0
    %15 = vsyncpa [#allocation6], 0
    %s16 = scalar_lea.sflag [#allocation6], 1
    %17 = vsyncpa %s16, 0
    loop: start=0, step=1, limit=6
    $region2: #{tpu_custom_call.1} parent=1 // loop_pre_header
      _
    $region3: #{tpu_custom_call.1} parent=1 // loop_header
      %s19 = sphi 0, %s23
      %p20 = scmp.ge.s32.totalorder %s19, 6
      %s26 = sphi 0, %s38
      %s27 = sphi 0, %s34
      %s28 = sphi 0, %s26
      %s29 = sphi 0, %s27
      %s30 = sphi 0, %s28
      %s31 = sphi 0, %s29
      %s43 = sphi 0, %s45
      %s46 = sphi 0, %s43
      %s47 = sphi 0, %s46
      %s63 = sphi 0, %s47
      %s79 = sphi 0, %s81
      %s82 = sphi 0, %s79
      %s83 = sphi 0, %s82
      %s99 = sphi 0, %s83
      %s115 = sphi 0, %s117
      %s118 = sphi 0, %s115
      %s119 = sphi 0, %s118
      %s135 = sphi 0, %s119
      %s139 = sphi 0, %s139
      %s141 = sphi 0, %s139
      %s142 = sphi 0, %s141
      %s156 = sphi 0, %s142
      %s164 = sphi 0, %s166
      %s167 = sphi 0, %s164
      %s168 = sphi 0, %s167
      %s184 = sphi 0, %s168
      %s190 = sphi 0, %s192
      %s193 = sphi 0, %s190
      %s194 = sphi 0, %s193
      %s210 = sphi 0, %s194
      %s216 = sphi 0, %s218
      %s219 = sphi 0, %s216
      %s220 = sphi 0, %s219
      %s236 = sphi 0, %s220
    $region4: #{tpu_custom_call.1} parent=1 // loop_header_branch
      %22 = sbr.rel (%p20) target = $region8
    $region5: #{tpu_custom_call.1} parent=1 // loop_body
      %s24 = ssub.s32 %s19, 1
      %s25 = ssub.s32 %s19, 2
      %s32 = sadd.s32 1, %s27
      %p33 = scmp.ge.s32.totalorder %s32, 2
      %s34 = scalar_select %p33, 0, %s32
      %s35 = sadd.s32 1, %s26
      %s36 = scalar_select %p33, %s35, %s26
      %p37 = scmp.ge.s32.totalorder %s36, 2
      %s38 = scalar_select %p37, 0, %s36
      %s39 = ssub.s32 %s26, %s38
      %s40 = ssub.s32 %s27, %s34
      %s41 = sor.u32 %s39, %s40
      %p42 = scmp.eq.s32.totalorder %s41, 0
      %s44 = sadd.s32 %s43, 1
      %s45 = scalar_select %p42, %s43, %s44
      %p48 = pneg %p42
      %p49 = scmp.eq.s32.totalorder %s19, 3
      %p50 = por %p48, %p49
      %p51 = scmp.ne.s32.totalorder %s43, %s46
      %p52 = scmp.eq.s32.totalorder %s19, 0
      %p53 = por %p51, %p52
      %p54 = scmp.ne.s32.totalorder %s43, %s46
      %p55 = scmp.eq.s32.totalorder %s24, 3
      %p56 = por %p54, %p55
      %p57 = scmp.ne.s32.totalorder %s46, %s47
      %p58 = scmp.eq.s32.totalorder %s24, 0
      %p59 = por %p57, %p58
      %p60 = scmp.ne.s32.totalorder %s46, %s47
      %p61 = scmp.eq.s32.totalorder %s25, 3
      %p62 = por %p60, %p61
      %p64 = scmp.ne.s32.totalorder %s47, %s63
      %p65 = scmp.eq.s32.totalorder %s25, 0
      %p66 = por %p64, %p65
      %s67 = smul.u32 %s27, 8
      %s68 = ssub.s32 %s67, 1
      %p69 = scmp.gt.s32.totalorder %s68, 0
      %s70 = scalar_select %p69, %s68, 0
      %s71 = smul.u32 %s34, 8
      %s72 = ssub.s32 %s71, 1
      %p73 = scmp.gt.s32.totalorder %s72, 0
      %s74 = scalar_select %p73, %s72, 0
      %s75 = ssub.s32 %s26, %s38
      %s76 = ssub.s32 %s70, %s74
      %s77 = sor.u32 %s75, %s76
      %p78 = scmp.eq.s32.totalorder %s77, 0
      %s80 = sadd.s32 %s79, 1
      %s81 = scalar_select %p78, %s79, %s80
      %p84 = pneg %p78
      %p85 = scmp.eq.s32.totalorder %s19, 3
      %p86 = por %p84, %p85
      %p87 = scmp.ne.s32.totalorder %s79, %s82
      %p88 = scmp.eq.s32.totalorder %s19, 0
      %p89 = por %p87, %p88
      %p90 = scmp.ne.s32.totalorder %s79, %s82
      %p91 = scmp.eq.s32.totalorder %s24, 3
      %p92 = por %p90, %p91
      %p93 = scmp.ne.s32.totalorder %s82, %s83
      %p94 = scmp.eq.s32.totalorder %s24, 0
      %p95 = por %p93, %p94
      %p96 = scmp.ne.s32.totalorder %s82, %s83
      %p97 = scmp.eq.s32.totalorder %s25, 3
      %p98 = por %p96, %p97
      %p100 = scmp.ne.s32.totalorder %s83, %s99
      %p101 = scmp.eq.s32.totalorder %s25, 0
      %p102 = por %p100, %p101
      %s103 = sadd.s32 %s27, 1
      %s104 = smul.u32 %s103, 8
      %p105 = scmp.lt.s32.totalorder %s104, 15
      %s106 = scalar_select %p105, %s104, 15
      %s107 = sadd.s32 %s34, 1
      %s108 = smul.u32 %s107, 8
      %p109 = scmp.lt.s32.totalorder %s108, 15
      %s110 = scalar_select %p109, %s108, 15
      %s111 = ssub.s32 %s26, %s38
      %s112 = ssub.s32 %s106, %s110
      %s113 = sor.u32 %s111, %s112
      %p114 = scmp.eq.s32.totalorder %s113, 0
      %s116 = sadd.s32 %s115, 1
      %s117 = scalar_select %p114, %s115, %s116
      %p120 = pneg %p114
      %p121 = scmp.eq.s32.totalorder %s19, 3
      %p122 = por %p120, %p121
      %p123 = scmp.ne.s32.totalorder %s115, %s118
      %p124 = scmp.eq.s32.totalorder %s19, 0
      %p125 = por %p123, %p124
      %p126 = scmp.ne.s32.totalorder %s115, %s118
      %p127 = scmp.eq.s32.totalorder %s24, 3
      %p128 = por %p126, %p127
      %p129 = scmp.ne.s32.totalorder %s118, %s119
      %p130 = scmp.eq.s32.totalorder %s24, 0
      %p131 = por %p129, %p130
      %p132 = scmp.ne.s32.totalorder %s118, %s119
      %p133 = scmp.eq.s32.totalorder %s25, 3
      %p134 = por %p132, %p133
      %p136 = scmp.ne.s32.totalorder %s119, %s135
      %p137 = scmp.eq.s32.totalorder %s25, 0
      %p138 = por %p136, %p137
      %s140 = sadd.s32 %s139, 1
      %p143 = scmp.eq.s32.totalorder %s19, 3
      %p144 = scmp.ne.s32.totalorder %s139, %s141
      %p145 = scmp.eq.s32.totalorder %s19, 0
      %p146 = por %p144, %p145
      %p147 = scmp.ne.s32.totalorder %s139, %s141
      %p148 = scmp.eq.s32.totalorder %s24, 3
      %p149 = por %p147, %p148
      %p150 = scmp.ne.s32.totalorder %s141, %s142
      %p151 = scmp.eq.s32.totalorder %s24, 0
      %p152 = por %p150, %p151
      %p153 = scmp.ne.s32.totalorder %s141, %s142
      %p154 = scmp.eq.s32.totalorder %s25, 3
      %p155 = por %p153, %p154
      %p157 = scmp.ne.s32.totalorder %s142, %s156
      %p158 = scmp.eq.s32.totalorder %s25, 0
      %p159 = por %p157, %p158
      %s160 = ssub.s32 %s26, %s38
      %s161 = ssub.s32 %s27, %s34
      %s162 = sor.u32 %s160, %s161
      %p163 = scmp.eq.s32.totalorder %s162, 0
      %s165 = sadd.s32 %s164, 1
      %s166 = scalar_select %p163, %s164, %s165
      %p169 = pneg %p163
      %p170 = scmp.eq.s32.totalorder %s19, 3
      %p171 = por %p169, %p170
      %p172 = scmp.ne.s32.totalorder %s164, %s167
      %p173 = scmp.eq.s32.totalorder %s19, 0
      %p174 = por %p172, %p173
      %p175 = scmp.ne.s32.totalorder %s164, %s167
      %p176 = scmp.eq.s32.totalorder %s24, 3
      %p177 = por %p175, %p176
      %p178 = scmp.ne.s32.totalorder %s167, %s168
      %p179 = scmp.eq.s32.totalorder %s24, 0
      %p180 = por %p178, %p179
      %p181 = scmp.ne.s32.totalorder %s167, %s168
      %p182 = scmp.eq.s32.totalorder %s25, 3
      %p183 = por %p181, %p182
      %p185 = scmp.ne.s32.totalorder %s168, %s184
      %p186 = scmp.eq.s32.totalorder %s25, 0
      %p187 = por %p185, %p186
      %s188 = ssub.s32 %s26, %s38
      %p189 = scmp.eq.s32.totalorder %s188, 0
      %s191 = sadd.s32 %s190, 1
      %s192 = scalar_select %p189, %s190, %s191
      %p195 = pneg %p189
      %p196 = scmp.eq.s32.totalorder %s19, 3
      %p197 = por %p195, %p196
      %p198 = scmp.ne.s32.totalorder %s190, %s193
      %p199 = scmp.eq.s32.totalorder %s19, 0
      %p200 = por %p198, %p199
      %p201 = scmp.ne.s32.totalorder %s190, %s193
      %p202 = scmp.eq.s32.totalorder %s24, 3
      %p203 = por %p201, %p202
      %p204 = scmp.ne.s32.totalorder %s193, %s194
      %p205 = scmp.eq.s32.totalorder %s24, 0
      %p206 = por %p204, %p205
      %p207 = scmp.ne.s32.totalorder %s193, %s194
      %p208 = scmp.eq.s32.totalorder %s25, 3
      %p209 = por %p207, %p208
      %p211 = scmp.ne.s32.totalorder %s194, %s210
      %p212 = scmp.eq.s32.totalorder %s25, 0
      %p213 = por %p211, %p212
      %s214 = ssub.s32 %s26, %s38
      %p215 = scmp.eq.s32.totalorder %s214, 0
      %s217 = sadd.s32 %s216, 1
      %s218 = scalar_select %p215, %s216, %s217
      %p221 = pneg %p215
      %p222 = scmp.eq.s32.totalorder %s19, 3
      %p223 = por %p221, %p222
      %p224 = scmp.ne.s32.totalorder %s216, %s219
      %p225 = scmp.eq.s32.totalorder %s19, 0
      %p226 = por %p224, %p225
      %p227 = scmp.ne.s32.totalorder %s216, %s219
      %p228 = scmp.eq.s32.totalorder %s24, 3
      %p229 = por %p227, %p228
      %p230 = scmp.ne.s32.totalorder %s219, %s220
      %p231 = scmp.eq.s32.totalorder %s24, 0
      %p232 = por %p230, %p231
      %p233 = scmp.ne.s32.totalorder %s219, %s220
      %p234 = scmp.eq.s32.totalorder %s25, 3
      %p235 = por %p233, %p234
      %p237 = scmp.ne.s32.totalorder %s220, %s236
      %p238 = scmp.eq.s32.totalorder %s25, 0
      %p239 = por %p237, %p238
      %p240 = scmp.le.s32.totalorder 1, %s19
      %p241 = scmp.lt.s32.totalorder %s19, 5
      %p242 = pnand %p240, %p241
      %p243 = pneg %p242
      // Predicated region
      $region9: #{tpu_custom_call.1} parent=5 // pred_check
        _
      $region10: #{tpu_custom_call.1} parent=5 // pred_check_branch
        %245 = sbr.rel (%p242) target = $region12
      $region11: #{tpu_custom_call.1} parent=5 // pred_region
        %s246 = ssub.s32 %s19, 1
        // Predicated region
        $region13: #{tpu_custom_call.1} parent=11 // pred_check
          %p247 = pneg %p152
        $region14: #{tpu_custom_call.1} parent=11 // pred_check_branch
          %249 = sbr.rel (%p247) target = $region16
        $region15: #{tpu_custom_call.1} parent=11 // pred_region
          _
        $region16: #{tpu_custom_call.1} parent=11 // pred_fallthru
          _
      $region12: #{tpu_custom_call.1} parent=5 // pred_fallthru
        _
      %p250 = scmp.lt.s32.totalorder %s19, 4
      // Predicated region
      $region17: #{tpu_custom_call.1} parent=5 // pred_check
        %p251 = pneg %p250
      $region18: #{tpu_custom_call.1} parent=5 // pred_check_branch
        %253 = sbr.rel (%p251) target = $region20
      $region19: #{tpu_custom_call.1} parent=5 // pred_region
        // Predicated region
        $region21: #{tpu_custom_call.1} parent=19 // pred_check
          %p254 = pneg %p53
        $region22: #{tpu_custom_call.1} parent=19 // pred_check_branch
          %256 = sbr.rel (%p254) target = $region24
        $region23: #{tpu_custom_call.1} parent=19 // pred_region
          %s257 = smul.u32 8, %s27
          %p258 = scmp.lt.s32.totalorder %s26, 1
          %s259 = scalar_select %p258, %s26, 1
          %p260 = scmp.lt.s32.totalorder %s257, 15
          %s261 = scalar_select %p260, %s257, 15
          %s262 = smul.addr %s261, 2
          %s263 = smul.addr %s259, 32
          %s264 = sadd.s32 %s262, %s263
          %s265 = smul.addr %s264, 4
          %s266 = scalar_lea.vmem %s0, %s265
          %s267 = smul.u32 8, %s27
        $region24: #{tpu_custom_call.1} parent=19 // pred_fallthru
          _
        // Predicated region
        $region25: #{tpu_custom_call.1} parent=19 // pred_check
          %p268 = pneg %p89
        $region26: #{tpu_custom_call.1} parent=19 // pred_check_branch
          %270 = sbr.rel (%p268) target = $region28
        $region27: #{tpu_custom_call.1} parent=19 // pred_region
          %s271 = smul.u32 %s27, 8
          %s272 = ssub.s32 %s271, 1
          %p273 = scmp.gt.s32.totalorder %s272, 0
          %s274 = scalar_select %p273, %s272, 0
          %p275 = scmp.lt.s32.totalorder %s26, 1
          %s276 = scalar_select %p275, %s26, 1
          %p277 = scmp.lt.s32.totalorder %s274, 15
          %s278 = scalar_select %p277, %s274, 15
          %s279 = smul.addr %s278, 2
          %s280 = smul.addr %s276, 32
          %s281 = sadd.s32 %s279, %s280
          %s282 = smul.addr %s281, 4
          %s283 = scalar_lea.vmem %s1, %s282
          %s284 = smul.u32 %s27, 8
          %s285 = ssub.s32 %s284, 1
          %p286 = scmp.gt.s32.totalorder %s285, 0
          %s287 = scalar_select %p286, %s285, 0
        $region28: #{tpu_custom_call.1} parent=19 // pred_fallthru
          _
        // Predicated region
        $region29: #{tpu_custom_call.1} parent=19 // pred_check
          %p288 = pneg %p125
        $region30: #{tpu_custom_call.1} parent=19 // pred_check_branch
          %290 = sbr.rel (%p288) target = $region32
        $region31: #{tpu_custom_call.1} parent=19 // pred_region
          %s291 = sadd.s32 %s27, 1
          %s292 = smul.u32 %s291, 8
          %p293 = scmp.lt.s32.totalorder %s292, 15
          %s294 = scalar_select %p293, %s292, 15
          %p295 = scmp.lt.s32.totalorder %s26, 1
          %s296 = scalar_select %p295, %s26, 1
          %p297 = scmp.lt.s32.totalorder %s294, 15
          %s298 = scalar_select %p297, %s294, 15
          %s299 = smul.addr %s298, 2
          %s300 = smul.addr %s296, 32
          %s301 = sadd.s32 %s299, %s300
          %s302 = smul.addr %s301, 4
          %s303 = scalar_lea.vmem %s2, %s302
          %s304 = sadd.s32 %s27, 1
          %s305 = smul.u32 %s304, 8
          %p306 = scmp.lt.s32.totalorder %s305, 15
          %s307 = scalar_select %p306, %s305, 15
        $region32: #{tpu_custom_call.1} parent=19 // pred_fallthru
          _
      $region20: #{tpu_custom_call.1} parent=5 // pred_fallthru
        _
      %p308 = scmp.le.s32.totalorder 1, %s19
      %p309 = scmp.lt.s32.totalorder %s19, 5
      %p310 = pnand %p308, %p309
      %p311 = pneg %p310
      // Predicated region
      $region33: #{tpu_custom_call.1} parent=5 // pred_check
        _
      $region34: #{tpu_custom_call.1} parent=5 // pred_check_branch
        %313 = sbr.rel (%p310) target = $region36
      $region35: #{tpu_custom_call.1} parent=5 // pred_region
        %s314 = ssub.s32 %s19, 1
        %s315 = smul.u32 8, %s29
        %p316 = scmp.lt.s32.totalorder %s28, 1
        %s317 = scalar_select %p316, %s28, 1
        %p318 = scmp.lt.s32.totalorder %s315, 15
        %s319 = scalar_select %p318, %s315, 15
        %s320 = smul.addr %s319, 2
        %s321 = smul.addr %s317, 32
        %s322 = sadd.s32 %s320, %s321
        %s323 = smul.addr %s322, 4
        %s324 = scalar_lea.vmem %s0, %s323
        %p325 = pneg %p59
        %p326 = pneg %p56
        %s327 = smul.u32 %s29, 8
        %s328 = ssub.s32 %s327, 1
        %p329 = scmp.gt.s32.totalorder %s328, 0
        %s330 = scalar_select %p329, %s328, 0
        %p331 = scmp.lt.s32.totalorder %s28, 1
        %s332 = scalar_select %p331, %s28, 1
        %p333 = scmp.lt.s32.totalorder %s330, 15
        %s334 = scalar_select %p333, %s330, 15
        %s335 = smul.addr %s334, 2
        %s336 = smul.addr %s332, 32
        %s337 = sadd.s32 %s335, %s336
        %s338 = smul.addr %s337, 4
        %s339 = scalar_lea.vmem %s1, %s338
        %p340 = pneg %p95
        %p341 = pneg %p92
        %s342 = sadd.s32 %s29, 1
        %s343 = smul.u32 %s342, 8
        %p344 = scmp.lt.s32.totalorder %s343, 15
        %s345 = scalar_select %p344, %s343, 15
        %p346 = scmp.lt.s32.totalorder %s28, 1
        %s347 = scalar_select %p346, %s28, 1
        %p348 = scmp.lt.s32.totalorder %s345, 15
        %s349 = scalar_select %p348, %s345, 15
        %s350 = smul.addr %s349, 2
        %s351 = smul.addr %s347, 32
        %s352 = sadd.s32 %s350, %s351
        %s353 = smul.addr %s352, 4
        %s354 = scalar_lea.vmem %s2, %s353
        %p355 = pneg %p131
        %p356 = pneg %p128
        %p357 = pneg %p152
        %p358 = pneg %p149
        %p359 = pneg %p180
        %p360 = pneg %p177
        %s361 = smul.u32 8, %s29
        %p362 = scmp.lt.s32.totalorder %s28, 1
        %s363 = scalar_select %p362, %s28, 1
        %p364 = scmp.lt.s32.totalorder %s361, 15
        %s365 = scalar_select %p364, %s361, 15
        %s366 = smul.addr %s365, 2
        %s367 = smul.addr %s363, 32
        %s368 = sadd.s32 %s366, %s367
        %s369 = smul.addr %s368, 8
        %s370 = scalar_lea.vmem %s4, %s369
        %p371 = pneg %p206
        %p372 = pneg %p203
        %s373 = sand.u32 %s193, 1
        %s374 = scalar_lea.sflag [#allocation4], %s373
        %s375 = sand.u32 %s193, 1
        %s376 = scalar_lea.vmem [#allocation3], %s375
        %p377 = pneg %p232
        %p378 = pneg %p229
        %s379 = sand.u32 %s219, 1
        %s380 = scalar_lea.sflag [#allocation6], %s379
        %s381 = sand.u32 %s219, 1
        %s382 = scalar_lea.vmem [#allocation5], %s381
        %s383 = smul.u32 8, %s29
        %p384 = scmp.lt.s32.totalorder %s28, 1
        %s385 = scalar_select %p384, %s28, 1
        %p386 = scmp.lt.s32.totalorder %s383, 15
        %s387 = scalar_select %p386, %s383, 15
        %s388 = smul.addr %s387, 2
        %s389 = smul.addr %s385, 32
        %s390 = sadd.s32 %s388, %s389
        %s391 = smul.addr %s390, 4
        %s392 = scalar_lea.vmem %s0, %s391
        %s393 = smul.u32 8, %s29
        %s394 = smul.u32 %s29, 8
        %s395 = ssub.s32 %s394, 1
        %p396 = scmp.gt.s32.totalorder %s395, 0
        %s397 = scalar_select %p396, %s395, 0
        %p398 = scmp.lt.s32.totalorder %s28, 1
        %s399 = scalar_select %p398, %s28, 1
        %p400 = scmp.lt.s32.totalorder %s397, 15
        %s401 = scalar_select %p400, %s397, 15
        %s402 = smul.addr %s401, 2
        %s403 = smul.addr %s399, 32
        %s404 = sadd.s32 %s402, %s403
        %s405 = smul.addr %s404, 4
        %s406 = scalar_lea.vmem %s1, %s405
        %s407 = smul.u32 %s29, 8
        %s408 = ssub.s32 %s407, 1
        %p409 = scmp.gt.s32.totalorder %s408, 0
        %s410 = scalar_select %p409, %s408, 0
        %s411 = sadd.s32 %s29, 1
        %s412 = smul.u32 %s411, 8
        %p413 = scmp.lt.s32.totalorder %s412, 15
        %s414 = scalar_select %p413, %s412, 15
        %p415 = scmp.lt.s32.totalorder %s28, 1
        %s416 = scalar_select %p415, %s28, 1
        %p417 = scmp.lt.s32.totalorder %s414, 15
        %s418 = scalar_select %p417, %s414, 15
        %s419 = smul.addr %s418, 2
        %s420 = smul.addr %s416, 32
        %s421 = sadd.s32 %s419, %s420
        %s422 = smul.addr %s421, 4
        %s423 = scalar_lea.vmem %s2, %s422
        %s424 = sadd.s32 %s29, 1
        %s425 = smul.u32 %s424, 8
        %p426 = scmp.lt.s32.totalorder %s425, 15
        %s427 = scalar_select %p426, %s425, 15
        %s428 = smul.u32 8, %s29
        %p429 = scmp.lt.s32.totalorder %s28, 1
        %s430 = scalar_select %p429, %s28, 1
        %p431 = scmp.lt.s32.totalorder %s428, 15
        %s432 = scalar_select %p431, %s428, 15
        %s433 = smul.addr %s432, 2
        %s434 = smul.addr %s430, 32
        %s435 = sadd.s32 %s433, %s434
        %s436 = smul.addr %s435, 8
        %s437 = scalar_lea.vmem %s4, %s436
        %s438 = smul.u32 8, %s29
        %p440 = scmp.eq.s32.totalorder %s29, 0
        // Predicated region
        $region37: #{tpu_custom_call.1} parent=35 // pred_check
          %p441 = pneg %p440
        $region38: #{tpu_custom_call.1} parent=35 // pred_check_branch
          %443 = sbr.rel (%p441) target = $region40
        $region39: #{tpu_custom_call.1} parent=35 // pred_region
          %vm444 = vcmask 27648
          %445 = vst.msk [vmem:[#allocation2] sm:$0xf] %vm444, 0
          %446 = vst.msk [vmem:[#allocation2 + $0x4] sm:$0xf] %vm444, 0
          %vm447 = vcmask 24576
          %448 = vst.msk [vmem:[#allocation2 + $0x8] sm:$0x1] %vm447, 0
          %449 = vst.msk [vmem:[#allocation2 + $0xc] sm:$0xf] %vm444, 0
          %450 = vst.msk [vmem:[#allocation2 + $0x10] sm:$0xf] %vm444, 0
          %451 = vst.msk [vmem:[#allocation2 + $0x14] sm:$0x1] %vm447, 0
          %452 = vst.msk [vmem:[#allocation2 + $0x18] sm:$0xf] %vm444, 0
          %453 = vst.msk [vmem:[#allocation2 + $0x1c] sm:$0xf] %vm444, 0
          %454 = vst.msk [vmem:[#allocation2 + $0x20] sm:$0x1] %vm447, 0
          %455 = vst.msk [vmem:[#allocation2 + $0x24] sm:$0xf] %vm444, 0
          %456 = vst.msk [vmem:[#allocation2 + $0x28] sm:$0xf] %vm444, 0
          %457 = vst.msk [vmem:[#allocation2 + $0x2c] sm:$0x1] %vm447, 0
          %458 = vst.msk [vmem:[#allocation2 + $0x30] sm:$0xf] %vm444, 0
          %459 = vst.msk [vmem:[#allocation2 + $0x34] sm:$0xf] %vm444, 0
          %460 = vst.msk [vmem:[#allocation2 + $0x38] sm:$0x1] %vm447, 0
          %461 = vst.msk [vmem:[#allocation2 + $0x3c] sm:$0xf] %vm444, 0
          %462 = vst.msk [vmem:[#allocation2 + $0x40] sm:$0xf] %vm444, 0
          %463 = vst.msk [vmem:[#allocation2 + $0x44] sm:$0x1] %vm447, 0
          %464 = vst.msk [vmem:[#allocation2 + $0x48] sm:$0xf] %vm444, 0
          %465 = vst.msk [vmem:[#allocation2 + $0x4c] sm:$0xf] %vm444, 0
          %466 = vst.msk [vmem:[#allocation2 + $0x50] sm:$0x1] %vm447, 0
          %467 = vst.msk [vmem:[#allocation2 + $0x54] sm:$0xf] %vm444, 0
          %468 = vst.msk [vmem:[#allocation2 + $0x58] sm:$0xf] %vm444, 0
          %469 = vst.msk [vmem:[#allocation2 + $0x5c] sm:$0x1] %vm447, 0
          %470 = vst.msk [vmem:[#allocation2 + $0x60] sm:$0xf] %vm444, 0
          %471 = vst.msk [vmem:[#allocation2 + $0x64] sm:$0xf] %vm444, 0
          %472 = vst.msk [vmem:[#allocation2 + $0x68] sm:$0x1] %vm447, 0
          %473 = vst.msk [vmem:[#allocation2 + $0x6c] sm:$0xf] %vm444, 0
          %474 = vst.msk [vmem:[#allocation2 + $0x70] sm:$0xf] %vm444, 0
          %475 = vst.msk [vmem:[#allocation2 + $0x74] sm:$0x1] %vm447, 0
        $region40: #{tpu_custom_call.1} parent=35 // pred_fallthru
          _
        %v476 = vld [vmem:[%s392] sm:$0xf]
        %v477 = vld [vmem:[%s392 + $0x4] sm:$0xf]
        %v478 = vld [vmem:[%s392 + $0x8] sm:$0xf]
        %v479 = vld [vmem:[%s392 + $0xc] sm:$0xf]
        %v480 = vld [vmem:[%s392 + $0x10] sm:$0xf]
        %v481 = vld [vmem:[%s392 + $0x14] sm:$0xf]
        %v482 = vld [vmem:[%s392 + $0x18] sm:$0xf]
        %v483 = vld [vmem:[%s392 + $0x1c] sm:$0xf]
        %v484 = vld [vmem:[%s392 + $0x20] sm:$0xf]
        %v485 = vld [vmem:[%s392 + $0x24] sm:$0xf]
        %v486 = vld [vmem:[%s392 + $0x28] sm:$0xf]
        %v487 = vld [vmem:[%s392 + $0x2c] sm:$0xf]
        %v488 = vld [vmem:[%s392 + $0x30] sm:$0xf]
        %v489 = vld [vmem:[%s392 + $0x34] sm:$0xf]
        %v490 = vld [vmem:[%s392 + $0x38] sm:$0xf]
        %v491 = vld [vmem:[%s392 + $0x3c] sm:$0xf]
        %vm492 = vsmask.f32 256
        %vm493 = vsmask.f32 4368
        %vm494 = vmor %vm492, %vm493
        %v496 = vshrl.u32 %v476, 16
        %v498 = vrot.slane %v496, 7
        %v499 = vshll.u32 %v476, 16
        %v501 = vor.u32 %v498, %v499
        %v502 = vrot.slane %v498, 4
        %v504 = vshrl.u32 %v477, 16
        %v506 = vrot.slane %v504, 7
        %v507 = vshll.u32 %v477, 16
        %v509 = vor.u32 %v506, %v507
        %v510 = vsel %vm494, %v502, %v509
        %v511 = vrot.slane %v506, 4
        %v513 = vshrl.u32 %v478, 16
        %v515 = vrot.slane %v513, 7
        %v516 = vshll.u32 %v478, 16
        %v518 = vor.u32 %v515, %v516
        %v519 = vrot.slane %v515, 4
        %v521 = vshrl.u32 %v479, 16
        %v523 = vrot.slane %v521, 7
        %v524 = vshll.u32 %v479, 16
        %v526 = vor.u32 %v523, %v524
        %v527 = vsel %vm494, %v519, %v526
        %v528 = vrot.slane %v523, 4
        %v530 = vshrl.u32 %v480, 16
        %v532 = vrot.slane %v530, 7
        %v533 = vshll.u32 %v480, 16
        %v535 = vor.u32 %v532, %v533
        %v536 = vrot.slane %v532, 4
        %v538 = vshrl.u32 %v481, 16
        %v540 = vrot.slane %v538, 7
        %v541 = vshll.u32 %v481, 16
        %v543 = vor.u32 %v540, %v541
        %v544 = vsel %vm494, %v536, %v543
        %v545 = vrot.slane %v540, 4
        %v547 = vshrl.u32 %v482, 16
        %v549 = vrot.slane %v547, 7
        %v550 = vshll.u32 %v482, 16
        %v552 = vor.u32 %v549, %v550
        %v553 = vrot.slane %v549, 4
        %v555 = vshrl.u32 %v483, 16
        %v557 = vrot.slane %v555, 7
        %v558 = vshll.u32 %v483, 16
        %v560 = vor.u32 %v557, %v558
        %v561 = vsel %vm494, %v553, %v560
        %v562 = vrot.slane %v557, 4
        %v564 = vshrl.u32 %v484, 16
        %v566 = vrot.slane %v564, 7
        %v567 = vshll.u32 %v484, 16
        %v569 = vor.u32 %v566, %v567
        %v570 = vrot.slane %v566, 4
        %v572 = vshrl.u32 %v485, 16
        %v574 = vrot.slane %v572, 7
        %v575 = vshll.u32 %v485, 16
        %v577 = vor.u32 %v574, %v575
        %v578 = vsel %vm494, %v570, %v577
        %v579 = vrot.slane %v574, 4
        %v581 = vshrl.u32 %v486, 16
        %v583 = vrot.slane %v581, 7
        %v584 = vshll.u32 %v486, 16
        %v586 = vor.u32 %v583, %v584
        %v587 = vrot.slane %v583, 4
        %v589 = vshrl.u32 %v487, 16
        %v591 = vrot.slane %v589, 7
        %v592 = vshll.u32 %v487, 16
        %v594 = vor.u32 %v591, %v592
        %v595 = vsel %vm494, %v587, %v594
        %v596 = vrot.slane %v591, 4
        %v598 = vshrl.u32 %v488, 16
        %v600 = vrot.slane %v598, 7
        %v601 = vshll.u32 %v488, 16
        %v603 = vor.u32 %v600, %v601
        %v604 = vrot.slane %v600, 4
        %v606 = vshrl.u32 %v489, 16
        %v608 = vrot.slane %v606, 7
        %v609 = vshll.u32 %v489, 16
        %v611 = vor.u32 %v608, %v609
        %v612 = vsel %vm494, %v604, %v611
        %v613 = vrot.slane %v608, 4
        %v615 = vshrl.u32 %v490, 16
        %v617 = vrot.slane %v615, 7
        %v618 = vshll.u32 %v490, 16
        %v620 = vor.u32 %v617, %v618
        %v621 = vrot.slane %v617, 4
        %v623 = vshrl.u32 %v491, 16
        %v625 = vrot.slane %v623, 7
        %v626 = vshll.u32 %v491, 16
        %v628 = vor.u32 %v625, %v626
        %v629 = vsel %vm494, %v621, %v628
        %v630 = vrot.slane %v625, 4
        %s655 = scalar_lea.vmem [#allocation2], 12
        %vm656 = vcmask 27648
        %vm657 = vsmask.f32 7938
        %vm658 = vmand %vm656, %vm657
        %v659 = vld [vmem:[%s655] sm:$0xf]
        %v660 = vsel %vm658, %v501, %v659
        %661 = vst [vmem:[%s655] sm:$0xf] %v660
        %vm662 = vcmask 27648
        %663 = vst.msk [vmem:[%s655 + $0x4] sm:$0xf] %vm662, %v510
        %vm664 = vcmask 24576
        %vm665 = vmand %vm664, %vm492
        %v666 = vld [vmem:[%s655 + $0x8] sm:$0x1]
        %v667 = vsel %vm665, %v511, %v666
        %668 = vst [vmem:[%s655 + $0x8] sm:$0x1] %v667
        %v669 = vld [vmem:[%s655 + $0xc] sm:$0xf]
        %v670 = vsel %vm658, %v518, %v669
        %671 = vst [vmem:[%s655 + $0xc] sm:$0xf] %v670
        %672 = vst.msk [vmem:[%s655 + $0x10] sm:$0xf] %vm662, %v527
        %v673 = vld [vmem:[%s655 + $0x14] sm:$0x1]
        %v674 = vsel %vm665, %v528, %v673
        %675 = vst [vmem:[%s655 + $0x14] sm:$0x1] %v674
        %v676 = vld [vmem:[%s655 + $0x18] sm:$0xf]
        %v677 = vsel %vm658, %v535, %v676
        %678 = vst [vmem:[%s655 + $0x18] sm:$0xf] %v677
        %679 = vst.msk [vmem:[%s655 + $0x1c] sm:$0xf] %vm662, %v544
        %v680 = vld [vmem:[%s655 + $0x20] sm:$0x1]
        %v681 = vsel %vm665, %v545, %v680
        %682 = vst [vmem:[%s655 + $0x20] sm:$0x1] %v681
        %v683 = vld [vmem:[%s655 + $0x24] sm:$0xf]
        %v684 = vsel %vm658, %v552, %v683
        %685 = vst [vmem:[%s655 + $0x24] sm:$0xf] %v684
        %686 = vst.msk [vmem:[%s655 + $0x28] sm:$0xf] %vm662, %v561
        %v687 = vld [vmem:[%s655 + $0x2c] sm:$0x1]
        %v688 = vsel %vm665, %v562, %v687
        %689 = vst [vmem:[%s655 + $0x2c] sm:$0x1] %v688
        %v690 = vld [vmem:[%s655 + $0x30] sm:$0xf]
        %v691 = vsel %vm658, %v569, %v690
        %692 = vst [vmem:[%s655 + $0x30] sm:$0xf] %v691
        %693 = vst.msk [vmem:[%s655 + $0x34] sm:$0xf] %vm662, %v578
        %v694 = vld [vmem:[%s655 + $0x38] sm:$0x1]
        %v695 = vsel %vm665, %v579, %v694
        %696 = vst [vmem:[%s655 + $0x38] sm:$0x1] %v695
        %v697 = vld [vmem:[%s655 + $0x3c] sm:$0xf]
        %v698 = vsel %vm658, %v586, %v697
        %699 = vst [vmem:[%s655 + $0x3c] sm:$0xf] %v698
        %700 = vst.msk [vmem:[%s655 + $0x40] sm:$0xf] %vm662, %v595
        %v701 = vld [vmem:[%s655 + $0x44] sm:$0x1]
        %v702 = vsel %vm665, %v596, %v701
        %703 = vst [vmem:[%s655 + $0x44] sm:$0x1] %v702
        %v704 = vld [vmem:[%s655 + $0x48] sm:$0xf]
        %v705 = vsel %vm658, %v603, %v704
        %706 = vst [vmem:[%s655 + $0x48] sm:$0xf] %v705
        %707 = vst.msk [vmem:[%s655 + $0x4c] sm:$0xf] %vm662, %v612
        %v708 = vld [vmem:[%s655 + $0x50] sm:$0x1]
        %v709 = vsel %vm665, %v613, %v708
        %710 = vst [vmem:[%s655 + $0x50] sm:$0x1] %v709
        %v711 = vld [vmem:[%s655 + $0x54] sm:$0xf]
        %v712 = vsel %vm658, %v620, %v711
        %713 = vst [vmem:[%s655 + $0x54] sm:$0xf] %v712
        %714 = vst.msk [vmem:[%s655 + $0x58] sm:$0xf] %vm662, %v629
        %v715 = vld [vmem:[%s655 + $0x5c] sm:$0x1]
        %v716 = vsel %vm665, %v630, %v715
        %717 = vst [vmem:[%s655 + $0x5c] sm:$0x1] %v716
        %p718 = scmp.gt.s32.totalorder %s29, 0
        // Predicated region
        $region41: #{tpu_custom_call.1} parent=35 // pred_check
          %p719 = pneg %p718
        $region42: #{tpu_custom_call.1} parent=35 // pred_check_branch
          %721 = sbr.rel (%p719) target = $region44
        $region43: #{tpu_custom_call.1} parent=35 // pred_region
          %v722 = vld [vmem:[%s406] sm:$0xf]
          %v723 = vld [vmem:[%s406 + $0x4] sm:$0xf]
          %v725 = vshrl.u32 %v722, 16
          %v727 = vrot.slane %v725, 7
          %v728 = vshll.u32 %v722, 16
          %v730 = vor.u32 %v727, %v728
          %v731 = vrot.slane %v727, 4
          %v733 = vshrl.u32 %v723, 16
          %v735 = vrot.slane %v733, 7
          %v736 = vshll.u32 %v723, 16
          %v738 = vor.u32 %v735, %v736
          %v739 = vsel %vm494, %v731, %v738
          %v740 = vrot.slane %v735, 4
          %v744 = vld [vmem:[#allocation2] sm:$0xf]
          %v745 = vsel %vm658, %v730, %v744
          %746 = vst [vmem:[#allocation2] sm:$0xf] %v745
          %747 = vst.msk [vmem:[#allocation2 + $0x4] sm:$0xf] %vm662, %v739
          %v748 = vld [vmem:[#allocation2 + $0x8] sm:$0x1]
          %v749 = vsel %vm665, %v740, %v748
          %750 = vst [vmem:[#allocation2 + $0x8] sm:$0x1] %v749
        $region44: #{tpu_custom_call.1} parent=35 // pred_fallthru
          _
        %p751 = scmp.lt.s32.totalorder %s29, 1
        // Predicated region
        $region45: #{tpu_custom_call.1} parent=35 // pred_check
          %p752 = pneg %p751
        $region46: #{tpu_custom_call.1} parent=35 // pred_check_branch
          %754 = sbr.rel (%p752) target = $region48
        $region47: #{tpu_custom_call.1} parent=35 // pred_region
          %v755 = vld [vmem:[%s423] sm:$0xf]
          %v756 = vld [vmem:[%s423 + $0x4] sm:$0xf]
          %v758 = vshrl.u32 %v755, 16
          %v760 = vrot.slane %v758, 7
          %v761 = vshll.u32 %v755, 16
          %v763 = vor.u32 %v760, %v761
          %v764 = vrot.slane %v760, 4
          %v766 = vshrl.u32 %v756, 16
          %v768 = vrot.slane %v766, 7
          %v769 = vshll.u32 %v756, 16
          %v771 = vor.u32 %v768, %v769
          %v772 = vsel %vm494, %v764, %v771
          %v773 = vrot.slane %v768, 4
          %s777 = scalar_lea.vmem [#allocation2], 108
          %v778 = vld [vmem:[%s777] sm:$0xf]
          %v779 = vsel %vm658, %v763, %v778
          %780 = vst [vmem:[%s777] sm:$0xf] %v779
          %781 = vst.msk [vmem:[%s777 + $0x4] sm:$0xf] %vm662, %v772
          %v782 = vld [vmem:[%s777 + $0x8] sm:$0x1]
          %v783 = vsel %vm665, %v773, %v782
          %784 = vst [vmem:[%s777 + $0x8] sm:$0x1] %v783
        $region48: #{tpu_custom_call.1} parent=35 // pred_fallthru
          _
        %p785 = scmp.eq.s32.totalorder %s29, 1
        %p786 = pnand %p785, %p718
        %p787 = pneg %p786
        // Predicated region
        $region49: #{tpu_custom_call.1} parent=35 // pred_check
          _
        $region50: #{tpu_custom_call.1} parent=35 // pred_check_branch
          %789 = sbr.rel (%p786) target = $region52
        $region51: #{tpu_custom_call.1} parent=35 // pred_region
          %s790 = scalar_lea.vmem [#allocation2], 108
          %v791 = vld [vmem:[%s790] sm:$0xf]
          %v792 = vsel %vm658, 0, %v791
          %793 = vst [vmem:[%s790] sm:$0xf] %v792
          %794 = vst.msk [vmem:[%s790 + $0x4] sm:$0xf] %vm662, 0
          %v795 = vld [vmem:[%s790 + $0x8] sm:$0x1]
          %v796 = vsel %vm665, 0, %v795
          %797 = vst [vmem:[%s790 + $0x8] sm:$0x1] %v796
        $region52: #{tpu_custom_call.1} parent=35 // pred_fallthru
          _
        %v798 = vld [vmem:[#allocation2] sm:$0xf]
        %v799 = vld [vmem:[#allocation2 + $0x4] sm:$0xf]
        %v800 = vld [vmem:[#allocation2 + $0xc] sm:$0xf]
        %v801 = vld [vmem:[#allocation2 + $0x10] sm:$0xf]
        %v802 = vld [vmem:[#allocation2 + $0x18] sm:$0xf]
        %v803 = vld [vmem:[#allocation2 + $0x1c] sm:$0xf]
        %v804 = vld [vmem:[#allocation2 + $0x24] sm:$0xf]
        %v805 = vld [vmem:[#allocation2 + $0x28] sm:$0xf]
        %v806 = vld [vmem:[#allocation2 + $0x30] sm:$0xf]
        %v807 = vld [vmem:[#allocation2 + $0x34] sm:$0xf]
        %v808 = vld [vmem:[#allocation2 + $0x3c] sm:$0xf]
        %v809 = vld [vmem:[#allocation2 + $0x40] sm:$0xf]
        %v810 = vld [vmem:[#allocation2 + $0x48] sm:$0xf]
        %v811 = vld [vmem:[#allocation2 + $0x4c] sm:$0xf]
        %v812 = vld [vmem:[#allocation2 + $0x54] sm:$0xf]
        %v813 = vld [vmem:[#allocation2 + $0x58] sm:$0xf]
        %v814 = vld [vmem:[%s3] sm:$0x3]
        %v815 = vld [vmem:[#allocation2 + $0x8] sm:$0x1]
        %v816 = vld [vmem:[#allocation2 + $0x14] sm:$0x1]
        %v817 = vld [vmem:[#allocation2 + $0x20] sm:$0x1]
        %v818 = vld [vmem:[#allocation2 + $0x2c] sm:$0x1]
        %v819 = vld [vmem:[#allocation2 + $0x38] sm:$0x1]
        %v820 = vld [vmem:[#allocation2 + $0x44] sm:$0x1]
        %v821 = vld [vmem:[#allocation2 + $0x50] sm:$0x1]
        %v822 = vld [vmem:[#allocation2 + $0x5c] sm:$0x1]
        %vm823 = vsmask.f32 3328
        %vm824 = vsmask.f32 7440
        %vm825 = vmor %vm823, %vm824
        %v827 = vshrl.u32 %v798, 16
        %v829 = vrot.slane %v827, 4
        %v830 = vshll.u32 %v798, 16
        %v832 = vrot.slane %v830, 5
        %v833 = vor.u32 %v829, %v832
        %v834 = vrot.slane %v833, 4
        %v836 = vshll.u32 %v799, 16
        %v838 = vrot.slane %v836, 5
        %v839 = vsel %vm825, %v834, %v838
        %v840 = vshrl.u32 %v799, 16
        %v842 = vrot.slane %v840, 4
        %v843 = vor.u32 %v842, %v838
        %v844 = vrot.slane %v843, 4
        %v846 = vshll.u32 %v815, 16
        %v848 = vrot.slane %v846, 5
        %v849 = vsel %vm825, %v844, %v848
        %v851 = vshrl.u32 %v800, 16
        %v853 = vrot.slane %v851, 4
        %v854 = vshll.u32 %v800, 16
        %v856 = vrot.slane %v854, 5
        %v857 = vor.u32 %v853, %v856
        %v858 = vrot.slane %v857, 4
        %v860 = vshll.u32 %v801, 16
        %v862 = vrot.slane %v860, 5
        %v863 = vsel %vm825, %v858, %v862
        %v864 = vshrl.u32 %v801, 16
        %v866 = vrot.slane %v864, 4
        %v867 = vor.u32 %v866, %v862
        %v868 = vrot.slane %v867, 4
        %v870 = vshll.u32 %v816, 16
        %v872 = vrot.slane %v870, 5
        %v873 = vsel %vm825, %v868, %v872
        %v875 = vshrl.u32 %v802, 16
        %v877 = vrot.slane %v875, 4
        %v878 = vshll.u32 %v802, 16
        %v880 = vrot.slane %v878, 5
        %v881 = vor.u32 %v877, %v880
        %v882 = vrot.slane %v881, 4
        %v884 = vshll.u32 %v803, 16
        %v886 = vrot.slane %v884, 5
        %v887 = vsel %vm825, %v882, %v886
        %v888 = vshrl.u32 %v803, 16
        %v890 = vrot.slane %v888, 4
        %v891 = vor.u32 %v890, %v886
        %v892 = vrot.slane %v891, 4
        %v894 = vshll.u32 %v817, 16
        %v896 = vrot.slane %v894, 5
        %v897 = vsel %vm825, %v892, %v896
        %v899 = vshrl.u32 %v804, 16
        %v901 = vrot.slane %v899, 4
        %v902 = vshll.u32 %v804, 16
        %v904 = vrot.slane %v902, 5
        %v905 = vor.u32 %v901, %v904
        %v906 = vrot.slane %v905, 4
        %v908 = vshll.u32 %v805, 16
        %v910 = vrot.slane %v908, 5
        %v911 = vsel %vm825, %v906, %v910
        %v912 = vshrl.u32 %v805, 16
        %v914 = vrot.slane %v912, 4
        %v915 = vor.u32 %v914, %v910
        %v916 = vrot.slane %v915, 4
        %v918 = vshll.u32 %v818, 16
        %v920 = vrot.slane %v918, 5
        %v921 = vsel %vm825, %v916, %v920
        %v923 = vshrl.u32 %v806, 16
        %v925 = vrot.slane %v923, 4
        %v926 = vshll.u32 %v806, 16
        %v928 = vrot.slane %v926, 5
        %v929 = vor.u32 %v925, %v928
        %v930 = vrot.slane %v929, 4
        %v932 = vshll.u32 %v807, 16
        %v934 = vrot.slane %v932, 5
        %v935 = vsel %vm825, %v930, %v934
        %v936 = vshrl.u32 %v807, 16
        %v938 = vrot.slane %v936, 4
        %v939 = vor.u32 %v938, %v934
        %v940 = vrot.slane %v939, 4
        %v942 = vshll.u32 %v819, 16
        %v944 = vrot.slane %v942, 5
        %v945 = vsel %vm825, %v940, %v944
        %v947 = vshrl.u32 %v808, 16
        %v949 = vrot.slane %v947, 4
        %v950 = vshll.u32 %v808, 16
        %v952 = vrot.slane %v950, 5
        %v953 = vor.u32 %v949, %v952
        %v954 = vrot.slane %v953, 4
        %v956 = vshll.u32 %v809, 16
        %v958 = vrot.slane %v956, 5
        %v959 = vsel %vm825, %v954, %v958
        %v960 = vshrl.u32 %v809, 16
        %v962 = vrot.slane %v960, 4
        %v963 = vor.u32 %v962, %v958
        %v964 = vrot.slane %v963, 4
        %v966 = vshll.u32 %v820, 16
        %v968 = vrot.slane %v966, 5
        %v969 = vsel %vm825, %v964, %v968
        %v971 = vshrl.u32 %v810, 16
        %v973 = vrot.slane %v971, 4
        %v974 = vshll.u32 %v810, 16
        %v976 = vrot.slane %v974, 5
        %v977 = vor.u32 %v973, %v976
        %v978 = vrot.slane %v977, 4
        %v980 = vshll.u32 %v811, 16
        %v982 = vrot.slane %v980, 5
        %v983 = vsel %vm825, %v978, %v982
        %v984 = vshrl.u32 %v811, 16
        %v986 = vrot.slane %v984, 4
        %v987 = vor.u32 %v986, %v982
        %v988 = vrot.slane %v987, 4
        %v990 = vshll.u32 %v821, 16
        %v992 = vrot.slane %v990, 5
        %v993 = vsel %vm825, %v988, %v992
        %v995 = vshrl.u32 %v812, 16
        %v997 = vrot.slane %v995, 4
        %v998 = vshll.u32 %v812, 16
        %v1000 = vrot.slane %v998, 5
        %v1001 = vor.u32 %v997, %v1000
        %v1002 = vrot.slane %v1001, 4
        %v1004 = vshll.u32 %v813, 16
        %v1006 = vrot.slane %v1004, 5
        %v1007 = vsel %vm825, %v1002, %v1006
        %v1008 = vshrl.u32 %v813, 16
        %v1010 = vrot.slane %v1008, 4
        %v1011 = vor.u32 %v1010, %v1006
        %v1012 = vrot.slane %v1011, 4
        %v1014 = vshll.u32 %v822, 16
        %v1016 = vrot.slane %v1014, 5
        %v1017 = vsel %vm825, %v1012, %v1016
        %s1018 = scalar_lea.vmem %s3, 2
        %v1019 = vld [vmem:[%s1018] sm:$0x3]
        %v1020 = vunpack.c.l.b16 %v839
        %v1021 = vunpack.c.l.b16 %v849
        %v1022 = vunpack.c.l.b16 %v863
        %v1023 = vunpack.c.l.b16 %v873
        %v1024 = vunpack.c.l.b16 %v887
        %v1025 = vunpack.c.l.b16 %v897
        %v1026 = vunpack.c.l.b16 %v911
        %v1027 = vunpack.c.l.b16 %v921
        %v1028 = vunpack.c.l.b16 %v935
        %v1029 = vunpack.c.l.b16 %v945
        %v1030 = vunpack.c.l.b16 %v959
        %v1031 = vunpack.c.l.b16 %v969
        %v1032 = vunpack.c.l.b16 %v983
        %v1033 = vunpack.c.l.b16 %v993
        %v1034 = vunpack.c.l.b16 %v1007
        %v1035 = vunpack.c.l.b16 %v1017
        %v1036 = vpack.c.b16 %v1021, %v1020
        %v1037 = vpack.c.b16 %v1023, %v1022
        %v1038 = vpack.c.b16 %v1025, %v1024
        %v1039 = vpack.c.b16 %v1027, %v1026
        %v1040 = vpack.c.b16 %v1029, %v1028
        %v1041 = vpack.c.b16 %v1031, %v1030
        %v1042 = vpack.c.b16 %v1033, %v1032
        %v1043 = vpack.c.b16 %v1035, %v1034
        %vm1044 = vcmask 31744
        %v1046 = vsel %vm1044, %v1036, 0
        %v1049 = vsel %vm1044, %v1037, 0
        %v1052 = vsel %vm1044, %v1038, 0
        %v1055 = vsel %vm1044, %v1039, 0
        %v1058 = vsel %vm1044, %v1040, 0
        %v1061 = vsel %vm1044, %v1041, 0
        %v1064 = vsel %vm1044, %v1042, 0
        %v1067 = vsel %vm1044, %v1043, 0
        %vm1069 = vcmask 1041408
        %v1071 = vsel %vm1069, %v1019, 0
        %1073 = vmatprep.subr.bf16.mxu0 0
        %1074 = vmatpush1.bf16.msra.mxu0 %v1071
        %1075 = vmatprep.subr.bf16.mxu0 0
        %1076 = vmatpush1.bf16.msra.mxu0 0
        %1077 = vmatprep.subr.bf16.mxu0 0
        %1078 = vmatpush1.bf16.msra.mxu0 0
        %1079 = vmatprep.subr.bf16.mxu0 0
        %1080 = vmatpush1.bf16.msra.mxu0 0
        %1081 = vmatprep.subr.bf16.mxu0 0
        %1082 = vmatpush1.bf16.msra.mxu0 0
        %1083 = vmatprep.subr.bf16.mxu0 0
        %1084 = vmatpush1.bf16.msra.mxu0 0
        %1085 = vmatprep.subr.bf16.mxu0 0
        %1086 = vmatpush1.bf16.msra.mxu0 0
        %1087 = vmatprep.subr.bf16.mxu0 0
        %1088 = vmatpush1.bf16.msra.mxu0 0
        %1089 = vmatprep.subr.bf16.mxu0 0
        %1090 = vmatpush1.bf16.msra.mxu0 0
        %1091 = vmatprep.subr.bf16.mxu0 0
        %1092 = vmatpush1.bf16.msra.mxu0 0
        %1093 = vmatprep.subr.bf16.mxu0 0
        %1094 = vmatpush1.bf16.msra.mxu0 0
        %1095 = vmatprep.subr.bf16.mxu0 0
        %1096 = vmatpush1.bf16.msra.mxu0 0
        %1097 = vmatprep.subr.bf16.mxu0 0
        %1098 = vmatpush1.bf16.msra.mxu0 0
        %1099 = vmatprep.subr.bf16.mxu0 0
        %1100 = vmatpush1.bf16.msra.mxu0 0
        %1101 = vmatprep.subr.bf16.mxu0 0
        %1102 = vmatpush1.bf16.msra.mxu0 0
        %1103 = vmatprep.subr.bf16.mxu0 0
        %1104 = vmatpush1.bf16.msra.mxu0 0
        %1105 = vmatprep.mubr.bf16.mxu0 0
        %1106 = vmatmul.mubr.bf16.gmra.mrb[0].mxu0 %v1046
        %v1107 = vpop.f32.mrb[0].mxu0
        %v1108 = vadd.f32 0.0, %v1107
        %v1109 = vpop.f32.mrb[0].mxu0
        %v1110 = vpop.f32.mrb[0].mxu0
        %v1111 = vadd.f32 0.0, %v1110
        %v1112 = vpop.f32.mrb[0].mxu0
        %1113 = vmatprep.mubr.bf16.mxu0 0
        %1114 = vmatmul.mubr.bf16.gmra.mrb[0].mxu0 %v1049
        %v1115 = vpop.f32.mrb[0].mxu0
        %v1116 = vadd.f32 0.0, %v1115
        %v1117 = vpop.f32.mrb[0].mxu0
        %v1118 = vpop.f32.mrb[0].mxu0
        %v1119 = vadd.f32 0.0, %v1118
        %v1120 = vpop.f32.mrb[0].mxu0
        %1121 = vmatprep.mubr.bf16.mxu0 0
        %1122 = vmatmul.mubr.bf16.gmra.mrb[0].mxu0 %v1052
        %v1123 = vpop.f32.mrb[0].mxu0
        %v1124 = vadd.f32 0.0, %v1123
        %v1125 = vpop.f32.mrb[0].mxu0
        %v1126 = vpop.f32.mrb[0].mxu0
        %v1127 = vadd.f32 0.0, %v1126
        %v1128 = vpop.f32.mrb[0].mxu0
        %1129 = vmatprep.mubr.bf16.mxu0 0
        %1130 = vmatmul.mubr.bf16.gmra.mrb[0].mxu0 %v1055
        %v1131 = vpop.f32.mrb[0].mxu0
        %v1132 = vadd.f32 0.0, %v1131
        %v1133 = vpop.f32.mrb[0].mxu0
        %v1134 = vpop.f32.mrb[0].mxu0
        %v1135 = vadd.f32 0.0, %v1134
        %v1136 = vpop.f32.mrb[0].mxu0
        %1137 = vmatprep.mubr.bf16.mxu0 0
        %1138 = vmatmul.mubr.bf16.gmra.mrb[0].mxu0 %v1058
        %v1139 = vpop.f32.mrb[0].mxu0
        %v1140 = vadd.f32 0.0, %v1139
        %v1141 = vpop.f32.mrb[0].mxu0
        %v1142 = vpop.f32.mrb[0].mxu0
        %v1143 = vadd.f32 0.0, %v1142
        %v1144 = vpop.f32.mrb[0].mxu0
        %1145 = vmatprep.mubr.bf16.mxu0 0
        %1146 = vmatmul.mubr.bf16.gmra.mrb[0].mxu0 %v1061
        %v1147 = vpop.f32.mrb[0].mxu0
        %v1148 = vadd.f32 0.0, %v1147
        %v1149 = vpop.f32.mrb[0].mxu0
        %v1150 = vpop.f32.mrb[0].mxu0
        %v1151 = vadd.f32 0.0, %v1150
        %v1152 = vpop.f32.mrb[0].mxu0
        %1153 = vmatprep.mubr.bf16.mxu0 0
        %1154 = vmatmul.mubr.bf16.gmra.mrb[0].mxu0 %v1064
        %v1155 = vpop.f32.mrb[0].mxu0
        %v1156 = vadd.f32 0.0, %v1155
        %v1157 = vpop.f32.mrb[0].mxu0
        %v1158 = vpop.f32.mrb[0].mxu0
        %v1159 = vadd.f32 0.0, %v1158
        %v1160 = vpop.f32.mrb[0].mxu0
        %1161 = vmatprep.mubr.bf16.mxu0 0
        %1162 = vmatmul.mubr.bf16.gmra.mrb[0].mxu0 %v1067
        %v1163 = vpop.f32.mrb[0].mxu0
        %v1164 = vadd.f32 0.0, %v1163
        %v1165 = vpop.f32.mrb[0].mxu0
        %v1166 = vpop.f32.mrb[0].mxu0
        %v1167 = vadd.f32 0.0, %v1166
        %v1168 = vpop.f32.mrb[0].mxu0
        %1169 = vdwg.mxu0
        %v1186 = vunpack.c.l.b16 %v798
        %v1187 = vunpack.c.l.b16 %v799
        %v1188 = vunpack.c.l.b16 %v800
        %v1189 = vunpack.c.l.b16 %v801
        %v1190 = vunpack.c.l.b16 %v802
        %v1191 = vunpack.c.l.b16 %v803
        %v1192 = vunpack.c.l.b16 %v804
        %v1193 = vunpack.c.l.b16 %v805
        %v1194 = vunpack.c.l.b16 %v806
        %v1195 = vunpack.c.l.b16 %v807
        %v1196 = vunpack.c.l.b16 %v808
        %v1197 = vunpack.c.l.b16 %v809
        %v1198 = vunpack.c.l.b16 %v810
        %v1199 = vunpack.c.l.b16 %v811
        %v1200 = vunpack.c.l.b16 %v812
        %v1201 = vunpack.c.l.b16 %v813
        %v1202 = vpack.c.b16 %v1187, %v1186
        %v1203 = vpack.c.b16 %v1189, %v1188
        %v1204 = vpack.c.b16 %v1191, %v1190
        %v1205 = vpack.c.b16 %v1193, %v1192
        %v1206 = vpack.c.b16 %v1195, %v1194
        %v1207 = vpack.c.b16 %v1197, %v1196
        %v1208 = vpack.c.b16 %v1199, %v1198
        %v1209 = vpack.c.b16 %v1201, %v1200
        %v1211 = vsel %vm1044, %v1202, 0
        %v1214 = vsel %vm1044, %v1203, 0
        %v1217 = vsel %vm1044, %v1204, 0
        %v1220 = vsel %vm1044, %v1205, 0
        %v1223 = vsel %vm1044, %v1206, 0
        %v1226 = vsel %vm1044, %v1207, 0
        %v1229 = vsel %vm1044, %v1208, 0
        %v1232 = vsel %vm1044, %v1209, 0
        %v1235 = vsel %vm1069, %v814, 0
        %1237 = vmatprep.subr.bf16.mxu0 0
        %1238 = vmatpush1.bf16.msra.mxu0 %v1235
        %1239 = vmatprep.subr.bf16.mxu0 0
        %1240 = vmatpush1.bf16.msra.mxu0 0
        %1241 = vmatprep.subr.bf16.mxu0 0
        %1242 = vmatpush1.bf16.msra.mxu0 0
        %1243 = vmatprep.subr.bf16.mxu0 0
        %1244 = vmatpush1.bf16.msra.mxu0 0
        %1245 = vmatprep.subr.bf16.mxu0 0
        %1246 = vmatpush1.bf16.msra.mxu0 0
        %1247 = vmatprep.subr.bf16.mxu0 0
        %1248 = vmatpush1.bf16.msra.mxu0 0
        %1249 = vmatprep.subr.bf16.mxu0 0
        %1250 = vmatpush1.bf16.msra.mxu0 0
        %1251 = vmatprep.subr.bf16.mxu0 0
        %1252 = vmatpush1.bf16.msra.mxu0 0
        %1253 = vmatprep.subr.bf16.mxu0 0
        %1254 = vmatpush1.bf16.msra.mxu0 0
        %1255 = vmatprep.subr.bf16.mxu0 0
        %1256 = vmatpush1.bf16.msra.mxu0 0
        %1257 = vmatprep.subr.bf16.mxu0 0
        %1258 = vmatpush1.bf16.msra.mxu0 0
        %1259 = vmatprep.subr.bf16.mxu0 0
        %1260 = vmatpush1.bf16.msra.mxu0 0
        %1261 = vmatprep.subr.bf16.mxu0 0
        %1262 = vmatpush1.bf16.msra.mxu0 0
        %1263 = vmatprep.subr.bf16.mxu0 0
        %1264 = vmatpush1.bf16.msra.mxu0 0
        %1265 = vmatprep.subr.bf16.mxu0 0
        %1266 = vmatpush1.bf16.msra.mxu0 0
        %1267 = vmatprep.subr.bf16.mxu0 0
        %1268 = vmatpush1.bf16.msra.mxu0 0
        %1269 = vmatprep.mubr.bf16.mxu0 0
        %1270 = vmatmul.mubr.bf16.gmra.mrb[0].mxu0 %v1211
        %v1271 = vpop.f32.mrb[0].mxu0
        %v1272 = vadd.f32 %v1108, %v1271
        %v1273 = vpop.f32.mrb[0].mxu0
        %v1274 = vpop.f32.mrb[0].mxu0
        %v1275 = vadd.f32 %v1111, %v1274
        %v1276 = vpop.f32.mrb[0].mxu0
        %1277 = vmatprep.mubr.bf16.mxu0 0
        %1278 = vmatmul.mubr.bf16.gmra.mrb[0].mxu0 %v1214
        %v1279 = vpop.f32.mrb[0].mxu0
        %v1280 = vadd.f32 %v1116, %v1279
        %v1281 = vpop.f32.mrb[0].mxu0
        %v1282 = vpop.f32.mrb[0].mxu0
        %v1283 = vadd.f32 %v1119, %v1282
        %v1284 = vpop.f32.mrb[0].mxu0
        %1285 = vmatprep.mubr.bf16.mxu0 0
        %1286 = vmatmul.mubr.bf16.gmra.mrb[0].mxu0 %v1217
        %v1287 = vpop.f32.mrb[0].mxu0
        %v1288 = vadd.f32 %v1124, %v1287
        %v1289 = vpop.f32.mrb[0].mxu0
        %v1290 = vpop.f32.mrb[0].mxu0
        %v1291 = vadd.f32 %v1127, %v1290
        %v1292 = vpop.f32.mrb[0].mxu0
        %1293 = vmatprep.mubr.bf16.mxu0 0
        %1294 = vmatmul.mubr.bf16.gmra.mrb[0].mxu0 %v1220
        %v1295 = vpop.f32.mrb[0].mxu0
        %v1296 = vadd.f32 %v1132, %v1295
        %v1297 = vpop.f32.mrb[0].mxu0
        %v1298 = vpop.f32.mrb[0].mxu0
        %v1299 = vadd.f32 %v1135, %v1298
        %v1300 = vpop.f32.mrb[0].mxu0
        %1301 = vmatprep.mubr.bf16.mxu0 0
        %1302 = vmatmul.mubr.bf16.gmra.mrb[0].mxu0 %v1223
        %v1303 = vpop.f32.mrb[0].mxu0
        %v1304 = vadd.f32 %v1140, %v1303
        %v1305 = vpop.f32.mrb[0].mxu0
        %v1306 = vpop.f32.mrb[0].mxu0
        %v1307 = vadd.f32 %v1143, %v1306
        %v1308 = vpop.f32.mrb[0].mxu0
        %1309 = vmatprep.mubr.bf16.mxu0 0
        %1310 = vmatmul.mubr.bf16.gmra.mrb[0].mxu0 %v1226
        %v1311 = vpop.f32.mrb[0].mxu0
        %v1312 = vadd.f32 %v1148, %v1311
        %v1313 = vpop.f32.mrb[0].mxu0
        %v1314 = vpop.f32.mrb[0].mxu0
        %v1315 = vadd.f32 %v1151, %v1314
        %v1316 = vpop.f32.mrb[0].mxu0
        %1317 = vmatprep.mubr.bf16.mxu0 0
        %1318 = vmatmul.mubr.bf16.gmra.mrb[0].mxu0 %v1229
        %v1319 = vpop.f32.mrb[0].mxu0
        %v1320 = vadd.f32 %v1156, %v1319
        %v1321 = vpop.f32.mrb[0].mxu0
        %v1322 = vpop.f32.mrb[0].mxu0
        %v1323 = vadd.f32 %v1159, %v1322
        %v1324 = vpop.f32.mrb[0].mxu0
        %1325 = vmatprep.mubr.bf16.mxu0 0
        %1326 = vmatmul.mubr.bf16.gmra.mrb[0].mxu0 %v1232
        %v1327 = vpop.f32.mrb[0].mxu0
        %v1328 = vadd.f32 %v1164, %v1327
        %v1329 = vpop.f32.mrb[0].mxu0
        %v1330 = vpop.f32.mrb[0].mxu0
        %v1331 = vadd.f32 %v1167, %v1330
        %v1332 = vpop.f32.mrb[0].mxu0
        %1333 = vdwg.mxu0
        %v1334 = vld [vmem:[#allocation2] sm:$0xe]
        %v1335 = vld [vmem:[#allocation2 + $0xc] sm:$0xe]
        %v1336 = vld [vmem:[#allocation2 + $0x18] sm:$0xe]
        %v1337 = vld [vmem:[#allocation2 + $0x24] sm:$0xe]
        %v1338 = vld [vmem:[#allocation2 + $0x30] sm:$0xe]
        %v1339 = vld [vmem:[#allocation2 + $0x3c] sm:$0xe]
        %v1340 = vld [vmem:[#allocation2 + $0x48] sm:$0xe]
        %v1341 = vld [vmem:[#allocation2 + $0x54] sm:$0xe]
        %vm1358 = vcmask 1042432
        %vm1359 = vcmask 1046532
        %vm1360 = vmor %vm1358, %vm1359
        %v1361 = vrot.slane %v1334, 5
        %v1362 = vrot.slane %v1361, 4
        %v1363 = vrot.slane %v799, 5
        %v1364 = vsel %vm1360, %v1362, %v1363
        %v1365 = vrot.slane %v1363, 4
        %v1366 = vrot.slane %v815, 5
        %v1367 = vsel %vm1360, %v1365, %v1366
        %v1368 = vrot.slane %v1335, 5
        %v1369 = vrot.slane %v1368, 4
        %v1370 = vrot.slane %v801, 5
        %v1371 = vsel %vm1360, %v1369, %v1370
        %v1372 = vrot.slane %v1370, 4
        %v1373 = vrot.slane %v816, 5
        %v1374 = vsel %vm1360, %v1372, %v1373
        %v1375 = vrot.slane %v1336, 5
        %v1376 = vrot.slane %v1375, 4
        %v1377 = vrot.slane %v803, 5
        %v1378 = vsel %vm1360, %v1376, %v1377
        %v1379 = vrot.slane %v1377, 4
        %v1380 = vrot.slane %v817, 5
        %v1381 = vsel %vm1360, %v1379, %v1380
        %v1382 = vrot.slane %v1337, 5
        %v1383 = vrot.slane %v1382, 4
        %v1384 = vrot.slane %v805, 5
        %v1385 = vsel %vm1360, %v1383, %v1384
        %v1386 = vrot.slane %v1384, 4
        %v1387 = vrot.slane %v818, 5
        %v1388 = vsel %vm1360, %v1386, %v1387
        %v1389 = vrot.slane %v1338, 5
        %v1390 = vrot.slane %v1389, 4
        %v1391 = vrot.slane %v807, 5
        %v1392 = vsel %vm1360, %v1390, %v1391
        %v1393 = vrot.slane %v1391, 4
        %v1394 = vrot.slane %v819, 5
        %v1395 = vsel %vm1360, %v1393, %v1394
        %v1396 = vrot.slane %v1339, 5
        %v1397 = vrot.slane %v1396, 4
        %v1398 = vrot.slane %v809, 5
        %v1399 = vsel %vm1360, %v1397, %v1398
        %v1400 = vrot.slane %v1398, 4
        %v1401 = vrot.slane %v820, 5
        %v1402 = vsel %vm1360, %v1400, %v1401
        %v1403 = vrot.slane %v1340, 5
        %v1404 = vrot.slane %v1403, 4
        %v1405 = vrot.slane %v811, 5
        %v1406 = vsel %vm1360, %v1404, %v1405
        %v1407 = vrot.slane %v1405, 4
        %v1408 = vrot.slane %v821, 5
        %v1409 = vsel %vm1360, %v1407, %v1408
        %v1410 = vrot.slane %v1341, 5
        %v1411 = vrot.slane %v1410, 4
        %v1412 = vrot.slane %v813, 5
        %v1413 = vsel %vm1360, %v1411, %v1412
        %v1414 = vrot.slane %v1412, 4
        %v1415 = vrot.slane %v822, 5
        %v1416 = vsel %vm1360, %v1414, %v1415
        %s1417 = scalar_lea.vmem %s3, 4
        %v1418 = vld [vmem:[%s1417] sm:$0x3]
        %v1419 = vunpack.c.l.b16 %v1364
        %v1420 = vunpack.c.l.b16 %v1367
        %v1421 = vunpack.c.l.b16 %v1371
        %v1422 = vunpack.c.l.b16 %v1374
        %v1423 = vunpack.c.l.b16 %v1378
        %v1424 = vunpack.c.l.b16 %v1381
        %v1425 = vunpack.c.l.b16 %v1385
        %v1426 = vunpack.c.l.b16 %v1388
        %v1427 = vunpack.c.l.b16 %v1392
        %v1428 = vunpack.c.l.b16 %v1395
        %v1429 = vunpack.c.l.b16 %v1399
        %v1430 = vunpack.c.l.b16 %v1402
        %v1431 = vunpack.c.l.b16 %v1406
        %v1432 = vunpack.c.l.b16 %v1409
        %v1433 = vunpack.c.l.b16 %v1413
        %v1434 = vunpack.c.l.b16 %v1416
        %v1435 = vpack.c.b16 %v1420, %v1419
        %v1436 = vpack.c.b16 %v1422, %v1421
        %v1437 = vpack.c.b16 %v1424, %v1423
        %v1438 = vpack.c.b16 %v1426, %v1425
        %v1439 = vpack.c.b16 %v1428, %v1427
        %v1440 = vpack.c.b16 %v1430, %v1429
        %v1441 = vpack.c.b16 %v1432, %v1431
        %v1442 = vpack.c.b16 %v1434, %v1433
        %v1444 = vsel %vm1044, %v1435, 0
        %v1447 = vsel %vm1044, %v1436, 0
        %v1450 = vsel %vm1044, %v1437, 0
        %v1453 = vsel %vm1044, %v1438, 0
        %v1456 = vsel %vm1044, %v1439, 0
        %v1459 = vsel %vm1044, %v1440, 0
        %v1462 = vsel %vm1044, %v1441, 0
        %v1465 = vsel %vm1044, %v1442, 0
        %v1468 = vsel %vm1069, %v1418, 0
        %1470 = vmatprep.subr.bf16.mxu0 0
        %1471 = vmatpush1.bf16.msra.mxu0 %v1468
        %1472 = vmatprep.subr.bf16.mxu0 0
        %1473 = vmatpush1.bf16.msra.mxu0 0
        %1474 = vmatprep.subr.bf16.mxu0 0
        %1475 = vmatpush1.bf16.msra.mxu0 0
        %1476 = vmatprep.subr.bf16.mxu0 0
        %1477 = vmatpush1.bf16.msra.mxu0 0
        %1478 = vmatprep.subr.bf16.mxu0 0
        %1479 = vmatpush1.bf16.msra.mxu0 0
        %1480 = vmatprep.subr.bf16.mxu0 0
        %1481 = vmatpush1.bf16.msra.mxu0 0
        %1482 = vmatprep.subr.bf16.mxu0 0
        %1483 = vmatpush1.bf16.msra.mxu0 0
        %1484 = vmatprep.subr.bf16.mxu0 0
        %1485 = vmatpush1.bf16.msra.mxu0 0
        %1486 = vmatprep.subr.bf16.mxu0 0
        %1487 = vmatpush1.bf16.msra.mxu0 0
        %1488 = vmatprep.subr.bf16.mxu0 0
        %1489 = vmatpush1.bf16.msra.mxu0 0
        %1490 = vmatprep.subr.bf16.mxu0 0
        %1491 = vmatpush1.bf16.msra.mxu0 0
        %1492 = vmatprep.subr.bf16.mxu0 0
        %1493 = vmatpush1.bf16.msra.mxu0 0
        %1494 = vmatprep.subr.bf16.mxu0 0
        %1495 = vmatpush1.bf16.msra.mxu0 0
        %1496 = vmatprep.subr.bf16.mxu0 0
        %1497 = vmatpush1.bf16.msra.mxu0 0
        %1498 = vmatprep.subr.bf16.mxu0 0
        %1499 = vmatpush1.bf16.msra.mxu0 0
        %1500 = vmatprep.subr.bf16.mxu0 0
        %1501 = vmatpush1.bf16.msra.mxu0 0
        %1502 = vmatprep.mubr.bf16.mxu0 0
        %1503 = vmatmul.mubr.bf16.gmra.mrb[0].mxu0 %v1444
        %v1504 = vpop.f32.mrb[0].mxu0
        %v1505 = vadd.f32 0.0, %v1504
        %v1506 = vpop.f32.mrb[0].mxu0
        %v1507 = vpop.f32.mrb[0].mxu0
        %v1508 = vadd.f32 0.0, %v1507
        %v1509 = vpop.f32.mrb[0].mxu0
        %1510 = vmatprep.mubr.bf16.mxu0 0
        %1511 = vmatmul.mubr.bf16.gmra.mrb[0].mxu0 %v1447
        %v1512 = vpop.f32.mrb[0].mxu0
        %v1513 = vadd.f32 0.0, %v1512
        %v1514 = vpop.f32.mrb[0].mxu0
        %v1515 = vpop.f32.mrb[0].mxu0
        %v1516 = vadd.f32 0.0, %v1515
        %v1517 = vpop.f32.mrb[0].mxu0
        %1518 = vmatprep.mubr.bf16.mxu0 0
        %1519 = vmatmul.mubr.bf16.gmra.mrb[0].mxu0 %v1450
        %v1520 = vpop.f32.mrb[0].mxu0
        %v1521 = vadd.f32 0.0, %v1520
        %v1522 = vpop.f32.mrb[0].mxu0
        %v1523 = vpop.f32.mrb[0].mxu0
        %v1524 = vadd.f32 0.0, %v1523
        %v1525 = vpop.f32.mrb[0].mxu0
        %1526 = vmatprep.mubr.bf16.mxu0 0
        %1527 = vmatmul.mubr.bf16.gmra.mrb[0].mxu0 %v1453
        %v1528 = vpop.f32.mrb[0].mxu0
        %v1529 = vadd.f32 0.0, %v1528
        %v1530 = vpop.f32.mrb[0].mxu0
        %v1531 = vpop.f32.mrb[0].mxu0
        %v1532 = vadd.f32 0.0, %v1531
        %v1533 = vpop.f32.mrb[0].mxu0
        %1534 = vmatprep.mubr.bf16.mxu0 0
        %1535 = vmatmul.mubr.bf16.gmra.mrb[0].mxu0 %v1456
        %v1536 = vpop.f32.mrb[0].mxu0
        %v1537 = vadd.f32 0.0, %v1536
        %v1538 = vpop.f32.mrb[0].mxu0
        %v1539 = vpop.f32.mrb[0].mxu0
        %v1540 = vadd.f32 0.0, %v1539
        %v1541 = vpop.f32.mrb[0].mxu0
        %1542 = vmatprep.mubr.bf16.mxu0 0
        %1543 = vmatmul.mubr.bf16.gmra.mrb[0].mxu0 %v1459
        %v1544 = vpop.f32.mrb[0].mxu0
        %v1545 = vadd.f32 0.0, %v1544
        %v1546 = vpop.f32.mrb[0].mxu0
        %v1547 = vpop.f32.mrb[0].mxu0
        %v1548 = vadd.f32 0.0, %v1547
        %v1549 = vpop.f32.mrb[0].mxu0
        %1550 = vmatprep.mubr.bf16.mxu0 0
        %1551 = vmatmul.mubr.bf16.gmra.mrb[0].mxu0 %v1462
        %v1552 = vpop.f32.mrb[0].mxu0
        %v1553 = vadd.f32 0.0, %v1552
        %v1554 = vpop.f32.mrb[0].mxu0
        %v1555 = vpop.f32.mrb[0].mxu0
        %v1556 = vadd.f32 0.0, %v1555
        %v1557 = vpop.f32.mrb[0].mxu0
        %1558 = vmatprep.mubr.bf16.mxu0 0
        %1559 = vmatmul.mubr.bf16.gmra.mrb[0].mxu0 %v1465
        %v1560 = vpop.f32.mrb[0].mxu0
        %v1561 = vadd.f32 0.0, %v1560
        %v1562 = vpop.f32.mrb[0].mxu0
        %v1563 = vpop.f32.mrb[0].mxu0
        %v1564 = vadd.f32 0.0, %v1563
        %v1565 = vpop.f32.mrb[0].mxu0
        %1566 = vdwg.mxu0
        %v1567 = vadd.f32 %v1272, %v1505
        %v1568 = vadd.f32 %v1275, %v1508
        %v1569 = vadd.f32 %v1280, %v1513
        %v1570 = vadd.f32 %v1283, %v1516
        %v1571 = vadd.f32 %v1288, %v1521
        %v1572 = vadd.f32 %v1291, %v1524
        %v1573 = vadd.f32 %v1296, %v1529
        %v1574 = vadd.f32 %v1299, %v1532
        %v1575 = vadd.f32 %v1304, %v1537
        %v1576 = vadd.f32 %v1307, %v1540
        %v1577 = vadd.f32 %v1312, %v1545
        %v1578 = vadd.f32 %v1315, %v1548
        %v1579 = vadd.f32 %v1320, %v1553
        %v1580 = vadd.f32 %v1323, %v1556
        %v1581 = vadd.f32 %v1328, %v1561
        %v1582 = vadd.f32 %v1331, %v1564
        %v1583 = vld [vmem:[%s655] sm:$0xf]
        %v1584 = vld [vmem:[%s655 + $0x4] sm:$0xf]
        %v1585 = vld [vmem:[%s655 + $0xc] sm:$0xf]
        %v1586 = vld [vmem:[%s655 + $0x10] sm:$0xf]
        %v1587 = vld [vmem:[%s655 + $0x18] sm:$0xf]
        %v1588 = vld [vmem:[%s655 + $0x1c] sm:$0xf]
        %v1589 = vld [vmem:[%s655 + $0x24] sm:$0xf]
        %v1590 = vld [vmem:[%s655 + $0x28] sm:$0xf]
        %v1591 = vld [vmem:[%s655 + $0x30] sm:$0xf]
        %v1592 = vld [vmem:[%s655 + $0x34] sm:$0xf]
        %v1593 = vld [vmem:[%s655 + $0x3c] sm:$0xf]
        %v1594 = vld [vmem:[%s655 + $0x40] sm:$0xf]
        %v1595 = vld [vmem:[%s655 + $0x48] sm:$0xf]
        %v1596 = vld [vmem:[%s655 + $0x4c] sm:$0xf]
        %v1597 = vld [vmem:[%s655 + $0x54] sm:$0xf]
        %v1598 = vld [vmem:[%s655 + $0x58] sm:$0xf]
        %s1599 = scalar_lea.vmem %s3, 6
        %v1600 = vld [vmem:[%s1599] sm:$0x3]
        %v1617 = vunpack.c.l.b16 %v1583
        %v1618 = vunpack.c.l.b16 %v1584
        %v1619 = vunpack.c.l.b16 %v1585
        %v1620 = vunpack.c.l.b16 %v1586
        %v1621 = vunpack.c.l.b16 %v1587
        %v1622 = vunpack.c.l.b16 %v1588
        %v1623 = vunpack.c.l.b16 %v1589
        %v1624 = vunpack.c.l.b16 %v1590
        %v1625 = vunpack.c.l.b16 %v1591
        %v1626 = vunpack.c.l.b16 %v1592
        %v1627 = vunpack.c.l.b16 %v1593
        %v1628 = vunpack.c.l.b16 %v1594
        %v1629 = vunpack.c.l.b16 %v1595
        %v1630 = vunpack.c.l.b16 %v1596
        %v1631 = vunpack.c.l.b16 %v1597
        %v1632 = vunpack.c.l.b16 %v1598
        %v1633 = vpack.c.b16 %v1618, %v1617
        %v1634 = vpack.c.b16 %v1620, %v1619
        %v1635 = vpack.c.b16 %v1622, %v1621
        %v1636 = vpack.c.b16 %v1624, %v1623
        %v1637 = vpack.c.b16 %v1626, %v1625
        %v1638 = vpack.c.b16 %v1628, %v1627
        %v1639 = vpack.c.b16 %v1630, %v1629
        %v1640 = vpack.c.b16 %v1632, %v1631
        %v1642 = vsel %vm1044, %v1633, 0
        %v1645 = vsel %vm1044, %v1634, 0
        %v1648 = vsel %vm1044, %v1635, 0
        %v1651 = vsel %vm1044, %v1636, 0
        %v1654 = vsel %vm1044, %v1637, 0
        %v1657 = vsel %vm1044, %v1638, 0
        %v1660 = vsel %vm1044, %v1639, 0
        %v1663 = vsel %vm1044, %v1640, 0
        %v1666 = vsel %vm1069, %v1600, 0
        %1668 = vmatprep.subr.bf16.mxu0 0
        %1669 = vmatpush1.bf16.msra.mxu0 %v1666
        %1670 = vmatprep.subr.bf16.mxu0 0
        %1671 = vmatpush1.bf16.msra.mxu0 0
        %1672 = vmatprep.subr.bf16.mxu0 0
        %1673 = vmatpush1.bf16.msra.mxu0 0
        %1674 = vmatprep.subr.bf16.mxu0 0
        %1675 = vmatpush1.bf16.msra.mxu0 0
        %1676 = vmatprep.subr.bf16.mxu0 0
        %1677 = vmatpush1.bf16.msra.mxu0 0
        %1678 = vmatprep.subr.bf16.mxu0 0
        %1679 = vmatpush1.bf16.msra.mxu0 0
        %1680 = vmatprep.subr.bf16.mxu0 0
        %1681 = vmatpush1.bf16.msra.mxu0 0
        %1682 = vmatprep.subr.bf16.mxu0 0
        %1683 = vmatpush1.bf16.msra.mxu0 0
        %1684 = vmatprep.subr.bf16.mxu0 0
        %1685 = vmatpush1.bf16.msra.mxu0 0
        %1686 = vmatprep.subr.bf16.mxu0 0
        %1687 = vmatpush1.bf16.msra.mxu0 0
        %1688 = vmatprep.subr.bf16.mxu0 0
        %1689 = vmatpush1.bf16.msra.mxu0 0
        %1690 = vmatprep.subr.bf16.mxu0 0
        %1691 = vmatpush1.bf16.msra.mxu0 0
        %1692 = vmatprep.subr.bf16.mxu0 0
        %1693 = vmatpush1.bf16.msra.mxu0 0
        %1694 = vmatprep.subr.bf16.mxu0 0
        %1695 = vmatpush1.bf16.msra.mxu0 0
        %1696 = vmatprep.subr.bf16.mxu0 0
        %1697 = vmatpush1.bf16.msra.mxu0 0
        %1698 = vmatprep.subr.bf16.mxu0 0
        %1699 = vmatpush1.bf16.msra.mxu0 0
        %1700 = vmatprep.mubr.bf16.mxu0 0
        %1701 = vmatmul.mubr.bf16.gmra.mrb[0].mxu0 %v1642
        %v1702 = vpop.f32.mrb[0].mxu0
        %v1703 = vadd.f32 0.0, %v1702
        %v1704 = vpop.f32.mrb[0].mxu0
        %v1705 = vpop.f32.mrb[0].mxu0
        %v1706 = vadd.f32 0.0, %v1705
        %v1707 = vpop.f32.mrb[0].mxu0
        %1708 = vmatprep.mubr.bf16.mxu0 0
        %1709 = vmatmul.mubr.bf16.gmra.mrb[0].mxu0 %v1645
        %v1710 = vpop.f32.mrb[0].mxu0
        %v1711 = vadd.f32 0.0, %v1710
        %v1712 = vpop.f32.mrb[0].mxu0
        %v1713 = vpop.f32.mrb[0].mxu0
        %v1714 = vadd.f32 0.0, %v1713
        %v1715 = vpop.f32.mrb[0].mxu0
        %1716 = vmatprep.mubr.bf16.mxu0 0
        %1717 = vmatmul.mubr.bf16.gmra.mrb[0].mxu0 %v1648
        %v1718 = vpop.f32.mrb[0].mxu0
        %v1719 = vadd.f32 0.0, %v1718
        %v1720 = vpop.f32.mrb[0].mxu0
        %v1721 = vpop.f32.mrb[0].mxu0
        %v1722 = vadd.f32 0.0, %v1721
        %v1723 = vpop.f32.mrb[0].mxu0
        %1724 = vmatprep.mubr.bf16.mxu0 0
        %1725 = vmatmul.mubr.bf16.gmra.mrb[0].mxu0 %v1651
        %v1726 = vpop.f32.mrb[0].mxu0
        %v1727 = vadd.f32 0.0, %v1726
        %v1728 = vpop.f32.mrb[0].mxu0
        %v1729 = vpop.f32.mrb[0].mxu0
        %v1730 = vadd.f32 0.0, %v1729
        %v1731 = vpop.f32.mrb[0].mxu0
        %1732 = vmatprep.mubr.bf16.mxu0 0
        %1733 = vmatmul.mubr.bf16.gmra.mrb[0].mxu0 %v1654
        %v1734 = vpop.f32.mrb[0].mxu0
        %v1735 = vadd.f32 0.0, %v1734
        %v1736 = vpop.f32.mrb[0].mxu0
        %v1737 = vpop.f32.mrb[0].mxu0
        %v1738 = vadd.f32 0.0, %v1737
        %v1739 = vpop.f32.mrb[0].mxu0
        %1740 = vmatprep.mubr.bf16.mxu0 0
        %1741 = vmatmul.mubr.bf16.gmra.mrb[0].mxu0 %v1657
        %v1742 = vpop.f32.mrb[0].mxu0
        %v1743 = vadd.f32 0.0, %v1742
        %v1744 = vpop.f32.mrb[0].mxu0
        %v1745 = vpop.f32.mrb[0].mxu0
        %v1746 = vadd.f32 0.0, %v1745
        %v1747 = vpop.f32.mrb[0].mxu0
        %1748 = vmatprep.mubr.bf16.mxu0 0
        %1749 = vmatmul.mubr.bf16.gmra.mrb[0].mxu0 %v1660
        %v1750 = vpop.f32.mrb[0].mxu0
        %v1751 = vadd.f32 0.0, %v1750
        %v1752 = vpop.f32.mrb[0].mxu0
        %v1753 = vpop.f32.mrb[0].mxu0
        %v1754 = vadd.f32 0.0, %v1753
        %v1755 = vpop.f32.mrb[0].mxu0
        %1756 = vmatprep.mubr.bf16.mxu0 0
        %1757 = vmatmul.mubr.bf16.gmra.mrb[0].mxu0 %v1663
        %v1758 = vpop.f32.mrb[0].mxu0
        %v1759 = vadd.f32 0.0, %v1758
        %v1760 = vpop.f32.mrb[0].mxu0
        %v1761 = vpop.f32.mrb[0].mxu0
        %v1762 = vadd.f32 0.0, %v1761
        %v1763 = vpop.f32.mrb[0].mxu0
        %1764 = vdwg.mxu0
        %v1765 = vadd.f32 %v1567, %v1703
        %v1766 = vadd.f32 %v1568, %v1706
        %v1767 = vadd.f32 %v1569, %v1711
        %v1768 = vadd.f32 %v1570, %v1714
        %v1769 = vadd.f32 %v1571, %v1719
        %v1770 = vadd.f32 %v1572, %v1722
        %v1771 = vadd.f32 %v1573, %v1727
        %v1772 = vadd.f32 %v1574, %v1730
        %v1773 = vadd.f32 %v1575, %v1735
        %v1774 = vadd.f32 %v1576, %v1738
        %v1775 = vadd.f32 %v1577, %v1743
        %v1776 = vadd.f32 %v1578, %v1746
        %v1777 = vadd.f32 %v1579, %v1751
        %v1778 = vadd.f32 %v1580, %v1754
        %v1779 = vadd.f32 %v1581, %v1759
        %v1780 = vadd.f32 %v1582, %v1762
        %v1781 = vld [vmem:[%s655] sm:$0xf]
        %v1782 = vld [vmem:[%s655 + $0x4] sm:$0xf]
        %v1783 = vld [vmem:[%s655 + $0x8] sm:$0x1]
        %v1784 = vld [vmem:[%s655 + $0xc] sm:$0xf]
        %v1785 = vld [vmem:[%s655 + $0x10] sm:$0xf]
        %v1786 = vld [vmem:[%s655 + $0x14] sm:$0x1]
        %v1787 = vld [vmem:[%s655 + $0x18] sm:$0xf]
        %v1788 = vld [vmem:[%s655 + $0x1c] sm:$0xf]
        %v1789 = vld [vmem:[%s655 + $0x20] sm:$0x1]
        %v1790 = vld [vmem:[%s655 + $0x24] sm:$0xf]
        %v1791 = vld [vmem:[%s655 + $0x28] sm:$0xf]
        %v1792 = vld [vmem:[%s655 + $0x2c] sm:$0x1]
        %v1793 = vld [vmem:[%s655 + $0x30] sm:$0xf]
        %v1794 = vld [vmem:[%s655 + $0x34] sm:$0xf]
        %v1795 = vld [vmem:[%s655 + $0x38] sm:$0x1]
        %v1796 = vld [vmem:[%s655 + $0x3c] sm:$0xf]
        %v1797 = vld [vmem:[%s655 + $0x40] sm:$0xf]
        %v1798 = vld [vmem:[%s655 + $0x44] sm:$0x1]
        %v1799 = vld [vmem:[%s655 + $0x48] sm:$0xf]
        %v1800 = vld [vmem:[%s655 + $0x4c] sm:$0xf]
        %v1801 = vld [vmem:[%s655 + $0x50] sm:$0x1]
        %v1802 = vld [vmem:[%s655 + $0x54] sm:$0xf]
        %v1803 = vld [vmem:[%s655 + $0x58] sm:$0xf]
        %v1804 = vld [vmem:[%s655 + $0x5c] sm:$0x1]
        %v1806 = vshrl.u32 %v1781, 16
        %v1808 = vrot.slane %v1806, 4
        %v1809 = vshll.u32 %v1781, 16
        %v1811 = vrot.slane %v1809, 5
        %v1812 = vor.u32 %v1808, %v1811
        %v1813 = vrot.slane %v1812, 4
        %v1815 = vshll.u32 %v1782, 16
        %v1817 = vrot.slane %v1815, 5
        %v1818 = vsel %vm825, %v1813, %v1817
        %v1819 = vshrl.u32 %v1782, 16
        %v1821 = vrot.slane %v1819, 4
        %v1822 = vor.u32 %v1821, %v1817
        %v1823 = vrot.slane %v1822, 4
        %v1825 = vshll.u32 %v1783, 16
        %v1827 = vrot.slane %v1825, 5
        %v1828 = vsel %vm825, %v1823, %v1827
        %v1830 = vshrl.u32 %v1784, 16
        %v1832 = vrot.slane %v1830, 4
        %v1833 = vshll.u32 %v1784, 16
        %v1835 = vrot.slane %v1833, 5
        %v1836 = vor.u32 %v1832, %v1835
        %v1837 = vrot.slane %v1836, 4
        %v1839 = vshll.u32 %v1785, 16
        %v1841 = vrot.slane %v1839, 5
        %v1842 = vsel %vm825, %v1837, %v1841
        %v1843 = vshrl.u32 %v1785, 16
        %v1845 = vrot.slane %v1843, 4
        %v1846 = vor.u32 %v1845, %v1841
        %v1847 = vrot.slane %v1846, 4
        %v1849 = vshll.u32 %v1786, 16
        %v1851 = vrot.slane %v1849, 5
        %v1852 = vsel %vm825, %v1847, %v1851
        %v1854 = vshrl.u32 %v1787, 16
        %v1856 = vrot.slane %v1854, 4
        %v1857 = vshll.u32 %v1787, 16
        %v1859 = vrot.slane %v1857, 5
        %v1860 = vor.u32 %v1856, %v1859
        %v1861 = vrot.slane %v1860, 4
        %v1863 = vshll.u32 %v1788, 16
        %v1865 = vrot.slane %v1863, 5
        %v1866 = vsel %vm825, %v1861, %v1865
        %v1867 = vshrl.u32 %v1788, 16
        %v1869 = vrot.slane %v1867, 4
        %v1870 = vor.u32 %v1869, %v1865
        %v1871 = vrot.slane %v1870, 4
        %v1873 = vshll.u32 %v1789, 16
        %v1875 = vrot.slane %v1873, 5
        %v1876 = vsel %vm825, %v1871, %v1875
        %v1878 = vshrl.u32 %v1790, 16
        %v1880 = vrot.slane %v1878, 4
        %v1881 = vshll.u32 %v1790, 16
        %v1883 = vrot.slane %v1881, 5
        %v1884 = vor.u32 %v1880, %v1883
        %v1885 = vrot.slane %v1884, 4
        %v1887 = vshll.u32 %v1791, 16
        %v1889 = vrot.slane %v1887, 5
        %v1890 = vsel %vm825, %v1885, %v1889
        %v1891 = vshrl.u32 %v1791, 16
        %v1893 = vrot.slane %v1891, 4
        %v1894 = vor.u32 %v1893, %v1889
        %v1895 = vrot.slane %v1894, 4
        %v1897 = vshll.u32 %v1792, 16
        %v1899 = vrot.slane %v1897, 5
        %v1900 = vsel %vm825, %v1895, %v1899
        %v1902 = vshrl.u32 %v1793, 16
        %v1904 = vrot.slane %v1902, 4
        %v1905 = vshll.u32 %v1793, 16
        %v1907 = vrot.slane %v1905, 5
        %v1908 = vor.u32 %v1904, %v1907
        %v1909 = vrot.slane %v1908, 4
        %v1911 = vshll.u32 %v1794, 16
        %v1913 = vrot.slane %v1911, 5
        %v1914 = vsel %vm825, %v1909, %v1913
        %v1915 = vshrl.u32 %v1794, 16
        %v1917 = vrot.slane %v1915, 4
        %v1918 = vor.u32 %v1917, %v1913
        %v1919 = vrot.slane %v1918, 4
        %v1921 = vshll.u32 %v1795, 16
        %v1923 = vrot.slane %v1921, 5
        %v1924 = vsel %vm825, %v1919, %v1923
        %v1926 = vshrl.u32 %v1796, 16
        %v1928 = vrot.slane %v1926, 4
        %v1929 = vshll.u32 %v1796, 16
        %v1931 = vrot.slane %v1929, 5
        %v1932 = vor.u32 %v1928, %v1931
        %v1933 = vrot.slane %v1932, 4
        %v1935 = vshll.u32 %v1797, 16
        %v1937 = vrot.slane %v1935, 5
        %v1938 = vsel %vm825, %v1933, %v1937
        %v1939 = vshrl.u32 %v1797, 16
        %v1941 = vrot.slane %v1939, 4
        %v1942 = vor.u32 %v1941, %v1937
        %v1943 = vrot.slane %v1942, 4
        %v1945 = vshll.u32 %v1798, 16
        %v1947 = vrot.slane %v1945, 5
        %v1948 = vsel %vm825, %v1943, %v1947
        %v1950 = vshrl.u32 %v1799, 16
        %v1952 = vrot.slane %v1950, 4
        %v1953 = vshll.u32 %v1799, 16
        %v1955 = vrot.slane %v1953, 5
        %v1956 = vor.u32 %v1952, %v1955
        %v1957 = vrot.slane %v1956, 4
        %v1959 = vshll.u32 %v1800, 16
        %v1961 = vrot.slane %v1959, 5
        %v1962 = vsel %vm825, %v1957, %v1961
        %v1963 = vshrl.u32 %v1800, 16
        %v1965 = vrot.slane %v1963, 4
        %v1966 = vor.u32 %v1965, %v1961
        %v1967 = vrot.slane %v1966, 4
        %v1969 = vshll.u32 %v1801, 16
        %v1971 = vrot.slane %v1969, 5
        %v1972 = vsel %vm825, %v1967, %v1971
        %v1974 = vshrl.u32 %v1802, 16
        %v1976 = vrot.slane %v1974, 4
        %v1977 = vshll.u32 %v1802, 16
        %v1979 = vrot.slane %v1977, 5
        %v1980 = vor.u32 %v1976, %v1979
        %v1981 = vrot.slane %v1980, 4
        %v1983 = vshll.u32 %v1803, 16
        %v1985 = vrot.slane %v1983, 5
        %v1986 = vsel %vm825, %v1981, %v1985
        %v1987 = vshrl.u32 %v1803, 16
        %v1989 = vrot.slane %v1987, 4
        %v1990 = vor.u32 %v1989, %v1985
        %v1991 = vrot.slane %v1990, 4
        %v1993 = vshll.u32 %v1804, 16
        %v1995 = vrot.slane %v1993, 5
        %v1996 = vsel %vm825, %v1991, %v1995
        %s1997 = scalar_lea.vmem %s3, 8
        %v1998 = vld [vmem:[%s1997] sm:$0x3]
        %v1999 = vunpack.c.l.b16 %v1818
        %v2000 = vunpack.c.l.b16 %v1828
        %v2001 = vunpack.c.l.b16 %v1842
        %v2002 = vunpack.c.l.b16 %v1852
        %v2003 = vunpack.c.l.b16 %v1866
        %v2004 = vunpack.c.l.b16 %v1876
        %v2005 = vunpack.c.l.b16 %v1890
        %v2006 = vunpack.c.l.b16 %v1900
        %v2007 = vunpack.c.l.b16 %v1914
        %v2008 = vunpack.c.l.b16 %v1924
        %v2009 = vunpack.c.l.b16 %v1938
        %v2010 = vunpack.c.l.b16 %v1948
        %v2011 = vunpack.c.l.b16 %v1962
        %v2012 = vunpack.c.l.b16 %v1972
        %v2013 = vunpack.c.l.b16 %v1986
        %v2014 = vunpack.c.l.b16 %v1996
        %v2015 = vpack.c.b16 %v2000, %v1999
        %v2016 = vpack.c.b16 %v2002, %v2001
        %v2017 = vpack.c.b16 %v2004, %v2003
        %v2018 = vpack.c.b16 %v2006, %v2005
        %v2019 = vpack.c.b16 %v2008, %v2007
        %v2020 = vpack.c.b16 %v2010, %v2009
        %v2021 = vpack.c.b16 %v2012, %v2011
        %v2022 = vpack.c.b16 %v2014, %v2013
        %v2024 = vsel %vm1044, %v2015, 0
        %v2027 = vsel %vm1044, %v2016, 0
        %v2030 = vsel %vm1044, %v2017, 0
        %v2033 = vsel %vm1044, %v2018, 0
        %v2036 = vsel %vm1044, %v2019, 0
        %v2039 = vsel %vm1044, %v2020, 0
        %v2042 = vsel %vm1044, %v2021, 0
        %v2045 = vsel %vm1044, %v2022, 0
        %v2048 = vsel %vm1069, %v1998, 0
        %2050 = vmatprep.subr.bf16.mxu0 0
        %2051 = vmatpush1.bf16.msra.mxu0 %v2048
        %2052 = vmatprep.subr.bf16.mxu0 0
        %2053 = vmatpush1.bf16.msra.mxu0 0
        %2054 = vmatprep.subr.bf16.mxu0 0
        %2055 = vmatpush1.bf16.msra.mxu0 0
        %2056 = vmatprep.subr.bf16.mxu0 0
        %2057 = vmatpush1.bf16.msra.mxu0 0
        %2058 = vmatprep.subr.bf16.mxu0 0
        %2059 = vmatpush1.bf16.msra.mxu0 0
        %2060 = vmatprep.subr.bf16.mxu0 0
        %2061 = vmatpush1.bf16.msra.mxu0 0
        %2062 = vmatprep.subr.bf16.mxu0 0
        %2063 = vmatpush1.bf16.msra.mxu0 0
        %2064 = vmatprep.subr.bf16.mxu0 0
        %2065 = vmatpush1.bf16.msra.mxu0 0
        %2066 = vmatprep.subr.bf16.mxu0 0
        %2067 = vmatpush1.bf16.msra.mxu0 0
        %2068 = vmatprep.subr.bf16.mxu0 0
        %2069 = vmatpush1.bf16.msra.mxu0 0
        %2070 = vmatprep.subr.bf16.mxu0 0
        %2071 = vmatpush1.bf16.msra.mxu0 0
        %2072 = vmatprep.subr.bf16.mxu0 0
        %2073 = vmatpush1.bf16.msra.mxu0 0
        %2074 = vmatprep.subr.bf16.mxu0 0
        %2075 = vmatpush1.bf16.msra.mxu0 0
        %2076 = vmatprep.subr.bf16.mxu0 0
        %2077 = vmatpush1.bf16.msra.mxu0 0
        %2078 = vmatprep.subr.bf16.mxu0 0
        %2079 = vmatpush1.bf16.msra.mxu0 0
        %2080 = vmatprep.subr.bf16.mxu0 0
        %2081 = vmatpush1.bf16.msra.mxu0 0
        %2082 = vmatprep.mubr.bf16.mxu0 0
        %2083 = vmatmul.mubr.bf16.gmra.mrb[0].mxu0 %v2024
        %v2084 = vpop.f32.mrb[0].mxu0
        %v2085 = vadd.f32 0.0, %v2084
        %v2086 = vpop.f32.mrb[0].mxu0
        %v2087 = vpop.f32.mrb[0].mxu0
        %v2088 = vadd.f32 0.0, %v2087
        %v2089 = vpop.f32.mrb[0].mxu0
        %2090 = vmatprep.mubr.bf16.mxu0 0
        %2091 = vmatmul.mubr.bf16.gmra.mrb[0].mxu0 %v2027
        %v2092 = vpop.f32.mrb[0].mxu0
        %v2093 = vadd.f32 0.0, %v2092
        %v2094 = vpop.f32.mrb[0].mxu0
        %v2095 = vpop.f32.mrb[0].mxu0
        %v2096 = vadd.f32 0.0, %v2095
        %v2097 = vpop.f32.mrb[0].mxu0
        %2098 = vmatprep.mubr.bf16.mxu0 0
        %2099 = vmatmul.mubr.bf16.gmra.mrb[0].mxu0 %v2030
        %v2100 = vpop.f32.mrb[0].mxu0
        %v2101 = vadd.f32 0.0, %v2100
        %v2102 = vpop.f32.mrb[0].mxu0
        %v2103 = vpop.f32.mrb[0].mxu0
        %v2104 = vadd.f32 0.0, %v2103
        %v2105 = vpop.f32.mrb[0].mxu0
        %2106 = vmatprep.mubr.bf16.mxu0 0
        %2107 = vmatmul.mubr.bf16.gmra.mrb[0].mxu0 %v2033
        %v2108 = vpop.f32.mrb[0].mxu0
        %v2109 = vadd.f32 0.0, %v2108
        %v2110 = vpop.f32.mrb[0].mxu0
        %v2111 = vpop.f32.mrb[0].mxu0
        %v2112 = vadd.f32 0.0, %v2111
        %v2113 = vpop.f32.mrb[0].mxu0
        %2114 = vmatprep.mubr.bf16.mxu0 0
        %2115 = vmatmul.mubr.bf16.gmra.mrb[0].mxu0 %v2036
        %v2116 = vpop.f32.mrb[0].mxu0
        %v2117 = vadd.f32 0.0, %v2116
        %v2118 = vpop.f32.mrb[0].mxu0
        %v2119 = vpop.f32.mrb[0].mxu0
        %v2120 = vadd.f32 0.0, %v2119
        %v2121 = vpop.f32.mrb[0].mxu0
        %2122 = vmatprep.mubr.bf16.mxu0 0
        %2123 = vmatmul.mubr.bf16.gmra.mrb[0].mxu0 %v2039
        %v2124 = vpop.f32.mrb[0].mxu0
        %v2125 = vadd.f32 0.0, %v2124
        %v2126 = vpop.f32.mrb[0].mxu0
        %v2127 = vpop.f32.mrb[0].mxu0
        %v2128 = vadd.f32 0.0, %v2127
        %v2129 = vpop.f32.mrb[0].mxu0
        %2130 = vmatprep.mubr.bf16.mxu0 0
        %2131 = vmatmul.mubr.bf16.gmra.mrb[0].mxu0 %v2042
        %v2132 = vpop.f32.mrb[0].mxu0
        %v2133 = vadd.f32 0.0, %v2132
        %v2134 = vpop.f32.mrb[0].mxu0
        %v2135 = vpop.f32.mrb[0].mxu0
        %v2136 = vadd.f32 0.0, %v2135
        %v2137 = vpop.f32.mrb[0].mxu0
        %2138 = vmatprep.mubr.bf16.mxu0 0
        %2139 = vmatmul.mubr.bf16.gmra.mrb[0].mxu0 %v2045
        %v2140 = vpop.f32.mrb[0].mxu0
        %v2141 = vadd.f32 0.0, %v2140
        %v2142 = vpop.f32.mrb[0].mxu0
        %v2143 = vpop.f32.mrb[0].mxu0
        %v2144 = vadd.f32 0.0, %v2143
        %v2145 = vpop.f32.mrb[0].mxu0
        %2146 = vdwg.mxu0
        %v2147 = vadd.f32 %v1765, %v2085
        %v2148 = vadd.f32 %v1766, %v2088
        %v2149 = vadd.f32 %v1767, %v2093
        %v2150 = vadd.f32 %v1768, %v2096
        %v2151 = vadd.f32 %v1769, %v2101
        %v2152 = vadd.f32 %v1770, %v2104
        %v2153 = vadd.f32 %v1771, %v2109
        %v2154 = vadd.f32 %v1772, %v2112
        %v2155 = vadd.f32 %v1773, %v2117
        %v2156 = vadd.f32 %v1774, %v2120
        %v2157 = vadd.f32 %v1775, %v2125
        %v2158 = vadd.f32 %v1776, %v2128
        %v2159 = vadd.f32 %v1777, %v2133
        %v2160 = vadd.f32 %v1778, %v2136
        %v2161 = vadd.f32 %v1779, %v2141
        %v2162 = vadd.f32 %v1780, %v2144
        %v2163 = vld [vmem:[%s655] sm:$0xe]
        %v2164 = vld [vmem:[%s655 + $0xc] sm:$0xe]
        %v2165 = vld [vmem:[%s655 + $0x18] sm:$0xe]
        %v2166 = vld [vmem:[%s655 + $0x24] sm:$0xe]
        %v2167 = vld [vmem:[%s655 + $0x30] sm:$0xe]
        %v2168 = vld [vmem:[%s655 + $0x3c] sm:$0xe]
        %v2169 = vld [vmem:[%s655 + $0x48] sm:$0xe]
        %v2170 = vld [vmem:[%s655 + $0x54] sm:$0xe]
        %v2195 = vrot.slane %v2163, 5
        %v2196 = vrot.slane %v2195, 4
        %v2197 = vrot.slane %v1782, 5
        %v2198 = vsel %vm1360, %v2196, %v2197
        %v2199 = vrot.slane %v2197, 4
        %v2200 = vrot.slane %v1783, 5
        %v2201 = vsel %vm1360, %v2199, %v2200
        %v2202 = vrot.slane %v2164, 5
        %v2203 = vrot.slane %v2202, 4
        %v2204 = vrot.slane %v1785, 5
        %v2205 = vsel %vm1360, %v2203, %v2204
        %v2206 = vrot.slane %v2204, 4
        %v2207 = vrot.slane %v1786, 5
        %v2208 = vsel %vm1360, %v2206, %v2207
        %v2209 = vrot.slane %v2165, 5
        %v2210 = vrot.slane %v2209, 4
        %v2211 = vrot.slane %v1788, 5
        %v2212 = vsel %vm1360, %v2210, %v2211
        %v2213 = vrot.slane %v2211, 4
        %v2214 = vrot.slane %v1789, 5
        %v2215 = vsel %vm1360, %v2213, %v2214
        %v2216 = vrot.slane %v2166, 5
        %v2217 = vrot.slane %v2216, 4
        %v2218 = vrot.slane %v1791, 5
        %v2219 = vsel %vm1360, %v2217, %v2218
        %v2220 = vrot.slane %v2218, 4
        %v2221 = vrot.slane %v1792, 5
        %v2222 = vsel %vm1360, %v2220, %v2221
        %v2223 = vrot.slane %v2167, 5
        %v2224 = vrot.slane %v2223, 4
        %v2225 = vrot.slane %v1794, 5
        %v2226 = vsel %vm1360, %v2224, %v2225
        %v2227 = vrot.slane %v2225, 4
        %v2228 = vrot.slane %v1795, 5
        %v2229 = vsel %vm1360, %v2227, %v2228
        %v2230 = vrot.slane %v2168, 5
        %v2231 = vrot.slane %v2230, 4
        %v2232 = vrot.slane %v1797, 5
        %v2233 = vsel %vm1360, %v2231, %v2232
        %v2234 = vrot.slane %v2232, 4
        %v2235 = vrot.slane %v1798, 5
        %v2236 = vsel %vm1360, %v2234, %v2235
        %v2237 = vrot.slane %v2169, 5
        %v2238 = vrot.slane %v2237, 4
        %v2239 = vrot.slane %v1800, 5
        %v2240 = vsel %vm1360, %v2238, %v2239
        %v2241 = vrot.slane %v2239, 4
        %v2242 = vrot.slane %v1801, 5
        %v2243 = vsel %vm1360, %v2241, %v2242
        %v2244 = vrot.slane %v2170, 5
        %v2245 = vrot.slane %v2244, 4
        %v2246 = vrot.slane %v1803, 5
        %v2247 = vsel %vm1360, %v2245, %v2246
        %v2248 = vrot.slane %v2246, 4
        %v2249 = vrot.slane %v1804, 5
        %v2250 = vsel %vm1360, %v2248, %v2249
        %s2251 = scalar_lea.vmem %s3, 10
        %v2252 = vld [vmem:[%s2251] sm:$0x3]
        %v2253 = vunpack.c.l.b16 %v2198
        %v2254 = vunpack.c.l.b16 %v2201
        %v2255 = vunpack.c.l.b16 %v2205
        %v2256 = vunpack.c.l.b16 %v2208
        %v2257 = vunpack.c.l.b16 %v2212
        %v2258 = vunpack.c.l.b16 %v2215
        %v2259 = vunpack.c.l.b16 %v2219
        %v2260 = vunpack.c.l.b16 %v2222
        %v2261 = vunpack.c.l.b16 %v2226
        %v2262 = vunpack.c.l.b16 %v2229
        %v2263 = vunpack.c.l.b16 %v2233
        %v2264 = vunpack.c.l.b16 %v2236
        %v2265 = vunpack.c.l.b16 %v2240
        %v2266 = vunpack.c.l.b16 %v2243
        %v2267 = vunpack.c.l.b16 %v2247
        %v2268 = vunpack.c.l.b16 %v2250
        %v2269 = vpack.c.b16 %v2254, %v2253
        %v2270 = vpack.c.b16 %v2256, %v2255
        %v2271 = vpack.c.b16 %v2258, %v2257
        %v2272 = vpack.c.b16 %v2260, %v2259
        %v2273 = vpack.c.b16 %v2262, %v2261
        %v2274 = vpack.c.b16 %v2264, %v2263
        %v2275 = vpack.c.b16 %v2266, %v2265
        %v2276 = vpack.c.b16 %v2268, %v2267
        %v2278 = vsel %vm1044, %v2269, 0
        %v2281 = vsel %vm1044, %v2270, 0
        %v2284 = vsel %vm1044, %v2271, 0
        %v2287 = vsel %vm1044, %v2272, 0
        %v2290 = vsel %vm1044, %v2273, 0
        %v2293 = vsel %vm1044, %v2274, 0
        %v2296 = vsel %vm1044, %v2275, 0
        %v2299 = vsel %vm1044, %v2276, 0
        %v2302 = vsel %vm1069, %v2252, 0
        %2304 = vmatprep.subr.bf16.mxu0 0
        %2305 = vmatpush1.bf16.msra.mxu0 %v2302
        %2306 = vmatprep.subr.bf16.mxu0 0
        %2307 = vmatpush1.bf16.msra.mxu0 0
        %2308 = vmatprep.subr.bf16.mxu0 0
        %2309 = vmatpush1.bf16.msra.mxu0 0
        %2310 = vmatprep.subr.bf16.mxu0 0
        %2311 = vmatpush1.bf16.msra.mxu0 0
        %2312 = vmatprep.subr.bf16.mxu0 0
        %2313 = vmatpush1.bf16.msra.mxu0 0
        %2314 = vmatprep.subr.bf16.mxu0 0
        %2315 = vmatpush1.bf16.msra.mxu0 0
        %2316 = vmatprep.subr.bf16.mxu0 0
        %2317 = vmatpush1.bf16.msra.mxu0 0
        %2318 = vmatprep.subr.bf16.mxu0 0
        %2319 = vmatpush1.bf16.msra.mxu0 0
        %2320 = vmatprep.subr.bf16.mxu0 0
        %2321 = vmatpush1.bf16.msra.mxu0 0
        %2322 = vmatprep.subr.bf16.mxu0 0
        %2323 = vmatpush1.bf16.msra.mxu0 0
        %2324 = vmatprep.subr.bf16.mxu0 0
        %2325 = vmatpush1.bf16.msra.mxu0 0
        %2326 = vmatprep.subr.bf16.mxu0 0
        %2327 = vmatpush1.bf16.msra.mxu0 0
        %2328 = vmatprep.subr.bf16.mxu0 0
        %2329 = vmatpush1.bf16.msra.mxu0 0
        %2330 = vmatprep.subr.bf16.mxu0 0
        %2331 = vmatpush1.bf16.msra.mxu0 0
        %2332 = vmatprep.subr.bf16.mxu0 0
        %2333 = vmatpush1.bf16.msra.mxu0 0
        %2334 = vmatprep.subr.bf16.mxu0 0
        %2335 = vmatpush1.bf16.msra.mxu0 0
        %2336 = vmatprep.mubr.bf16.mxu0 0
        %2337 = vmatmul.mubr.bf16.gmra.mrb[0].mxu0 %v2278
        %v2338 = vpop.f32.mrb[0].mxu0
        %v2339 = vadd.f32 0.0, %v2338
        %v2340 = vpop.f32.mrb[0].mxu0
        %v2341 = vpop.f32.mrb[0].mxu0
        %v2342 = vadd.f32 0.0, %v2341
        %v2343 = vpop.f32.mrb[0].mxu0
        %2344 = vmatprep.mubr.bf16.mxu0 0
        %2345 = vmatmul.mubr.bf16.gmra.mrb[0].mxu0 %v2281
        %v2346 = vpop.f32.mrb[0].mxu0
        %v2347 = vadd.f32 0.0, %v2346
        %v2348 = vpop.f32.mrb[0].mxu0
        %v2349 = vpop.f32.mrb[0].mxu0
        %v2350 = vadd.f32 0.0, %v2349
        %v2351 = vpop.f32.mrb[0].mxu0
        %2352 = vmatprep.mubr.bf16.mxu0 0
        %2353 = vmatmul.mubr.bf16.gmra.mrb[0].mxu0 %v2284
        %v2354 = vpop.f32.mrb[0].mxu0
        %v2355 = vadd.f32 0.0, %v2354
        %v2356 = vpop.f32.mrb[0].mxu0
        %v2357 = vpop.f32.mrb[0].mxu0
        %v2358 = vadd.f32 0.0, %v2357
        %v2359 = vpop.f32.mrb[0].mxu0
        %2360 = vmatprep.mubr.bf16.mxu0 0
        %2361 = vmatmul.mubr.bf16.gmra.mrb[0].mxu0 %v2287
        %v2362 = vpop.f32.mrb[0].mxu0
        %v2363 = vadd.f32 0.0, %v2362
        %v2364 = vpop.f32.mrb[0].mxu0
        %v2365 = vpop.f32.mrb[0].mxu0
        %v2366 = vadd.f32 0.0, %v2365
        %v2367 = vpop.f32.mrb[0].mxu0
        %2368 = vmatprep.mubr.bf16.mxu0 0
        %2369 = vmatmul.mubr.bf16.gmra.mrb[0].mxu0 %v2290
        %v2370 = vpop.f32.mrb[0].mxu0
        %v2371 = vadd.f32 0.0, %v2370
        %v2372 = vpop.f32.mrb[0].mxu0
        %v2373 = vpop.f32.mrb[0].mxu0
        %v2374 = vadd.f32 0.0, %v2373
        %v2375 = vpop.f32.mrb[0].mxu0
        %2376 = vmatprep.mubr.bf16.mxu0 0
        %2377 = vmatmul.mubr.bf16.gmra.mrb[0].mxu0 %v2293
        %v2378 = vpop.f32.mrb[0].mxu0
        %v2379 = vadd.f32 0.0, %v2378
        %v2380 = vpop.f32.mrb[0].mxu0
        %v2381 = vpop.f32.mrb[0].mxu0
        %v2382 = vadd.f32 0.0, %v2381
        %v2383 = vpop.f32.mrb[0].mxu0
        %2384 = vmatprep.mubr.bf16.mxu0 0
        %2385 = vmatmul.mubr.bf16.gmra.mrb[0].mxu0 %v2296
        %v2386 = vpop.f32.mrb[0].mxu0
        %v2387 = vadd.f32 0.0, %v2386
        %v2388 = vpop.f32.mrb[0].mxu0
        %v2389 = vpop.f32.mrb[0].mxu0
        %v2390 = vadd.f32 0.0, %v2389
        %v2391 = vpop.f32.mrb[0].mxu0
        %2392 = vmatprep.mubr.bf16.mxu0 0
        %2393 = vmatmul.mubr.bf16.gmra.mrb[0].mxu0 %v2299
        %v2394 = vpop.f32.mrb[0].mxu0
        %v2395 = vadd.f32 0.0, %v2394
        %v2396 = vpop.f32.mrb[0].mxu0
        %v2397 = vpop.f32.mrb[0].mxu0
        %v2398 = vadd.f32 0.0, %v2397
        %v2399 = vpop.f32.mrb[0].mxu0
        %2400 = vdwg.mxu0
        %v2401 = vadd.f32 %v2147, %v2339
        %v2402 = vadd.f32 %v2148, %v2342
        %v2403 = vadd.f32 %v2149, %v2347
        %v2404 = vadd.f32 %v2150, %v2350
        %v2405 = vadd.f32 %v2151, %v2355
        %v2406 = vadd.f32 %v2152, %v2358
        %v2407 = vadd.f32 %v2153, %v2363
        %v2408 = vadd.f32 %v2154, %v2366
        %v2409 = vadd.f32 %v2155, %v2371
        %v2410 = vadd.f32 %v2156, %v2374
        %v2411 = vadd.f32 %v2157, %v2379
        %v2412 = vadd.f32 %v2158, %v2382
        %v2413 = vadd.f32 %v2159, %v2387
        %v2414 = vadd.f32 %v2160, %v2390
        %v2415 = vadd.f32 %v2161, %v2395
        %v2416 = vadd.f32 %v2162, %v2398
        %s2417 = scalar_lea.vmem [#allocation2], 24
        %v2418 = vld [vmem:[%s2417] sm:$0xf]
        %v2419 = vld [vmem:[%s2417 + $0x4] sm:$0xf]
        %v2420 = vld [vmem:[%s2417 + $0xc] sm:$0xf]
        %v2421 = vld [vmem:[%s2417 + $0x10] sm:$0xf]
        %v2422 = vld [vmem:[%s2417 + $0x18] sm:$0xf]
        %v2423 = vld [vmem:[%s2417 + $0x1c] sm:$0xf]
        %v2424 = vld [vmem:[%s2417 + $0x24] sm:$0xf]
        %v2425 = vld [vmem:[%s2417 + $0x28] sm:$0xf]
        %v2426 = vld [vmem:[%s2417 + $0x30] sm:$0xf]
        %v2427 = vld [vmem:[%s2417 + $0x34] sm:$0xf]
        %v2428 = vld [vmem:[%s2417 + $0x3c] sm:$0xf]
        %v2429 = vld [vmem:[%s2417 + $0x40] sm:$0xf]
        %v2430 = vld [vmem:[%s2417 + $0x48] sm:$0xf]
        %v2431 = vld [vmem:[%s2417 + $0x4c] sm:$0xf]
        %v2432 = vld [vmem:[%s2417 + $0x54] sm:$0xf]
        %v2433 = vld [vmem:[%s2417 + $0x58] sm:$0xf]
        %s2434 = scalar_lea.vmem %s3, 12
        %v2435 = vld [vmem:[%s2434] sm:$0x3]
        %v2452 = vunpack.c.l.b16 %v2418
        %v2453 = vunpack.c.l.b16 %v2419
        %v2454 = vunpack.c.l.b16 %v2420
        %v2455 = vunpack.c.l.b16 %v2421
        %v2456 = vunpack.c.l.b16 %v2422
        %v2457 = vunpack.c.l.b16 %v2423
        %v2458 = vunpack.c.l.b16 %v2424
        %v2459 = vunpack.c.l.b16 %v2425
        %v2460 = vunpack.c.l.b16 %v2426
        %v2461 = vunpack.c.l.b16 %v2427
        %v2462 = vunpack.c.l.b16 %v2428
        %v2463 = vunpack.c.l.b16 %v2429
        %v2464 = vunpack.c.l.b16 %v2430
        %v2465 = vunpack.c.l.b16 %v2431
        %v2466 = vunpack.c.l.b16 %v2432
        %v2467 = vunpack.c.l.b16 %v2433
        %v2468 = vpack.c.b16 %v2453, %v2452
        %v2469 = vpack.c.b16 %v2455, %v2454
        %v2470 = vpack.c.b16 %v2457, %v2456
        %v2471 = vpack.c.b16 %v2459, %v2458
        %v2472 = vpack.c.b16 %v2461, %v2460
        %v2473 = vpack.c.b16 %v2463, %v2462
        %v2474 = vpack.c.b16 %v2465, %v2464
        %v2475 = vpack.c.b16 %v2467, %v2466
        %v2477 = vsel %vm1044, %v2468, 0
        %v2480 = vsel %vm1044, %v2469, 0
        %v2483 = vsel %vm1044, %v2470, 0
        %v2486 = vsel %vm1044, %v2471, 0
        %v2489 = vsel %vm1044, %v2472, 0
        %v2492 = vsel %vm1044, %v2473, 0
        %v2495 = vsel %vm1044, %v2474, 0
        %v2498 = vsel %vm1044, %v2475, 0
        %v2501 = vsel %vm1069, %v2435, 0
        %2503 = vmatprep.subr.bf16.mxu0 0
        %2504 = vmatpush1.bf16.msra.mxu0 %v2501
        %2505 = vmatprep.subr.bf16.mxu0 0
        %2506 = vmatpush1.bf16.msra.mxu0 0
        %2507 = vmatprep.subr.bf16.mxu0 0
        %2508 = vmatpush1.bf16.msra.mxu0 0
        %2509 = vmatprep.subr.bf16.mxu0 0
        %2510 = vmatpush1.bf16.msra.mxu0 0
        %2511 = vmatprep.subr.bf16.mxu0 0
        %2512 = vmatpush1.bf16.msra.mxu0 0
        %2513 = vmatprep.subr.bf16.mxu0 0
        %2514 = vmatpush1.bf16.msra.mxu0 0
        %2515 = vmatprep.subr.bf16.mxu0 0
        %2516 = vmatpush1.bf16.msra.mxu0 0
        %2517 = vmatprep.subr.bf16.mxu0 0
        %2518 = vmatpush1.bf16.msra.mxu0 0
        %2519 = vmatprep.subr.bf16.mxu0 0
        %2520 = vmatpush1.bf16.msra.mxu0 0
        %2521 = vmatprep.subr.bf16.mxu0 0
        %2522 = vmatpush1.bf16.msra.mxu0 0
        %2523 = vmatprep.subr.bf16.mxu0 0
        %2524 = vmatpush1.bf16.msra.mxu0 0
        %2525 = vmatprep.subr.bf16.mxu0 0
        %2526 = vmatpush1.bf16.msra.mxu0 0
        %2527 = vmatprep.subr.bf16.mxu0 0
        %2528 = vmatpush1.bf16.msra.mxu0 0
        %2529 = vmatprep.subr.bf16.mxu0 0
        %2530 = vmatpush1.bf16.msra.mxu0 0
        %2531 = vmatprep.subr.bf16.mxu0 0
        %2532 = vmatpush1.bf16.msra.mxu0 0
        %2533 = vmatprep.subr.bf16.mxu0 0
        %2534 = vmatpush1.bf16.msra.mxu0 0
        %2535 = vmatprep.mubr.bf16.mxu0 0
        %2536 = vmatmul.mubr.bf16.gmra.mrb[0].mxu0 %v2477
        %v2537 = vpop.f32.mrb[0].mxu0
        %v2538 = vadd.f32 0.0, %v2537
        %v2539 = vpop.f32.mrb[0].mxu0
        %v2540 = vpop.f32.mrb[0].mxu0
        %v2541 = vadd.f32 0.0, %v2540
        %v2542 = vpop.f32.mrb[0].mxu0
        %2543 = vmatprep.mubr.bf16.mxu0 0
        %2544 = vmatmul.mubr.bf16.gmra.mrb[0].mxu0 %v2480
        %v2545 = vpop.f32.mrb[0].mxu0
        %v2546 = vadd.f32 0.0, %v2545
        %v2547 = vpop.f32.mrb[0].mxu0
        %v2548 = vpop.f32.mrb[0].mxu0
        %v2549 = vadd.f32 0.0, %v2548
        %v2550 = vpop.f32.mrb[0].mxu0
        %2551 = vmatprep.mubr.bf16.mxu0 0
        %2552 = vmatmul.mubr.bf16.gmra.mrb[0].mxu0 %v2483
        %v2553 = vpop.f32.mrb[0].mxu0
        %v2554 = vadd.f32 0.0, %v2553
        %v2555 = vpop.f32.mrb[0].mxu0
        %v2556 = vpop.f32.mrb[0].mxu0
        %v2557 = vadd.f32 0.0, %v2556
        %v2558 = vpop.f32.mrb[0].mxu0
        %2559 = vmatprep.mubr.bf16.mxu0 0
        %2560 = vmatmul.mubr.bf16.gmra.mrb[0].mxu0 %v2486
        %v2561 = vpop.f32.mrb[0].mxu0
        %v2562 = vadd.f32 0.0, %v2561
        %v2563 = vpop.f32.mrb[0].mxu0
        %v2564 = vpop.f32.mrb[0].mxu0
        %v2565 = vadd.f32 0.0, %v2564
        %v2566 = vpop.f32.mrb[0].mxu0
        %2567 = vmatprep.mubr.bf16.mxu0 0
        %2568 = vmatmul.mubr.bf16.gmra.mrb[0].mxu0 %v2489
        %v2569 = vpop.f32.mrb[0].mxu0
        %v2570 = vadd.f32 0.0, %v2569
        %v2571 = vpop.f32.mrb[0].mxu0
        %v2572 = vpop.f32.mrb[0].mxu0
        %v2573 = vadd.f32 0.0, %v2572
        %v2574 = vpop.f32.mrb[0].mxu0
        %2575 = vmatprep.mubr.bf16.mxu0 0
        %2576 = vmatmul.mubr.bf16.gmra.mrb[0].mxu0 %v2492
        %v2577 = vpop.f32.mrb[0].mxu0
        %v2578 = vadd.f32 0.0, %v2577
        %v2579 = vpop.f32.mrb[0].mxu0
        %v2580 = vpop.f32.mrb[0].mxu0
        %v2581 = vadd.f32 0.0, %v2580
        %v2582 = vpop.f32.mrb[0].mxu0
        %2583 = vmatprep.mubr.bf16.mxu0 0
        %2584 = vmatmul.mubr.bf16.gmra.mrb[0].mxu0 %v2495
        %v2585 = vpop.f32.mrb[0].mxu0
        %v2586 = vadd.f32 0.0, %v2585
        %v2587 = vpop.f32.mrb[0].mxu0
        %v2588 = vpop.f32.mrb[0].mxu0
        %v2589 = vadd.f32 0.0, %v2588
        %v2590 = vpop.f32.mrb[0].mxu0
        %2591 = vmatprep.mubr.bf16.mxu0 0
        %2592 = vmatmul.mubr.bf16.gmra.mrb[0].mxu0 %v2498
        %v2593 = vpop.f32.mrb[0].mxu0
        %v2594 = vadd.f32 0.0, %v2593
        %v2595 = vpop.f32.mrb[0].mxu0
        %v2596 = vpop.f32.mrb[0].mxu0
        %v2597 = vadd.f32 0.0, %v2596
        %v2598 = vpop.f32.mrb[0].mxu0
        %2599 = vdwg.mxu0
        %v2600 = vadd.f32 %v2401, %v2538
        %v2601 = vadd.f32 %v2402, %v2541
        %v2602 = vadd.f32 %v2403, %v2546
        %v2603 = vadd.f32 %v2404, %v2549
        %v2604 = vadd.f32 %v2405, %v2554
        %v2605 = vadd.f32 %v2406, %v2557
        %v2606 = vadd.f32 %v2407, %v2562
        %v2607 = vadd.f32 %v2408, %v2565
        %v2608 = vadd.f32 %v2409, %v2570
        %v2609 = vadd.f32 %v2410, %v2573
        %v2610 = vadd.f32 %v2411, %v2578
        %v2611 = vadd.f32 %v2412, %v2581
        %v2612 = vadd.f32 %v2413, %v2586
        %v2613 = vadd.f32 %v2414, %v2589
        %v2614 = vadd.f32 %v2415, %v2594
        %v2615 = vadd.f32 %v2416, %v2597
        %v2616 = vld [vmem:[%s2417] sm:$0xf]
        %v2617 = vld [vmem:[%s2417 + $0x4] sm:$0xf]
        %v2618 = vld [vmem:[%s2417 + $0x8] sm:$0x1]
        %v2619 = vld [vmem:[%s2417 + $0xc] sm:$0xf]
        %v2620 = vld [vmem:[%s2417 + $0x10] sm:$0xf]
        %v2621 = vld [vmem:[%s2417 + $0x14] sm:$0x1]
        %v2622 = vld [vmem:[%s2417 + $0x18] sm:$0xf]
        %v2623 = vld [vmem:[%s2417 + $0x1c] sm:$0xf]
        %v2624 = vld [vmem:[%s2417 + $0x20] sm:$0x1]
        %v2625 = vld [vmem:[%s2417 + $0x24] sm:$0xf]
        %v2626 = vld [vmem:[%s2417 + $0x28] sm:$0xf]
        %v2627 = vld [vmem:[%s2417 + $0x2c] sm:$0x1]
        %v2628 = vld [vmem:[%s2417 + $0x30] sm:$0xf]
        %v2629 = vld [vmem:[%s2417 + $0x34] sm:$0xf]
        %v2630 = vld [vmem:[%s2417 + $0x38] sm:$0x1]
        %v2631 = vld [vmem:[%s2417 + $0x3c] sm:$0xf]
        %v2632 = vld [vmem:[%s2417 + $0x40] sm:$0xf]
        %v2633 = vld [vmem:[%s2417 + $0x44] sm:$0x1]
        %v2634 = vld [vmem:[%s2417 + $0x48] sm:$0xf]
        %v2635 = vld [vmem:[%s2417 + $0x4c] sm:$0xf]
        %v2636 = vld [vmem:[%s2417 + $0x50] sm:$0x1]
        %v2637 = vld [vmem:[%s2417 + $0x54] sm:$0xf]
        %v2638 = vld [vmem:[%s2417 + $0x58] sm:$0xf]
        %v2639 = vld [vmem:[%s2417 + $0x5c] sm:$0x1]
        %v2641 = vshrl.u32 %v2616, 16
        %v2643 = vrot.slane %v2641, 4
        %v2644 = vshll.u32 %v2616, 16
        %v2646 = vrot.slane %v2644, 5
        %v2647 = vor.u32 %v2643, %v2646
        %v2648 = vrot.slane %v2647, 4
        %v2650 = vshll.u32 %v2617, 16
        %v2652 = vrot.slane %v2650, 5
        %v2653 = vsel %vm825, %v2648, %v2652
        %v2654 = vshrl.u32 %v2617, 16
        %v2656 = vrot.slane %v2654, 4
        %v2657 = vor.u32 %v2656, %v2652
        %v2658 = vrot.slane %v2657, 4
        %v2660 = vshll.u32 %v2618, 16
        %v2662 = vrot.slane %v2660, 5
        %v2663 = vsel %vm825, %v2658, %v2662
        %v2665 = vshrl.u32 %v2619, 16
        %v2667 = vrot.slane %v2665, 4
        %v2668 = vshll.u32 %v2619, 16
        %v2670 = vrot.slane %v2668, 5
        %v2671 = vor.u32 %v2667, %v2670
        %v2672 = vrot.slane %v2671, 4
        %v2674 = vshll.u32 %v2620, 16
        %v2676 = vrot.slane %v2674, 5
        %v2677 = vsel %vm825, %v2672, %v2676
        %v2678 = vshrl.u32 %v2620, 16
        %v2680 = vrot.slane %v2678, 4
        %v2681 = vor.u32 %v2680, %v2676
        %v2682 = vrot.slane %v2681, 4
        %v2684 = vshll.u32 %v2621, 16
        %v2686 = vrot.slane %v2684, 5
        %v2687 = vsel %vm825, %v2682, %v2686
        %v2689 = vshrl.u32 %v2622, 16
        %v2691 = vrot.slane %v2689, 4
        %v2692 = vshll.u32 %v2622, 16
        %v2694 = vrot.slane %v2692, 5
        %v2695 = vor.u32 %v2691, %v2694
        %v2696 = vrot.slane %v2695, 4
        %v2698 = vshll.u32 %v2623, 16
        %v2700 = vrot.slane %v2698, 5
        %v2701 = vsel %vm825, %v2696, %v2700
        %v2702 = vshrl.u32 %v2623, 16
        %v2704 = vrot.slane %v2702, 4
        %v2705 = vor.u32 %v2704, %v2700
        %v2706 = vrot.slane %v2705, 4
        %v2708 = vshll.u32 %v2624, 16
        %v2710 = vrot.slane %v2708, 5
        %v2711 = vsel %vm825, %v2706, %v2710
        %v2713 = vshrl.u32 %v2625, 16
        %v2715 = vrot.slane %v2713, 4
        %v2716 = vshll.u32 %v2625, 16
        %v2718 = vrot.slane %v2716, 5
        %v2719 = vor.u32 %v2715, %v2718
        %v2720 = vrot.slane %v2719, 4
        %v2722 = vshll.u32 %v2626, 16
        %v2724 = vrot.slane %v2722, 5
        %v2725 = vsel %vm825, %v2720, %v2724
        %v2726 = vshrl.u32 %v2626, 16
        %v2728 = vrot.slane %v2726, 4
        %v2729 = vor.u32 %v2728, %v2724
        %v2730 = vrot.slane %v2729, 4
        %v2732 = vshll.u32 %v2627, 16
        %v2734 = vrot.slane %v2732, 5
        %v2735 = vsel %vm825, %v2730, %v2734
        %v2737 = vshrl.u32 %v2628, 16
        %v2739 = vrot.slane %v2737, 4
        %v2740 = vshll.u32 %v2628, 16
        %v2742 = vrot.slane %v2740, 5
        %v2743 = vor.u32 %v2739, %v2742
        %v2744 = vrot.slane %v2743, 4
        %v2746 = vshll.u32 %v2629, 16
        %v2748 = vrot.slane %v2746, 5
        %v2749 = vsel %vm825, %v2744, %v2748
        %v2750 = vshrl.u32 %v2629, 16
        %v2752 = vrot.slane %v2750, 4
        %v2753 = vor.u32 %v2752, %v2748
        %v2754 = vrot.slane %v2753, 4
        %v2756 = vshll.u32 %v2630, 16
        %v2758 = vrot.slane %v2756, 5
        %v2759 = vsel %vm825, %v2754, %v2758
        %v2761 = vshrl.u32 %v2631, 16
        %v2763 = vrot.slane %v2761, 4
        %v2764 = vshll.u32 %v2631, 16
        %v2766 = vrot.slane %v2764, 5
        %v2767 = vor.u32 %v2763, %v2766
        %v2768 = vrot.slane %v2767, 4
        %v2770 = vshll.u32 %v2632, 16
        %v2772 = vrot.slane %v2770, 5
        %v2773 = vsel %vm825, %v2768, %v2772
        %v2774 = vshrl.u32 %v2632, 16
        %v2776 = vrot.slane %v2774, 4
        %v2777 = vor.u32 %v2776, %v2772
        %v2778 = vrot.slane %v2777, 4
        %v2780 = vshll.u32 %v2633, 16
        %v2782 = vrot.slane %v2780, 5
        %v2783 = vsel %vm825, %v2778, %v2782
        %v2785 = vshrl.u32 %v2634, 16
        %v2787 = vrot.slane %v2785, 4
        %v2788 = vshll.u32 %v2634, 16
        %v2790 = vrot.slane %v2788, 5
        %v2791 = vor.u32 %v2787, %v2790
        %v2792 = vrot.slane %v2791, 4
        %v2794 = vshll.u32 %v2635, 16
        %v2796 = vrot.slane %v2794, 5
        %v2797 = vsel %vm825, %v2792, %v2796
        %v2798 = vshrl.u32 %v2635, 16
        %v2800 = vrot.slane %v2798, 4
        %v2801 = vor.u32 %v2800, %v2796
        %v2802 = vrot.slane %v2801, 4
        %v2804 = vshll.u32 %v2636, 16
        %v2806 = vrot.slane %v2804, 5
        %v2807 = vsel %vm825, %v2802, %v2806
        %v2809 = vshrl.u32 %v2637, 16
        %v2811 = vrot.slane %v2809, 4
        %v2812 = vshll.u32 %v2637, 16
        %v2814 = vrot.slane %v2812, 5
        %v2815 = vor.u32 %v2811, %v2814
        %v2816 = vrot.slane %v2815, 4
        %v2818 = vshll.u32 %v2638, 16
        %v2820 = vrot.slane %v2818, 5
        %v2821 = vsel %vm825, %v2816, %v2820
        %v2822 = vshrl.u32 %v2638, 16
        %v2824 = vrot.slane %v2822, 4
        %v2825 = vor.u32 %v2824, %v2820
        %v2826 = vrot.slane %v2825, 4
        %v2828 = vshll.u32 %v2639, 16
        %v2830 = vrot.slane %v2828, 5
        %v2831 = vsel %vm825, %v2826, %v2830
        %s2832 = scalar_lea.vmem %s3, 14
        %v2833 = vld [vmem:[%s2832] sm:$0x3]
        %v2834 = vunpack.c.l.b16 %v2653
        %v2835 = vunpack.c.l.b16 %v2663
        %v2836 = vunpack.c.l.b16 %v2677
        %v2837 = vunpack.c.l.b16 %v2687
        %v2838 = vunpack.c.l.b16 %v2701
        %v2839 = vunpack.c.l.b16 %v2711
        %v2840 = vunpack.c.l.b16 %v2725
        %v2841 = vunpack.c.l.b16 %v2735
        %v2842 = vunpack.c.l.b16 %v2749
        %v2843 = vunpack.c.l.b16 %v2759
        %v2844 = vunpack.c.l.b16 %v2773
        %v2845 = vunpack.c.l.b16 %v2783
        %v2846 = vunpack.c.l.b16 %v2797
        %v2847 = vunpack.c.l.b16 %v2807
        %v2848 = vunpack.c.l.b16 %v2821
        %v2849 = vunpack.c.l.b16 %v2831
        %v2850 = vpack.c.b16 %v2835, %v2834
        %v2851 = vpack.c.b16 %v2837, %v2836
        %v2852 = vpack.c.b16 %v2839, %v2838
        %v2853 = vpack.c.b16 %v2841, %v2840
        %v2854 = vpack.c.b16 %v2843, %v2842
        %v2855 = vpack.c.b16 %v2845, %v2844
        %v2856 = vpack.c.b16 %v2847, %v2846
        %v2857 = vpack.c.b16 %v2849, %v2848
        %v2859 = vsel %vm1044, %v2850, 0
        %v2862 = vsel %vm1044, %v2851, 0
        %v2865 = vsel %vm1044, %v2852, 0
        %v2868 = vsel %vm1044, %v2853, 0
        %v2871 = vsel %vm1044, %v2854, 0
        %v2874 = vsel %vm1044, %v2855, 0
        %v2877 = vsel %vm1044, %v2856, 0
        %v2880 = vsel %vm1044, %v2857, 0
        %v2883 = vsel %vm1069, %v2833, 0
        %2885 = vmatprep.subr.bf16.mxu0 0
        %2886 = vmatpush1.bf16.msra.mxu0 %v2883
        %2887 = vmatprep.subr.bf16.mxu0 0
        %2888 = vmatpush1.bf16.msra.mxu0 0
        %2889 = vmatprep.subr.bf16.mxu0 0
        %2890 = vmatpush1.bf16.msra.mxu0 0
        %2891 = vmatprep.subr.bf16.mxu0 0
        %2892 = vmatpush1.bf16.msra.mxu0 0
        %2893 = vmatprep.subr.bf16.mxu0 0
        %2894 = vmatpush1.bf16.msra.mxu0 0
        %2895 = vmatprep.subr.bf16.mxu0 0
        %2896 = vmatpush1.bf16.msra.mxu0 0
        %2897 = vmatprep.subr.bf16.mxu0 0
        %2898 = vmatpush1.bf16.msra.mxu0 0
        %2899 = vmatprep.subr.bf16.mxu0 0
        %2900 = vmatpush1.bf16.msra.mxu0 0
        %2901 = vmatprep.subr.bf16.mxu0 0
        %2902 = vmatpush1.bf16.msra.mxu0 0
        %2903 = vmatprep.subr.bf16.mxu0 0
        %2904 = vmatpush1.bf16.msra.mxu0 0
        %2905 = vmatprep.subr.bf16.mxu0 0
        %2906 = vmatpush1.bf16.msra.mxu0 0
        %2907 = vmatprep.subr.bf16.mxu0 0
        %2908 = vmatpush1.bf16.msra.mxu0 0
        %2909 = vmatprep.subr.bf16.mxu0 0
        %2910 = vmatpush1.bf16.msra.mxu0 0
        %2911 = vmatprep.subr.bf16.mxu0 0
        %2912 = vmatpush1.bf16.msra.mxu0 0
        %2913 = vmatprep.subr.bf16.mxu0 0
        %2914 = vmatpush1.bf16.msra.mxu0 0
        %2915 = vmatprep.subr.bf16.mxu0 0
        %2916 = vmatpush1.bf16.msra.mxu0 0
        %2917 = vmatprep.mubr.bf16.mxu0 0
        %2918 = vmatmul.mubr.bf16.gmra.mrb[0].mxu0 %v2859
        %v2919 = vpop.f32.mrb[0].mxu0
        %v2920 = vadd.f32 0.0, %v2919
        %v2921 = vpop.f32.mrb[0].mxu0
        %v2922 = vpop.f32.mrb[0].mxu0
        %v2923 = vadd.f32 0.0, %v2922
        %v2924 = vpop.f32.mrb[0].mxu0
        %2925 = vmatprep.mubr.bf16.mxu0 0
        %2926 = vmatmul.mubr.bf16.gmra.mrb[0].mxu0 %v2862
        %v2927 = vpop.f32.mrb[0].mxu0
        %v2928 = vadd.f32 0.0, %v2927
        %v2929 = vpop.f32.mrb[0].mxu0
        %v2930 = vpop.f32.mrb[0].mxu0
        %v2931 = vadd.f32 0.0, %v2930
        %v2932 = vpop.f32.mrb[0].mxu0
        %2933 = vmatprep.mubr.bf16.mxu0 0
        %2934 = vmatmul.mubr.bf16.gmra.mrb[0].mxu0 %v2865
        %v2935 = vpop.f32.mrb[0].mxu0
        %v2936 = vadd.f32 0.0, %v2935
        %v2937 = vpop.f32.mrb[0].mxu0
        %v2938 = vpop.f32.mrb[0].mxu0
        %v2939 = vadd.f32 0.0, %v2938
        %v2940 = vpop.f32.mrb[0].mxu0
        %2941 = vmatprep.mubr.bf16.mxu0 0
        %2942 = vmatmul.mubr.bf16.gmra.mrb[0].mxu0 %v2868
        %v2943 = vpop.f32.mrb[0].mxu0
        %v2944 = vadd.f32 0.0, %v2943
        %v2945 = vpop.f32.mrb[0].mxu0
        %v2946 = vpop.f32.mrb[0].mxu0
        %v2947 = vadd.f32 0.0, %v2946
        %v2948 = vpop.f32.mrb[0].mxu0
        %2949 = vmatprep.mubr.bf16.mxu0 0
        %2950 = vmatmul.mubr.bf16.gmra.mrb[0].mxu0 %v2871
        %v2951 = vpop.f32.mrb[0].mxu0
        %v2952 = vadd.f32 0.0, %v2951
        %v2953 = vpop.f32.mrb[0].mxu0
        %v2954 = vpop.f32.mrb[0].mxu0
        %v2955 = vadd.f32 0.0, %v2954
        %v2956 = vpop.f32.mrb[0].mxu0
        %2957 = vmatprep.mubr.bf16.mxu0 0
        %2958 = vmatmul.mubr.bf16.gmra.mrb[0].mxu0 %v2874
        %v2959 = vpop.f32.mrb[0].mxu0
        %v2960 = vadd.f32 0.0, %v2959
        %v2961 = vpop.f32.mrb[0].mxu0
        %v2962 = vpop.f32.mrb[0].mxu0
        %v2963 = vadd.f32 0.0, %v2962
        %v2964 = vpop.f32.mrb[0].mxu0
        %2965 = vmatprep.mubr.bf16.mxu0 0
        %2966 = vmatmul.mubr.bf16.gmra.mrb[0].mxu0 %v2877
        %v2967 = vpop.f32.mrb[0].mxu0
        %v2968 = vadd.f32 0.0, %v2967
        %v2969 = vpop.f32.mrb[0].mxu0
        %v2970 = vpop.f32.mrb[0].mxu0
        %v2971 = vadd.f32 0.0, %v2970
        %v2972 = vpop.f32.mrb[0].mxu0
        %2973 = vmatprep.mubr.bf16.mxu0 0
        %2974 = vmatmul.mubr.bf16.gmra.mrb[0].mxu0 %v2880
        %v2975 = vpop.f32.mrb[0].mxu0
        %v2976 = vadd.f32 0.0, %v2975
        %v2977 = vpop.f32.mrb[0].mxu0
        %v2978 = vpop.f32.mrb[0].mxu0
        %v2979 = vadd.f32 0.0, %v2978
        %v2980 = vpop.f32.mrb[0].mxu0
        %2981 = vdwg.mxu0
        %v2982 = vadd.f32 %v2600, %v2920
        %v2983 = vadd.f32 %v2601, %v2923
        %v2984 = vadd.f32 %v2602, %v2928
        %v2985 = vadd.f32 %v2603, %v2931
        %v2986 = vadd.f32 %v2604, %v2936
        %v2987 = vadd.f32 %v2605, %v2939
        %v2988 = vadd.f32 %v2606, %v2944
        %v2989 = vadd.f32 %v2607, %v2947
        %v2990 = vadd.f32 %v2608, %v2952
        %v2991 = vadd.f32 %v2609, %v2955
        %v2992 = vadd.f32 %v2610, %v2960
        %v2993 = vadd.f32 %v2611, %v2963
        %v2994 = vadd.f32 %v2612, %v2968
        %v2995 = vadd.f32 %v2613, %v2971
        %v2996 = vadd.f32 %v2614, %v2976
        %v2997 = vadd.f32 %v2615, %v2979
        %v2998 = vld [vmem:[%s2417] sm:$0xe]
        %v2999 = vld [vmem:[%s2417 + $0xc] sm:$0xe]
        %v3000 = vld [vmem:[%s2417 + $0x18] sm:$0xe]
        %v3001 = vld [vmem:[%s2417 + $0x24] sm:$0xe]
        %v3002 = vld [vmem:[%s2417 + $0x30] sm:$0xe]
        %v3003 = vld [vmem:[%s2417 + $0x3c] sm:$0xe]
        %v3004 = vld [vmem:[%s2417 + $0x48] sm:$0xe]
        %v3005 = vld [vmem:[%s2417 + $0x54] sm:$0xe]
        %v3030 = vrot.slane %v2998, 5
        %v3031 = vrot.slane %v3030, 4
        %v3032 = vrot.slane %v2617, 5
        %v3033 = vsel %vm1360, %v3031, %v3032
        %v3034 = vrot.slane %v3032, 4
        %v3035 = vrot.slane %v2618, 5
        %v3036 = vsel %vm1360, %v3034, %v3035
        %v3037 = vrot.slane %v2999, 5
        %v3038 = vrot.slane %v3037, 4
        %v3039 = vrot.slane %v2620, 5
        %v3040 = vsel %vm1360, %v3038, %v3039
        %v3041 = vrot.slane %v3039, 4
        %v3042 = vrot.slane %v2621, 5
        %v3043 = vsel %vm1360, %v3041, %v3042
        %v3044 = vrot.slane %v3000, 5
        %v3045 = vrot.slane %v3044, 4
        %v3046 = vrot.slane %v2623, 5
        %v3047 = vsel %vm1360, %v3045, %v3046
        %v3048 = vrot.slane %v3046, 4
        %v3049 = vrot.slane %v2624, 5
        %v3050 = vsel %vm1360, %v3048, %v3049
        %v3051 = vrot.slane %v3001, 5
        %v3052 = vrot.slane %v3051, 4
        %v3053 = vrot.slane %v2626, 5
        %v3054 = vsel %vm1360, %v3052, %v3053
        %v3055 = vrot.slane %v3053, 4
        %v3056 = vrot.slane %v2627, 5
        %v3057 = vsel %vm1360, %v3055, %v3056
        %v3058 = vrot.slane %v3002, 5
        %v3059 = vrot.slane %v3058, 4
        %v3060 = vrot.slane %v2629, 5
        %v3061 = vsel %vm1360, %v3059, %v3060
        %v3062 = vrot.slane %v3060, 4
        %v3063 = vrot.slane %v2630, 5
        %v3064 = vsel %vm1360, %v3062, %v3063
        %v3065 = vrot.slane %v3003, 5
        %v3066 = vrot.slane %v3065, 4
        %v3067 = vrot.slane %v2632, 5
        %v3068 = vsel %vm1360, %v3066, %v3067
        %v3069 = vrot.slane %v3067, 4
        %v3070 = vrot.slane %v2633, 5
        %v3071 = vsel %vm1360, %v3069, %v3070
        %v3072 = vrot.slane %v3004, 5
        %v3073 = vrot.slane %v3072, 4
        %v3074 = vrot.slane %v2635, 5
        %v3075 = vsel %vm1360, %v3073, %v3074
        %v3076 = vrot.slane %v3074, 4
        %v3077 = vrot.slane %v2636, 5
        %v3078 = vsel %vm1360, %v3076, %v3077
        %v3079 = vrot.slane %v3005, 5
        %v3080 = vrot.slane %v3079, 4
        %v3081 = vrot.slane %v2638, 5
        %v3082 = vsel %vm1360, %v3080, %v3081
        %v3083 = vrot.slane %v3081, 4
        %v3084 = vrot.slane %v2639, 5
        %v3085 = vsel %vm1360, %v3083, %v3084
        %s3086 = scalar_lea.vmem %s3, 16
        %v3087 = vld [vmem:[%s3086] sm:$0x3]
        %v3088 = vunpack.c.l.b16 %v3033
        %v3089 = vunpack.c.l.b16 %v3036
        %v3090 = vunpack.c.l.b16 %v3040
        %v3091 = vunpack.c.l.b16 %v3043
        %v3092 = vunpack.c.l.b16 %v3047
        %v3093 = vunpack.c.l.b16 %v3050
        %v3094 = vunpack.c.l.b16 %v3054
        %v3095 = vunpack.c.l.b16 %v3057
        %v3096 = vunpack.c.l.b16 %v3061
        %v3097 = vunpack.c.l.b16 %v3064
        %v3098 = vunpack.c.l.b16 %v3068
        %v3099 = vunpack.c.l.b16 %v3071
        %v3100 = vunpack.c.l.b16 %v3075
        %v3101 = vunpack.c.l.b16 %v3078
        %v3102 = vunpack.c.l.b16 %v3082
        %v3103 = vunpack.c.l.b16 %v3085
        %v3104 = vpack.c.b16 %v3089, %v3088
        %v3105 = vpack.c.b16 %v3091, %v3090
        %v3106 = vpack.c.b16 %v3093, %v3092
        %v3107 = vpack.c.b16 %v3095, %v3094
        %v3108 = vpack.c.b16 %v3097, %v3096
        %v3109 = vpack.c.b16 %v3099, %v3098
        %v3110 = vpack.c.b16 %v3101, %v3100
        %v3111 = vpack.c.b16 %v3103, %v3102
        %v3113 = vsel %vm1044, %v3104, 0
        %v3116 = vsel %vm1044, %v3105, 0
        %v3119 = vsel %vm1044, %v3106, 0
        %v3122 = vsel %vm1044, %v3107, 0
        %v3125 = vsel %vm1044, %v3108, 0
        %v3128 = vsel %vm1044, %v3109, 0
        %v3131 = vsel %vm1044, %v3110, 0
        %v3134 = vsel %vm1044, %v3111, 0
        %v3137 = vsel %vm1069, %v3087, 0
        %3139 = vmatprep.subr.bf16.mxu0 0
        %3140 = vmatpush1.bf16.msra.mxu0 %v3137
        %3141 = vmatprep.subr.bf16.mxu0 0
        %3142 = vmatpush1.bf16.msra.mxu0 0
        %3143 = vmatprep.subr.bf16.mxu0 0
        %3144 = vmatpush1.bf16.msra.mxu0 0
        %3145 = vmatprep.subr.bf16.mxu0 0
        %3146 = vmatpush1.bf16.msra.mxu0 0
        %3147 = vmatprep.subr.bf16.mxu0 0
        %3148 = vmatpush1.bf16.msra.mxu0 0
        %3149 = vmatprep.subr.bf16.mxu0 0
        %3150 = vmatpush1.bf16.msra.mxu0 0
        %3151 = vmatprep.subr.bf16.mxu0 0
        %3152 = vmatpush1.bf16.msra.mxu0 0
        %3153 = vmatprep.subr.bf16.mxu0 0
        %3154 = vmatpush1.bf16.msra.mxu0 0
        %3155 = vmatprep.subr.bf16.mxu0 0
        %3156 = vmatpush1.bf16.msra.mxu0 0
        %3157 = vmatprep.subr.bf16.mxu0 0
        %3158 = vmatpush1.bf16.msra.mxu0 0
        %3159 = vmatprep.subr.bf16.mxu0 0
        %3160 = vmatpush1.bf16.msra.mxu0 0
        %3161 = vmatprep.subr.bf16.mxu0 0
        %3162 = vmatpush1.bf16.msra.mxu0 0
        %3163 = vmatprep.subr.bf16.mxu0 0
        %3164 = vmatpush1.bf16.msra.mxu0 0
        %3165 = vmatprep.subr.bf16.mxu0 0
        %3166 = vmatpush1.bf16.msra.mxu0 0
        %3167 = vmatprep.subr.bf16.mxu0 0
        %3168 = vmatpush1.bf16.msra.mxu0 0
        %3169 = vmatprep.subr.bf16.mxu0 0
        %3170 = vmatpush1.bf16.msra.mxu0 0
        %3171 = vmatprep.mubr.bf16.mxu0 0
        %3172 = vmatmul.mubr.bf16.gmra.mrb[0].mxu0 %v3113
        %v3173 = vpop.f32.mrb[0].mxu0
        %v3174 = vadd.f32 0.0, %v3173
        %v3175 = vpop.f32.mrb[0].mxu0
        %v3176 = vpop.f32.mrb[0].mxu0
        %v3177 = vadd.f32 0.0, %v3176
        %v3178 = vpop.f32.mrb[0].mxu0
        %3179 = vmatprep.mubr.bf16.mxu0 0
        %3180 = vmatmul.mubr.bf16.gmra.mrb[0].mxu0 %v3116
        %v3181 = vpop.f32.mrb[0].mxu0
        %v3182 = vadd.f32 0.0, %v3181
        %v3183 = vpop.f32.mrb[0].mxu0
        %v3184 = vpop.f32.mrb[0].mxu0
        %v3185 = vadd.f32 0.0, %v3184
        %v3186 = vpop.f32.mrb[0].mxu0
        %3187 = vmatprep.mubr.bf16.mxu0 0
        %3188 = vmatmul.mubr.bf16.gmra.mrb[0].mxu0 %v3119
        %v3189 = vpop.f32.mrb[0].mxu0
        %v3190 = vadd.f32 0.0, %v3189
        %v3191 = vpop.f32.mrb[0].mxu0
        %v3192 = vpop.f32.mrb[0].mxu0
        %v3193 = vadd.f32 0.0, %v3192
        %v3194 = vpop.f32.mrb[0].mxu0
        %3195 = vmatprep.mubr.bf16.mxu0 0
        %3196 = vmatmul.mubr.bf16.gmra.mrb[0].mxu0 %v3122
        %v3197 = vpop.f32.mrb[0].mxu0
        %v3198 = vadd.f32 0.0, %v3197
        %v3199 = vpop.f32.mrb[0].mxu0
        %v3200 = vpop.f32.mrb[0].mxu0
        %v3201 = vadd.f32 0.0, %v3200
        %v3202 = vpop.f32.mrb[0].mxu0
        %3203 = vmatprep.mubr.bf16.mxu0 0
        %3204 = vmatmul.mubr.bf16.gmra.mrb[0].mxu0 %v3125
        %v3205 = vpop.f32.mrb[0].mxu0
        %v3206 = vadd.f32 0.0, %v3205
        %v3207 = vpop.f32.mrb[0].mxu0
        %v3208 = vpop.f32.mrb[0].mxu0
        %v3209 = vadd.f32 0.0, %v3208
        %v3210 = vpop.f32.mrb[0].mxu0
        %3211 = vmatprep.mubr.bf16.mxu0 0
        %3212 = vmatmul.mubr.bf16.gmra.mrb[0].mxu0 %v3128
        %v3213 = vpop.f32.mrb[0].mxu0
        %v3214 = vadd.f32 0.0, %v3213
        %v3215 = vpop.f32.mrb[0].mxu0
        %v3216 = vpop.f32.mrb[0].mxu0
        %v3217 = vadd.f32 0.0, %v3216
        %v3218 = vpop.f32.mrb[0].mxu0
        %3219 = vmatprep.mubr.bf16.mxu0 0
        %3220 = vmatmul.mubr.bf16.gmra.mrb[0].mxu0 %v3131
        %v3221 = vpop.f32.mrb[0].mxu0
        %v3222 = vadd.f32 0.0, %v3221
        %v3223 = vpop.f32.mrb[0].mxu0
        %v3224 = vpop.f32.mrb[0].mxu0
        %v3225 = vadd.f32 0.0, %v3224
        %v3226 = vpop.f32.mrb[0].mxu0
        %3227 = vmatprep.mubr.bf16.mxu0 0
        %3228 = vmatmul.mubr.bf16.gmra.mrb[0].mxu0 %v3134
        %v3229 = vpop.f32.mrb[0].mxu0
        %v3230 = vadd.f32 0.0, %v3229
        %v3231 = vpop.f32.mrb[0].mxu0
        %v3232 = vpop.f32.mrb[0].mxu0
        %v3233 = vadd.f32 0.0, %v3232
        %v3234 = vpop.f32.mrb[0].mxu0
        %3235 = vdwg.mxu0
        %v3236 = vadd.f32 %v2982, %v3174
        %v3237 = vadd.f32 %v2983, %v3177
        %v3238 = vadd.f32 %v2984, %v3182
        %v3239 = vadd.f32 %v2985, %v3185
        %v3240 = vadd.f32 %v2986, %v3190
        %v3241 = vadd.f32 %v2987, %v3193
        %v3242 = vadd.f32 %v2988, %v3198
        %v3243 = vadd.f32 %v2989, %v3201
        %v3244 = vadd.f32 %v2990, %v3206
        %v3245 = vadd.f32 %v2991, %v3209
        %v3246 = vadd.f32 %v2992, %v3214
        %v3247 = vadd.f32 %v2993, %v3217
        %v3248 = vadd.f32 %v2994, %v3222
        %v3249 = vadd.f32 %v2995, %v3225
        %v3250 = vadd.f32 %v2996, %v3230
        %v3251 = vadd.f32 %v2997, %v3233
        %vm3252 = vcmask 64512
        %3253 = vst.msk [vmem:[%s437] sm:$0xff] %vm3252, %v3236
        %3254 = vst.msk [vmem:[%s437 + $0x8] sm:$0xff] %vm3252, %v3237
        %3255 = vst.msk [vmem:[%s437 + $0x10] sm:$0xff] %vm3252, %v3238
        %3256 = vst.msk [vmem:[%s437 + $0x18] sm:$0xff] %vm3252, %v3239
        %3257 = vst.msk [vmem:[%s437 + $0x20] sm:$0xff] %vm3252, %v3240
        %3258 = vst.msk [vmem:[%s437 + $0x28] sm:$0xff] %vm3252, %v3241
        %3259 = vst.msk [vmem:[%s437 + $0x30] sm:$0xff] %vm3252, %v3242
        %3260 = vst.msk [vmem:[%s437 + $0x38] sm:$0xff] %vm3252, %v3243
        %3261 = vst.msk [vmem:[%s437 + $0x40] sm:$0xff] %vm3252, %v3244
        %3262 = vst.msk [vmem:[%s437 + $0x48] sm:$0xff] %vm3252, %v3245
        %3263 = vst.msk [vmem:[%s437 + $0x50] sm:$0xff] %vm3252, %v3246
        %3264 = vst.msk [vmem:[%s437 + $0x58] sm:$0xff] %vm3252, %v3247
        %3265 = vst.msk [vmem:[%s437 + $0x60] sm:$0xff] %vm3252, %v3248
        %3266 = vst.msk [vmem:[%s437 + $0x68] sm:$0xff] %vm3252, %v3249
        %3267 = vst.msk [vmem:[%s437 + $0x70] sm:$0xff] %vm3252, %v3250
        %3268 = vst.msk [vmem:[%s437 + $0x78] sm:$0xff] %vm3252, %v3251
        %v3269 = vsel %vm3252, %v3236, 0.0
        %v3270 = vsel %vm3252, %v3237, 0.0
        %v3271 = vadd.f32 %v3269, %v3270
        %v3272 = vsel %vm3252, %v3238, 0.0
        %v3273 = vadd.f32 %v3271, %v3272
        %v3274 = vsel %vm3252, %v3239, 0.0
        %v3275 = vadd.f32 %v3273, %v3274
        %v3276 = vsel %vm3252, %v3240, 0.0
        %v3277 = vadd.f32 %v3275, %v3276
        %v3278 = vsel %vm3252, %v3241, 0.0
        %v3279 = vadd.f32 %v3277, %v3278
        %v3280 = vsel %vm3252, %v3242, 0.0
        %v3281 = vadd.f32 %v3279, %v3280
        %v3282 = vsel %vm3252, %v3243, 0.0
        %v3283 = vadd.f32 %v3281, %v3282
        %v3284 = vsel %vm3252, %v3244, 0.0
        %v3285 = vadd.f32 %v3283, %v3284
        %v3286 = vsel %vm3252, %v3245, 0.0
        %v3287 = vadd.f32 %v3285, %v3286
        %v3288 = vsel %vm3252, %v3246, 0.0
        %v3289 = vadd.f32 %v3287, %v3288
        %v3290 = vsel %vm3252, %v3247, 0.0
        %v3291 = vadd.f32 %v3289, %v3290
        %v3292 = vsel %vm3252, %v3248, 0.0
        %v3293 = vadd.f32 %v3291, %v3292
        %v3294 = vsel %vm3252, %v3249, 0.0
        %v3295 = vadd.f32 %v3293, %v3294
        %v3296 = vsel %vm3252, %v3250, 0.0
        %v3297 = vadd.f32 %v3295, %v3296
        %v3298 = vsel %vm3252, %v3251, 0.0
        %v3299 = vadd.f32 %v3297, %v3298
        %v3300 = vrot.slane %v3299, 4
        %v3301 = vadd.f32 %v3299, %v3300
        %v3302 = vrot.slane %v3301, 2
        %v3303 = vadd.f32 %v3301, %v3302
        %v3304 = vrot.slane %v3303, 1
        %v3305 = vadd.f32 %v3303, %v3304
        %v3306 = vmul.f32 %v3236, %v3236
        %v3307 = vmul.f32 %v3237, %v3237
        %v3308 = vmul.f32 %v3238, %v3238
        %v3309 = vmul.f32 %v3239, %v3239
        %v3310 = vmul.f32 %v3240, %v3240
        %v3311 = vmul.f32 %v3241, %v3241
        %v3312 = vmul.f32 %v3242, %v3242
        %v3313 = vmul.f32 %v3243, %v3243
        %v3314 = vmul.f32 %v3244, %v3244
        %v3315 = vmul.f32 %v3245, %v3245
        %v3316 = vmul.f32 %v3246, %v3246
        %v3317 = vmul.f32 %v3247, %v3247
        %v3318 = vmul.f32 %v3248, %v3248
        %v3319 = vmul.f32 %v3249, %v3249
        %v3320 = vmul.f32 %v3250, %v3250
        %v3321 = vmul.f32 %v3251, %v3251
        %v3322 = vsel %vm3252, %v3306, 0.0
        %v3323 = vsel %vm3252, %v3307, 0.0
        %v3324 = vadd.f32 %v3322, %v3323
        %v3325 = vsel %vm3252, %v3308, 0.0
        %v3326 = vadd.f32 %v3324, %v3325
        %v3327 = vsel %vm3252, %v3309, 0.0
        %v3328 = vadd.f32 %v3326, %v3327
        %v3329 = vsel %vm3252, %v3310, 0.0
        %v3330 = vadd.f32 %v3328, %v3329
        %v3331 = vsel %vm3252, %v3311, 0.0
        %v3332 = vadd.f32 %v3330, %v3331
        %v3333 = vsel %vm3252, %v3312, 0.0
        %v3334 = vadd.f32 %v3332, %v3333
        %v3335 = vsel %vm3252, %v3313, 0.0
        %v3336 = vadd.f32 %v3334, %v3335
        %v3337 = vsel %vm3252, %v3314, 0.0
        %v3338 = vadd.f32 %v3336, %v3337
        %v3339 = vsel %vm3252, %v3315, 0.0
        %v3340 = vadd.f32 %v3338, %v3339
        %v3341 = vsel %vm3252, %v3316, 0.0
        %v3342 = vadd.f32 %v3340, %v3341
        %v3343 = vsel %vm3252, %v3317, 0.0
        %v3344 = vadd.f32 %v3342, %v3343
        %v3345 = vsel %vm3252, %v3318, 0.0
        %v3346 = vadd.f32 %v3344, %v3345
        %v3347 = vsel %vm3252, %v3319, 0.0
        %v3348 = vadd.f32 %v3346, %v3347
        %v3349 = vsel %vm3252, %v3320, 0.0
        %v3350 = vadd.f32 %v3348, %v3349
        %v3351 = vsel %vm3252, %v3321, 0.0
        %v3352 = vadd.f32 %v3350, %v3351
        %v3353 = vrot.slane %v3352, 4
        %v3354 = vadd.f32 %v3352, %v3353
        %v3355 = vrot.slane %v3354, 2
        %v3356 = vadd.f32 %v3354, %v3355
        %v3357 = vrot.slane %v3356, 1
        %v3358 = vadd.f32 %v3356, %v3357
        // Predicated region
        $region53: #{tpu_custom_call.1} parent=35 // pred_check
          %p3359 = pneg %p440
        $region54: #{tpu_custom_call.1} parent=35 // pred_check_branch
          %3361 = sbr.rel (%p3359) target = $region56
        $region55: #{tpu_custom_call.1} parent=35 // pred_region
          %vm3362 = vcmask 57344
          %3363 = vst.msk [vmem:[%s376] sm:$0x1] %vm3362, %v3305
          %3364 = vst.msk [vmem:[%s382] sm:$0x1] %vm3362, %v3358
        $region56: #{tpu_custom_call.1} parent=35 // pred_fallthru
          _
        // Predicated region
        $region57: #{tpu_custom_call.1} parent=35 // pred_check
          %p3365 = pneg %p718
        $region58: #{tpu_custom_call.1} parent=35 // pred_check_branch
          %3367 = sbr.rel (%p3365) target = $region60
        $region59: #{tpu_custom_call.1} parent=35 // pred_region
          %v3368 = vld [vmem:[%s376] sm:$0x1]
          %v3369 = vadd.f32 %v3368, %v3305
          %vm3370 = vcmask 57344
          %3371 = vst.msk [vmem:[%s376] sm:$0x1] %vm3370, %v3369
          %v3372 = vld [vmem:[%s382] sm:$0x1]
          %v3373 = vadd.f32 %v3372, %v3358
          %3374 = vst.msk [vmem:[%s382] sm:$0x1] %vm3370, %v3373
        $region60: #{tpu_custom_call.1} parent=35 // pred_fallthru
          _
        %s3375 = smul.u32 8, %s29
        %p3376 = scmp.lt.s32.totalorder %s28, 1
        %s3377 = scalar_select %p3376, %s28, 1
        %p3378 = scmp.lt.s32.totalorder %s3375, 15
        %s3379 = scalar_select %p3378, %s3375, 15
        %s3380 = smul.addr %s3379, 2
        %s3381 = smul.addr %s3377, 32
        %s3382 = sadd.s32 %s3380, %s3381
        %s3383 = smul.addr %s3382, 8
        %s3384 = scalar_lea.vmem %s4, %s3383
        %s3385 = sand.u32 %s193, 1
        %s3386 = scalar_lea.sflag [#allocation4], %s3385
        %s3387 = sand.u32 %s193, 1
        %s3388 = scalar_lea.vmem [#allocation3], %s3387
        %s3389 = sand.u32 %s219, 1
        %s3390 = scalar_lea.sflag [#allocation6], %s3389
        %s3391 = sand.u32 %s219, 1
        %s3392 = scalar_lea.vmem [#allocation5], %s3391
        // Predicated region
        $region61: #{tpu_custom_call.1} parent=35 // pred_check
          %p3393 = pneg %p177
        $region62: #{tpu_custom_call.1} parent=35 // pred_check_branch
          %3395 = sbr.rel (%p3393) target = $region64
        $region63: #{tpu_custom_call.1} parent=35 // pred_region
          %s3396 = smul.u32 8, %s29
        $region64: #{tpu_custom_call.1} parent=35 // pred_fallthru
          _
        // Predicated region
        $region65: #{tpu_custom_call.1} parent=35 // pred_check
          %p3397 = pneg %p203
        $region66: #{tpu_custom_call.1} parent=35 // pred_check_branch
          %3399 = sbr.rel (%p3397) target = $region68
        $region67: #{tpu_custom_call.1} parent=35 // pred_region
          %s3401 = ssub.s32 16, 16
          %3402 = vsyncadd %s3386, %s3401
          %s3403 = smul.addr %s28, 16
          %s3404 = scalar_lea.hbm %s5, %s3403
          %s3406 = sshll.u32 %s3388, 4
          %s3407 = int_to_ptr.vmem [resolvable:$true] %s3406
          %3409 = dma.vmem_to_hbm [thread:$0]  %s3407, 16, %s3404, %s3386
        $region68: #{tpu_custom_call.1} parent=35 // pred_fallthru
          _
        // Predicated region
        $region69: #{tpu_custom_call.1} parent=35 // pred_check
          %p3410 = pneg %p229
        $region70: #{tpu_custom_call.1} parent=35 // pred_check_branch
          %3412 = sbr.rel (%p3410) target = $region72
        $region71: #{tpu_custom_call.1} parent=35 // pred_region
          %s3414 = ssub.s32 16, 16
          %3415 = vsyncadd %s3390, %s3414
          %s3416 = smul.addr %s28, 16
          %s3417 = scalar_lea.hbm %s6, %s3416
          %s3419 = sshll.u32 %s3392, 4
          %s3420 = int_to_ptr.vmem [resolvable:$true] %s3419
          %3422 = dma.vmem_to_hbm [thread:$0]  %s3420, 16, %s3417, %s3390
        $region72: #{tpu_custom_call.1} parent=35 // pred_fallthru
          _
      $region36: #{tpu_custom_call.1} parent=5 // pred_fallthru
        _
      %p3423 = scmp.le.s32.totalorder 2, %s19
      // Predicated region
      $region73: #{tpu_custom_call.1} parent=5 // pred_check
        %p3424 = pneg %p3423
      $region74: #{tpu_custom_call.1} parent=5 // pred_check_branch
        %3426 = sbr.rel (%p3424) target = $region76
      $region75: #{tpu_custom_call.1} parent=5 // pred_region
        %s3427 = ssub.s32 %s19, 2
        // Predicated region
        $region77: #{tpu_custom_call.1} parent=75 // pred_check
          %p3428 = pneg %p183
        $region78: #{tpu_custom_call.1} parent=75 // pred_check_branch
          %3430 = sbr.rel (%p3428) target = $region80
        $region79: #{tpu_custom_call.1} parent=75 // pred_region
          %s3431 = smul.u32 8, %s31
          %p3432 = scmp.lt.s32.totalorder %s30, 1
          %s3433 = scalar_select %p3432, %s30, 1
          %p3434 = scmp.lt.s32.totalorder %s3431, 15
          %s3435 = scalar_select %p3434, %s3431, 15
          %s3436 = smul.addr %s3435, 2
          %s3437 = smul.addr %s3433, 32
          %s3438 = sadd.s32 %s3436, %s3437
          %s3439 = smul.addr %s3438, 8
          %s3440 = scalar_lea.vmem %s4, %s3439
        $region80: #{tpu_custom_call.1} parent=75 // pred_fallthru
          _
        // Predicated region
        $region81: #{tpu_custom_call.1} parent=75 // pred_check
          %p3441 = pneg %p209
        $region82: #{tpu_custom_call.1} parent=75 // pred_check_branch
          %3443 = sbr.rel (%p3441) target = $region84
        $region83: #{tpu_custom_call.1} parent=75 // pred_region
          %s3444 = sand.u32 %s194, 1
          %s3445 = scalar_lea.sflag [#allocation4], %s3444
          %s3446 = sand.u32 %s194, 1
          %s3447 = scalar_lea.vmem [#allocation3], %s3446
          %3448 = dma.done %s3445, 16
        $region84: #{tpu_custom_call.1} parent=75 // pred_fallthru
          _
        // Predicated region
        $region85: #{tpu_custom_call.1} parent=75 // pred_check
          %p3449 = pneg %p235
        $region86: #{tpu_custom_call.1} parent=75 // pred_check_branch
          %3451 = sbr.rel (%p3449) target = $region88
        $region87: #{tpu_custom_call.1} parent=75 // pred_region
          %s3452 = sand.u32 %s220, 1
          %s3453 = scalar_lea.sflag [#allocation6], %s3452
          %s3454 = sand.u32 %s220, 1
          %s3455 = scalar_lea.vmem [#allocation5], %s3454
          %3456 = dma.done %s3453, 16
        $region88: #{tpu_custom_call.1} parent=75 // pred_fallthru
          _
      $region76: #{tpu_custom_call.1} parent=5 // pred_fallthru
        _
    $region6: #{tpu_custom_call.1} parent=1 // loop_footer
      %s23 = sadd.s32 1, %s19
    $region7: #{tpu_custom_call.1} parent=1 // loop_footer_branch
      %18 = sbr.rel target = $region3
    $region8: #{tpu_custom_call.1} parent=1 // loop_exit
      _
    %3457 = vsyncpa [#allocation4], 1
    %s3458 = scalar_lea.sflag [#allocation4], 1
    %3459 = vsyncpa %s3458, 1
    %3460 = vsyncpa [#allocation6], 1
    %s3461 = scalar_lea.sflag [#allocation6], 1
    %3462 = vsyncpa %s3461, 1

</llo_original>
